<compile_context>
chip_gen: v7x
topology: tpu7x:2x2x1
jax: 0.10.0
libtpu: 0.0.40
codegen_flags: <defaults>
</compile_context>

<pallas_src>
import functools

import jax
import jax.numpy as jnp
from jax.experimental import pallas as pl
from jax.experimental.pallas import tpu as pltpu

H1, H2 = 1024, 512  # hidden sizes fixed by the module definition


def _round_up(n, m):
    return ((n + m - 1) // m) * m


def _vmem_budget_bytes():
    """~75% of physical VMEM: ~96 MiB on v5e/v6e (128 MiB), ~48 MiB on v7x (64 MiB)."""
    try:
        cap = int(pltpu.get_tpu_info().vmem_capacity_bytes)
    except Exception:
        cap = 64 << 20  # conservative fallback = v7x physical per-TC VMEM
    return cap * 3 // 4


def _choose_tb(B, tb_req, *, per_row_bytes, fixed_bytes, budget):
    """Batch tile rows: multiple of 16 (bf16 sublane packing), >= 2 grid steps
    (v7x dual TensorCore), and small enough that the per-step footprint fits the
    VMEM budget next to the resident weights."""
    if B <= 16:
        return _round_up(max(B, 1), 8)
    tb = max(16, (int(tb_req) // 16) * 16)
    tb = min(tb, _round_up(pl.cdiv(B, 2), 16))   # guarantee >= 2 grid steps
    avail = budget - fixed_bytes - (4 << 20)     # headroom for Mosaic scratch
    if avail >= per_row_bytes * 16:
        tb = min(tb, max(16, (avail // per_row_bytes) // 16 * 16))
    else:
        tb = 16
    return int(tb)


# --------------------------------- kernels -----------------------------------


def _head_kernel_resident(x_ref, w1_ref, b1_ref, w2_ref, b2_ref, w3_ref, b3_ref,
                          out_ref):
    # f32 -> bf16 cast in-kernel (VALU slot, hidden under MXU work) instead of a
    # standalone wrapper-side HBM pass over x.
    x = x_ref[...].astype(jnp.bfloat16)

    # Linear1 (+ folded BatchNorm): bf16 MXU matmul, f32 accumulate.
    h = jnp.dot(x, w1_ref[...], preferred_element_type=jnp.float32) + b1_ref[...]
    h = jnp.maximum(h, 0.0)

    # Linear2 + ReLU.
    h = jnp.dot(h.astype(jnp.bfloat16), w2_ref[...],
                preferred_element_type=jnp.float32) + b2_ref[...]
    h = jnp.maximum(h, 0.0)

    # Linear3 (512 -> 1) on the VPU/XLU; an N=1 MXU matmul would waste the lanes.
    logit = jnp.sum(h * w3_ref[...], axis=-1, keepdims=True) + b3_ref[0, 0]
    out_ref[...] = jax.nn.sigmoid(logit).astype(out_ref.dtype)


def _head_kernel_ktiled(x_ref, w1_ref, b1_ref, w2_ref, b2_ref, w3_ref, b3_ref,
                        out_ref, acc_ref):
    k = pl.program_id(1)

    @pl.when(k == 0)
    def _():
        acc_ref[...] = jnp.zeros_like(acc_ref)

    x = x_ref[...].astype(jnp.bfloat16)
    acc_ref[...] += jnp.dot(x, w1_ref[...], preferred_element_type=jnp.float32)

    @pl.when(k == pl.num_programs(1) - 1)
    def _():
        h = jnp.maximum(acc_ref[...] + b1_ref[...], 0.0)
        h = jnp.dot(h.astype(jnp.bfloat16), w2_ref[...],
                    preferred_element_type=jnp.float32) + b2_ref[...]
        h = jnp.maximum(h, 0.0)
        logit = jnp.sum(h * w3_ref[...], axis=-1, keepdims=True) + b3_ref[0, 0]
        out_ref[...] = jax.nn.sigmoid(logit).astype(out_ref.dtype)


# --------------------------- pallas_call wrappers -----------------------------


def _const_specs(shapes, grid_rank, buffered):
    """Constant-index (resident) weight blocks; Buffered(1) drops the redundant
    second pipeline buffer when supported."""
    zero = (lambda i: (0, 0)) if grid_rank == 1 else (lambda i, k: (0, 0))
    if buffered:
        return [pl.BlockSpec(s, zero, pipeline_mode=pl.Buffered(1)) for s in shapes]
    return [pl.BlockSpec(s, zero) for s in shapes]


def _call_resident(xf, w1, b1, w2, b2, w3, b3, TB, *, buffered, vmem_limit):
    B, F = xf.shape
    in_specs = (
        [pl.BlockSpec((TB, F), lambda i: (i, 0))]                   # x batch tile
        + _const_specs([w1.shape, b1.shape, w2.shape, b2.shape, w3.shape], 1, buffered)
        + [pl.BlockSpec(memory_space=pltpu.MemorySpace.SMEM)]       # b3 scalar
    )
    return pl.pallas_call(
        _head_kernel_resident,
        out_shape=jax.ShapeDtypeStruct((B, 1), jnp.float32),
        grid=(pl.cdiv(B, TB),),                                     # ragged last block handled
        in_specs=in_specs,
        out_specs=pl.BlockSpec((TB, 1), lambda i: (i, 0)),
        compiler_params=pltpu.CompilerParams(
            dimension_semantics=("parallel",),                      # v7x dual-TC sharding
            vmem_limit_bytes=vmem_limit),
    )(xf, w1, b1, w2, b2, w3, b3)


def _call_ktiled(xf, w1, b1, w2, b2, w3, b3, TB, TK, *, buffered, vmem_limit):
    B, F = xf.shape
    in_specs = (
        [pl.BlockSpec((TB, TK), lambda i, k: (i, k)),               # x (batch, K) tile
         pl.BlockSpec((TK, H1), lambda i, k: (k, 0))]               # w1 K-slab (double buffered)
        + _const_specs([b1.shape, w2.shape, b2.shape, w3.shape], 2, buffered)
        + [pl.BlockSpec(memory_space=pltpu.MemorySpace.SMEM)]
    )
    return pl.pallas_call(
        _head_kernel_ktiled,
        out_shape=jax.ShapeDtypeStruct((B, 1), jnp.float32),
        grid=(pl.cdiv(B, TB), F // TK),
        in_specs=in_specs,
        out_specs=pl.BlockSpec((TB, 1), lambda i, k: (i, 0)),       # resident over K
        scratch_shapes=[pltpu.VMEM((TB, H1), jnp.float32)],         # Linear1 accumulator
        compiler_params=pltpu.CompilerParams(
            dimension_semantics=("parallel", "arbitrary"),
            vmem_limit_bytes=vmem_limit),
    )(xf, w1, b1, w2, b2, w3, b3)


def simple_head_v2(x, params, *, tb=512, k_tile=None):
    """x: [B, F] float32.  params: dict of f32 weights (see init_params)."""
    B, F = x.shape
    budget = _vmem_budget_bytes()

    # Fold eval-mode BatchNorm1d into Linear1 (one-time f32 work on weights).
    eps = 1e-5
    scale = params["gamma"] * jax.lax.rsqrt(params["var"] + eps)       # [1, 1024]
    w1 = (params["w1"] * scale).astype(jnp.bfloat16)                   # [F, 1024]
    b1 = (params["b1"] - params["mean"]) * scale + params["beta"]      # [1, 1024]
    w2 = params["w2"].astype(jnp.bfloat16)                             # [1024, 512]
    b2 = params["b2"].reshape(1, H2)
    w3 = params["w3"].reshape(1, H2)
    b3 = params["b3"].reshape(1, 1)
    xf = x.astype(jnp.float32)           # no-op for f32 input; bf16 cast is in-kernel

    w1_bytes = F * H1 * 2
    # Large-F: keep only a (TK, 1024) slab of w1 resident (v7x 64 MiB VMEM budget).
    use_ktiling = (k_tile is not None) or (w1_bytes > (16 << 20))

    if use_ktiling:
        TK = max(128, (int(k_tile) if k_tile is not None else 512) // 128 * 128)
        Fp = _round_up(F, TK)
        if Fp != F:
            # One-time zero-pad of w1 rows is cheap; padding x costs an extra HBM
            # pass. TODO(synk): have the x producer emit F as a multiple of 128.
            w1 = jnp.pad(w1, ((0, Fp - F), (0, 0)))
            xf = jnp.pad(xf, ((0, 0), (0, Fp - F)))
        fixed = 2 * TK * H1 * 2 + H1 * H2 * 2 + (H1 + 3 * H2) * 4
        per_row = 2 * TK * 4 + (2 * H1 + H2) * 4
        TB = _choose_tb(B, tb, per_row_bytes=per_row, fixed_bytes=fixed, budget=budget)
        run = functools.partial(_call_ktiled, xf, w1, b1, w2, b2, w3, b3, TB, TK)
    else:
        fixed = w1_bytes + H1 * H2 * 2 + (H1 + 3 * H2) * 4
        per_row = 2 * F * 4 + (H1 + H2) * 4
        TB = _choose_tb(B, tb, per_row_bytes=per_row, fixed_bytes=fixed, budget=budget)
        run = functools.partial(_call_resident, xf, w1, b1, w2, b2, w3, b3, TB)

    try:
        return run(buffered=True, vmem_limit=budget)
    except Exception:
        # Older Pallas without BlockSpec(pipeline_mode=...): default double-buffered specs.
        return run(buffered=False, vmem_limit=budget)


# ------------------------------ test harness ----------------------------------


def init_params(key, num_features):
    """Deterministic synthetic parameters matching SimpleHeadV2.__init__ shapes."""
    ks = jax.random.split(key, 8)

    def uniform(k, shape, fan_in):
        bound = 1.0 / jnp.sqrt(float(fan_in))
        return jax.random.uniform(k, shape, jnp.float32, -bound, bound)

    F = num_features
    return {
        # Linear(num_features, 1024): PyTorch weight [1024, F] -> stored as [F, 1024]
        "w1": uniform(ks[0], (F, H1), F),
        "b1": uniform(ks[1], (1, H1), F),
        # BatchNorm1d(1024): affine params + running stats (eval mode)
        "gamma": jnp.ones((1, H1), jnp.float32),
        "beta": jnp.zeros((1, H1), jnp.float32),
        "mean": 0.1 * jax.random.normal(ks[2], (1, H1), jnp.float32),
        "var": 1.0 + 0.1 * jax.random.uniform(ks[3], (1, H1), jnp.float32),
        # Linear(1024, 512)
        "w2": uniform(ks[4], (H1, H2), H1),
        "b2": uniform(ks[5], (1, H2), H1),
        # Linear(512, 1)
        "w3": uniform(ks[6], (H2, 1), H2),
        "b3": uniform(ks[7], (1, 1), H2),
    }


def reference(x, p):
    """Pure-JAX f32 reference with the exact module (eval) semantics."""
    h = x @ p["w1"] + p["b1"]
    h = (h - p["mean"]) / jnp.sqrt(p["var"] + 1e-5) * p["gamma"] + p["beta"]
    h = jnp.maximum(h, 0.0)
    h = jnp.maximum(h @ p["w2"] + p["b2"], 0.0)
    return jax.nn.sigmoid(h @ p["w3"] + p["b3"])


if __name__ == "__main__":
    key = jax.random.PRNGKey(0)
    k_x1, k_p1, k_x2, k_x3, k_p3 = jax.random.split(key, 5)

    # 1) Small batch, single tile, resident-weight path.
    B1, F1 = 8, 32
    p1 = init_params(k_p1, F1)
    x1 = jax.random.normal(k_x1, (B1, F1), jnp.float32)
    o1 = jax.block_until_ready(simple_head_v2(x1, p1))
    r1 = reference(x1, p1)
    assert o1.shape == (B1, 1)
    assert jnp.allclose(o1, r1, atol=2e-2, rtol=2e-2), "mismatch (resident)"

    # 2) Ragged batch, multi-tile resident path (grid = cdiv, no wrapper pad).
    B2 = 20
    x2 = jax.random.normal(k_x2, (B2, F1), jnp.float32)
    o2 = jax.block_until_ready(simple_head_v2(x2, p1, tb=16))
    r2 = reference(x2, p1)
    assert o2.shape == (B2, 1)
    assert jnp.allclose(o2, r2, atol=2e-2, rtol=2e-2), "mismatch (ragged tiles)"

    # 3) K-tiled path (forced small here; auto-selected when w1 > ~16 MiB).
    B3, F3 = 24, 256
    p3 = init_params(k_p3, F3)
    x3 = jax.random.normal(k_x3, (B3, F3), jnp.float32)
    o3 = jax.block_until_ready(simple_head_v2(x3, p3, k_tile=128))
    r3 = reference(x3, p3)
    assert o3.shape == (B3, 1)
    assert jnp.allclose(o3, r3, atol=3e-2, rtol=3e-2), "mismatch (K-tiled)"

    print("KERNEL_OK")
</pallas_src>

<mosaic_0001>
module attributes {stable_mosaic.version = 11 : i64} {
  func.func @_head_kernel_resident(%arg0: i32, %arg1: memref<8x32xf32, #tpu.memory_space<vmem>>, %arg2: memref<32x1024xbf16, #tpu.memory_space<vmem>>, %arg3: memref<1x1024xf32, #tpu.memory_space<vmem>>, %arg4: memref<1024x512xbf16, #tpu.memory_space<vmem>>, %arg5: memref<1x512xf32, #tpu.memory_space<vmem>>, %arg6: memref<1x512xf32, #tpu.memory_space<vmem>>, %arg7: memref<1x1xf32, #tpu.memory_space<smem>>, %arg8: memref<8x1xf32, #tpu.memory_space<vmem>>) attributes {dimension_semantics = [#tpu.dimension_semantics<parallel>], iteration_bounds = array<i64: 1>, scalar_prefetch = 0 : i64, scratch_operands = 0 : i64, tpu.core_type = #tpu.core_type<tc>, window_params = [{transform_indices = @transform_0, window_bounds = array<i64: 8, 32>}, {pipeline_mode = #tpu.pipeline_mode<synchronous>, transform_indices = @transform_1, window_bounds = array<i64: 32, 1024>}, {pipeline_mode = #tpu.pipeline_mode<synchronous>, transform_indices = @transform_2, window_bounds = array<i64: 1, 1024>}, {pipeline_mode = #tpu.pipeline_mode<synchronous>, transform_indices = @transform_3, window_bounds = array<i64: 1024, 512>}, {pipeline_mode = #tpu.pipeline_mode<synchronous>, transform_indices = @transform_4, window_bounds = array<i64: 1, 512>}, {pipeline_mode = #tpu.pipeline_mode<synchronous>, transform_indices = @transform_5, window_bounds = array<i64: 1, 512>}, {transform_indices = @transform_6, window_bounds = array<i64: 1, 1>}, {transform_indices = @transform_7, window_bounds = array<i64: 8, 1>}]} {
    %c0 = arith.constant 0 : index
    %c0_0 = arith.constant 0 : index
    %0 = vector.load %arg1[%c0, %c0_0] : memref<8x32xf32, #tpu.memory_space<vmem>>, vector<8x32xf32>
    %1 = arith.truncf %0 : vector<8x32xf32> to vector<8x32xbf16>
    %c0_1 = arith.constant 0 : index
    %c0_2 = arith.constant 0 : index
    %2 = vector.load %arg2[%c0_1, %c0_2] : memref<32x1024xbf16, #tpu.memory_space<vmem>>, vector<32x1024xbf16>
    %cst = arith.constant dense<0.000000e+00> : vector<8x1024xf32>
    %3 = tpu.matmul %1, %2, %cst {dimension_numbers = #tpu.dot_dimension_numbers<[1], [0], [0], [1], [0, 0, 1, 1], [], []>} : vector<8x32xbf16>, vector<32x1024xbf16>, vector<8x1024xf32> -> vector<8x1024xf32>
    %c0_3 = arith.constant 0 : index
    %c0_4 = arith.constant 0 : index
    %4 = vector.load %arg3[%c0_3, %c0_4] : memref<1x1024xf32, #tpu.memory_space<vmem>>, vector<1x1024xf32>
    %5 = vector.broadcast %4 : vector<1x1024xf32> to vector<8x1024xf32>
    %6 = arith.addf %3, %5 : vector<8x1024xf32>
    %cst_5 = arith.constant 0.000000e+00 : f32
    %7 = vector.broadcast %cst_5 : f32 to vector<8x1024xf32>
    %8 = arith.maximumf %6, %7 : vector<8x1024xf32>
    %9 = arith.truncf %8 : vector<8x1024xf32> to vector<8x1024xbf16>
    %c0_6 = arith.constant 0 : index
    %c0_7 = arith.constant 0 : index
    %10 = vector.load %arg4[%c0_6, %c0_7] : memref<1024x512xbf16, #tpu.memory_space<vmem>>, vector<1024x512xbf16>
    %cst_8 = arith.constant dense<0.000000e+00> : vector<8x512xf32>
    %11 = tpu.matmul %9, %10, %cst_8 {dimension_numbers = #tpu.dot_dimension_numbers<[1], [0], [0], [1], [0, 0, 1, 1], [], []>} : vector<8x1024xbf16>, vector<1024x512xbf16>, vector<8x512xf32> -> vector<8x512xf32>
    %c0_9 = arith.constant 0 : index
    %c0_10 = arith.constant 0 : index
    %12 = vector.load %arg5[%c0_9, %c0_10] : memref<1x512xf32, #tpu.memory_space<vmem>>, vector<1x512xf32>
    %13 = vector.broadcast %12 : vector<1x512xf32> to vector<8x512xf32>
    %14 = arith.addf %11, %13 : vector<8x512xf32>
    %cst_11 = arith.constant 0.000000e+00 : f32
    %15 = vector.broadcast %cst_11 : f32 to vector<8x512xf32>
    %16 = arith.maximumf %14, %15 : vector<8x512xf32>
    %c0_12 = arith.constant 0 : index
    %c0_13 = arith.constant 0 : index
    %17 = vector.load %arg6[%c0_12, %c0_13] : memref<1x512xf32, #tpu.memory_space<vmem>>, vector<1x512xf32>
    %18 = vector.broadcast %17 : vector<1x512xf32> to vector<8x512xf32>
    %19 = arith.mulf %16, %18 : vector<8x512xf32>
    %cst_14 = arith.constant dense<0.000000e+00> : vector<8xf32>
    %20 = vector.multi_reduction <add>, %19, %cst_14 [1] : vector<8x512xf32> to vector<8xf32>
    %21 = vector.shape_cast %20 : vector<8xf32> to vector<8x1xf32>
    %c0_15 = arith.constant 0 : index
    %c0_16 = arith.constant 0 : index
    %22 = memref.load %arg7[%c0_15, %c0_16] : memref<1x1xf32, #tpu.memory_space<smem>>
    %23 = vector.broadcast %22 : f32 to vector<8x1xf32>
    %24 = arith.addf %21, %23 : vector<8x1xf32>
    %25 = arith.negf %24 : vector<8x1xf32>
    %26 = math.exp %25 : vector<8x1xf32>
    %cst_17 = arith.constant 1.000000e+00 : f32
    %27 = vector.broadcast %cst_17 : f32 to vector<8x1xf32>
    %28 = arith.addf %27, %26 : vector<8x1xf32>
    %29 = arith.divf %27, %28 : vector<8x1xf32>
    %c0_18 = arith.constant 0 : index
    %c0_19 = arith.constant 0 : index
    %30 = vector.load %arg8[%c0_18, %c0_19] : memref<8x1xf32, #tpu.memory_space<vmem>>, vector<8x1xf32>
    tpu.vector_store %arg8[%c0_18, %c0_19], %29 {strides = array<i32>} : memref<8x1xf32, #tpu.memory_space<vmem>>, vector<8x1xf32>,
    return
  }
  func.func @transform_0(%arg0: i32) -> (i32, i32) {
    %c0_i32 = arith.constant 0 : i32
    %c0_i32_0 = arith.constant 0 : i32
    return %arg0, %c0_i32 : i32, i32
  }
  func.func @transform_1(%arg0: i32) -> (i32, i32) {
    %c0_i32 = arith.constant 0 : i32
    %c0_i32_0 = arith.constant 0 : i32
    %c0_i32_1 = arith.constant 0 : i32
    return %c0_i32, %c0_i32_0 : i32, i32
  }
  func.func @transform_2(%arg0: i32) -> (i32, i32) {
    %c0_i32 = arith.constant 0 : i32
    %c0_i32_0 = arith.constant 0 : i32
    %c0_i32_1 = arith.constant 0 : i32
    return %c0_i32, %c0_i32_0 : i32, i32
  }
  func.func @transform_3(%arg0: i32) -> (i32, i32) {
    %c0_i32 = arith.constant 0 : i32
    %c0_i32_0 = arith.constant 0 : i32
    %c0_i32_1 = arith.constant 0 : i32
    return %c0_i32, %c0_i32_0 : i32, i32
  }
  func.func @transform_4(%arg0: i32) -> (i32, i32) {
    %c0_i32 = arith.constant 0 : i32
    %c0_i32_0 = arith.constant 0 : i32
    %c0_i32_1 = arith.constant 0 : i32
    return %c0_i32, %c0_i32_0 : i32, i32
  }
  func.func @transform_5(%arg0: i32) -> (i32, i32) {
    %c0_i32 = arith.constant 0 : i32
    %c0_i32_0 = arith.constant 0 : i32
    %c0_i32_1 = arith.constant 0 : i32
    return %c0_i32, %c0_i32_0 : i32, i32
  }
  func.func @transform_6(%arg0: i32) -> (i32, i32) {
    %c0_i32 = arith.constant 0 : i32
    %c0_i32_0 = arith.constant 0 : i32
    %c0_i32_1 = arith.constant 0 : i32
    return %c0_i32, %c0_i32_0 : i32, i32
  }
  func.func @transform_7(%arg0: i32) -> (i32, i32) {
    %c0_i32 = arith.constant 0 : i32
    %c0_i32_0 = arith.constant 0 : i32
    return %arg0, %c0_i32 : i32, i32
  }
}

module attributes {stable_mosaic.version = 11 : i64} {
  func.func @_head_kernel_resident(%arg0: i32, %arg1: memref<8x32xf32, #tpu.memory_space<vmem>>, %arg2: memref<32x1024xbf16, #tpu.memory_space<vmem>>, %arg3: memref<1x1024xf32, #tpu.memory_space<vmem>>, %arg4: memref<1024x512xbf16, #tpu.memory_space<vmem>>, %arg5: memref<1x512xf32, #tpu.memory_space<vmem>>, %arg6: memref<1x512xf32, #tpu.memory_space<vmem>>, %arg7: memref<1x1xf32, #tpu.memory_space<smem>>, %arg8: memref<8x1xf32, #tpu.memory_space<vmem>>) attributes {dimension_semantics = [#tpu.dimension_semantics<parallel>], iteration_bounds = array<i64: 1>, scalar_prefetch = 0 : i64, scratch_operands = 0 : i64, tpu.core_type = #tpu.core_type<tc>, window_params = [{transform_indices = @transform_0, window_bounds = array<i64: 8, 32>}, {pipeline_mode = #tpu.pipeline_mode<synchronous>, transform_indices = @transform_1, window_bounds = array<i64: 32, 1024>}, {pipeline_mode = #tpu.pipeline_mode<synchronous>, transform_indices = @transform_2, window_bounds = array<i64: 1, 1024>}, {pipeline_mode = #tpu.pipeline_mode<synchronous>, transform_indices = @transform_3, window_bounds = array<i64: 1024, 512>}, {pipeline_mode = #tpu.pipeline_mode<synchronous>, transform_indices = @transform_4, window_bounds = array<i64: 1, 512>}, {pipeline_mode = #tpu.pipeline_mode<synchronous>, transform_indices = @transform_5, window_bounds = array<i64: 1, 512>}, {transform_indices = @transform_6, window_bounds = array<i64: 1, 1>}, {transform_indices = @transform_7, window_bounds = array<i64: 8, 1>}]} {
    %c0 = arith.constant 0 : index
    %c0_0 = arith.constant 0 : index
    %0 = vector.load %arg1[%c0, %c0_0] : memref<8x32xf32, #tpu.memory_space<vmem>>, vector<8x32xf32>
    %1 = arith.truncf %0 : vector<8x32xf32> to vector<8x32xbf16>
    %c0_1 = arith.constant 0 : index
    %c0_2 = arith.constant 0 : index
    %2 = vector.load %arg2[%c0_1, %c0_2] : memref<32x1024xbf16, #tpu.memory_space<vmem>>, vector<32x1024xbf16>
    %cst = arith.constant dense<0.000000e+00> : vector<8x1024xf32>
    %3 = tpu.matmul %1, %2, %cst {dimension_numbers = #tpu.dot_dimension_numbers<[1], [0], [0], [1], [0, 0, 1, 1], [], []>} : vector<8x32xbf16>, vector<32x1024xbf16>, vector<8x1024xf32> -> vector<8x1024xf32>
    %c0_3 = arith.constant 0 : index
    %c0_4 = arith.constant 0 : index
    %4 = vector.load %arg3[%c0_3, %c0_4] : memref<1x1024xf32, #tpu.memory_space<vmem>>, vector<1x1024xf32>
    %5 = vector.broadcast %4 : vector<1x1024xf32> to vector<8x1024xf32>
    %6 = arith.addf %3, %5 : vector<8x1024xf32>
    %cst_5 = arith.constant 0.000000e+00 : f32
    %7 = vector.broadcast %cst_5 : f32 to vector<8x1024xf32>
    %8 = arith.maximumf %6, %7 : vector<8x1024xf32>
    %9 = arith.truncf %8 : vector<8x1024xf32> to vector<8x1024xbf16>
    %c0_6 = arith.constant 0 : index
    %c0_7 = arith.constant 0 : index
    %10 = vector.load %arg4[%c0_6, %c0_7] : memref<1024x512xbf16, #tpu.memory_space<vmem>>, vector<1024x512xbf16>
    %cst_8 = arith.constant dense<0.000000e+00> : vector<8x512xf32>
    %11 = tpu.matmul %9, %10, %cst_8 {dimension_numbers = #tpu.dot_dimension_numbers<[1], [0], [0], [1], [0, 0, 1, 1], [], []>} : vector<8x1024xbf16>, vector<1024x512xbf16>, vector<8x512xf32> -> vector<8x512xf32>
    %c0_9 = arith.constant 0 : index
    %c0_10 = arith.constant 0 : index
    %12 = vector.load %arg5[%c0_9, %c0_10] : memref<1x512xf32, #tpu.memory_space<vmem>>, vector<1x512xf32>
    %13 = vector.broadcast %12 : vector<1x512xf32> to vector<8x512xf32>
    %14 = arith.addf %11, %13 : vector<8x512xf32>
    %cst_11 = arith.constant 0.000000e+00 : f32
    %15 = vector.broadcast %cst_11 : f32 to vector<8x512xf32>
    %16 = arith.maximumf %14, %15 : vector<8x512xf32>
    %c0_12 = arith.constant 0 : index
    %c0_13 = arith.constant 0 : index
    %17 = vector.load %arg6[%c0_12, %c0_13] : memref<1x512xf32, #tpu.memory_space<vmem>>, vector<1x512xf32>
    %18 = vector.broadcast %17 : vector<1x512xf32> to vector<8x512xf32>
    %19 = arith.mulf %16, %18 : vector<8x512xf32>
    %cst_14 = arith.constant dense<0.000000e+00> : vector<8xf32>
    %20 = vector.multi_reduction <add>, %19, %cst_14 [1] : vector<8x512xf32> to vector<8xf32>
    %21 = vector.shape_cast %20 : vector<8xf32> to vector<8x1xf32>
    %c0_15 = arith.constant 0 : index
    %c0_16 = arith.constant 0 : index
    %22 = memref.load %arg7[%c0_15, %c0_16] : memref<1x1xf32, #tpu.memory_space<smem>>
    %23 = vector.broadcast %22 : f32 to vector<8x1xf32>
    %24 = arith.addf %21, %23 : vector<8x1xf32>
    %25 = arith.negf %24 : vector<8x1xf32>
    %26 = math.exp %25 : vector<8x1xf32>
    %cst_17 = arith.constant 1.000000e+00 : f32
    %27 = vector.broadcast %cst_17 : f32 to vector<8x1xf32>
    %28 = arith.addf %27, %26 : vector<8x1xf32>
    %29 = arith.divf %27, %28 : vector<8x1xf32>
    %c0_18 = arith.constant 0 : index
    %c0_19 = arith.constant 0 : index
    %30 = vector.load %arg8[%c0_18, %c0_19] : memref<8x1xf32, #tpu.memory_space<vmem>>, vector<8x1xf32>
    tpu.vector_store %arg8[%c0_18, %c0_19], %29 {strides = array<i32>} : memref<8x1xf32, #tpu.memory_space<vmem>>, vector<8x1xf32>,
    return
  }
  func.func @transform_0(%arg0: i32) -> (i32, i32) {
    %c0_i32 = arith.constant 0 : i32
    %c0_i32_0 = arith.constant 0 : i32
    return %arg0, %c0_i32 : i32, i32
  }
  func.func @transform_1(%arg0: i32) -> (i32, i32) {
    %c0_i32 = arith.constant 0 : i32
    %c0_i32_0 = arith.constant 0 : i32
    %c0_i32_1 = arith.constant 0 : i32
    return %c0_i32, %c0_i32_0 : i32, i32
  }
  func.func @transform_2(%arg0: i32) -> (i32, i32) {
    %c0_i32 = arith.constant 0 : i32
    %c0_i32_0 = arith.constant 0 : i32
    %c0_i32_1 = arith.constant 0 : i32
    return %c0_i32, %c0_i32_0 : i32, i32
  }
  func.func @transform_3(%arg0: i32) -> (i32, i32) {
    %c0_i32 = arith.constant 0 : i32
    %c0_i32_0 = arith.constant 0 : i32
    %c0_i32_1 = arith.constant 0 : i32
    return %c0_i32, %c0_i32_0 : i32, i32
  }
  func.func @transform_4(%arg0: i32) -> (i32, i32) {
    %c0_i32 = arith.constant 0 : i32
    %c0_i32_0 = arith.constant 0 : i32
    %c0_i32_1 = arith.constant 0 : i32
    return %c0_i32, %c0_i32_0 : i32, i32
  }
  func.func @transform_5(%arg0: i32) -> (i32, i32) {
    %c0_i32 = arith.constant 0 : i32
    %c0_i32_0 = arith.constant 0 : i32
    %c0_i32_1 = arith.constant 0 : i32
    return %c0_i32, %c0_i32_0 : i32, i32
  }
  func.func @transform_6(%arg0: i32) -> (i32, i32) {
    %c0_i32 = arith.constant 0 : i32
    %c0_i32_0 = arith.constant 0 : i32
    %c0_i32_1 = arith.constant 0 : i32
    return %c0_i32, %c0_i32_0 : i32, i32
  }
  func.func @transform_7(%arg0: i32) -> (i32, i32) {
    %c0_i32 = arith.constant 0 : i32
    %c0_i32_0 = arith.constant 0 : i32
    return %arg0, %c0_i32 : i32, i32
  }
}

</mosaic_0001>

<llo_original>
// kernel: tpu_custom_call.1
$region0: #{tpu_custom_call.1}
  #allocation0 [shape = 'u32[]', space=smem, size = 0x4, offset = 0x4, fixed_abs, tag = 'smem constant byte address 0x4 - core index']
  #allocation1 [shape = 'u32[144,128]{1,0:T(1,128)}', space=vmem, size = 0x12000, scoped, tag = 'internal scratch']
  #allocation2 [shape = 'f32[1,1]{1,0:T(1,128)S(6)}', space=smem, size = 0x200, scoped, tag = 'scoped memory for tpu_custom_call.1']
  %s0 = inlined_call_operand.hbm [shape: f32[8,32], index: 0, kind: input, shape index: {}]
  %s1 = inlined_call_operand.hbm [shape: bf16[32,1024], index: 1, kind: input, shape index: {}]
  %s2 = inlined_call_operand.vmem [shape: f32[1,1024], index: 2, kind: input, shape index: {}]
  %s3 = inlined_call_operand.hbm [shape: bf16[1024,512], index: 3, kind: input, shape index: {}]
  %s4 = inlined_call_operand.vmem [shape: f32[1,512], index: 4, kind: input, shape index: {}]
  %s5 = inlined_call_operand.vmem [shape: f32[1,512], index: 5, kind: input, shape index: {}]
  %s6 = inlined_call_operand.<no memory space> [shape: f32[1,1], index: 6, kind: input, shape index: {}]
  %s7 = inlined_call_operand.vmem [shape: f32[8,1], index: 7, kind: output, shape index: {}]
  %s8 = sld [smem:[#allocation0]]
  $region50: #{tpu_custom_call.1} parent=0
    _
  %s10 = ssub.s32 1, %s8
  %s11 = scalar_select 0, %s10, %s8
  %12 = sst [smem:[#allocation2]] %s6
  $region1: #{tpu_custom_call.1} parent=0
    #allocation3 [shape = 'u8[4096]{0}', space=vmem, size = 0x1000, scoped, tag = 'input window, operand 0, single buffered']
    #allocation4 [shape = 's32[1]{0}', space=sflag, size = 0x4, scoped, tag = 'scoped memory for tpu_custom_call.1']
    #allocation5 [shape = 'u8[65536]{0}', space=vmem, size = 0x10000, scoped, tag = 'input window, operand 1, single buffered']
    #allocation6 [shape = 's32[1]{0}', space=sflag, size = 0x4, scoped, tag = 'scoped memory for tpu_custom_call.1']
    #allocation7 [shape = 'u8[1048576]{0}', space=vmem, size = 0x100000, scoped, tag = 'input window, operand 3, single buffered']
    %13 = vsyncpa [#allocation4], 0
    %14 = vsyncpa [#allocation6], 0
    // Predicated region
    $region2: #{tpu_custom_call.1} parent=1 // pred_check
      _
    $region3: #{tpu_custom_call.1} parent=1 // pred_check_branch
      %16 = sbr.rel (0) target = $region5
    $region4: #{tpu_custom_call.1} parent=1 // pred_region
      %s18 = ssub.s32 128, 128
      %19 = vsyncadd [#allocation4], %s18
      %s21 = sshll.u32 [#allocation3], 4
      %s22 = int_to_ptr.vmem [resolvable:$true] %s21
      %24 = dma.hbm_to_vmem [thread:$0]  %s0, 128, %s22, [#allocation4]
    $region5: #{tpu_custom_call.1} parent=1 // pred_fallthru
      _
    // Predicated region
    $region6: #{tpu_custom_call.1} parent=1 // pred_check
      _
    $region7: #{tpu_custom_call.1} parent=1 // pred_check_branch
      %26 = sbr.rel (0) target = $region9
    $region8: #{tpu_custom_call.1} parent=1 // pred_region
      %s28 = ssub.s32 2048, 2048
      %29 = vsyncadd [#allocation6], %s28
      %s30 = sshll.u32 [#allocation5], 4
      %s31 = int_to_ptr.vmem [resolvable:$true] %s30
      %36 = dma.hbm_to_vmem [thread:$0]  %s1, 2048, %s31, [#allocation6], 512, 512, 32
    $region9: #{tpu_custom_call.1} parent=1 // pred_fallthru
      _
    // Predicated region
    $region10: #{tpu_custom_call.1} parent=1 // pred_check
      _
    $region11: #{tpu_custom_call.1} parent=1 // pred_check_branch
      %38 = sbr.rel (0) target = $region13
    $region12: #{tpu_custom_call.1} parent=1 // pred_region
      _
    $region13: #{tpu_custom_call.1} parent=1 // pred_fallthru
      _
    // Predicated region
    $region14: #{tpu_custom_call.1} parent=1 // pred_check
      _
    $region15: #{tpu_custom_call.1} parent=1 // pred_check_branch
      %40 = sbr.rel (0) target = $region17
    $region16: #{tpu_custom_call.1} parent=1 // pred_region
      %s42 = ssub.s32 32768, 32768
      %43 = vsyncadd [#allocation6], %s42
      %s44 = sshll.u32 [#allocation7], 4
      %s45 = int_to_ptr.vmem [resolvable:$true] %s44
      %50 = dma.hbm_to_vmem [thread:$0]  %s3, 32768, %s45, [#allocation6], 256, 256, 16
    $region17: #{tpu_custom_call.1} parent=1 // pred_fallthru
      _
    // Predicated region
    $region18: #{tpu_custom_call.1} parent=1 // pred_check
      _
    $region19: #{tpu_custom_call.1} parent=1 // pred_check_branch
      %52 = sbr.rel (0) target = $region21
    $region20: #{tpu_custom_call.1} parent=1 // pred_region
      _
    $region21: #{tpu_custom_call.1} parent=1 // pred_fallthru
      _
    // Predicated region
    $region22: #{tpu_custom_call.1} parent=1 // pred_check
      _
    $region23: #{tpu_custom_call.1} parent=1 // pred_check_branch
      %54 = sbr.rel (0) target = $region25
    $region24: #{tpu_custom_call.1} parent=1 // pred_region
      _
    $region25: #{tpu_custom_call.1} parent=1 // pred_fallthru
      _
    // Predicated region
    $region26: #{tpu_custom_call.1} parent=1 // pred_check
      _
    $region27: #{tpu_custom_call.1} parent=1 // pred_check_branch
      %56 = sbr.rel (0) target = $region29
    $region28: #{tpu_custom_call.1} parent=1 // pred_region
      _
    $region29: #{tpu_custom_call.1} parent=1 // pred_fallthru
      _
    // Predicated region
    $region30: #{tpu_custom_call.1} parent=1 // pred_check
      _
    $region31: #{tpu_custom_call.1} parent=1 // pred_check_branch
      %58 = sbr.rel (0) target = $region33
    $region32: #{tpu_custom_call.1} parent=1 // pred_region
      %59 = dma.done [#allocation4], 128
    $region33: #{tpu_custom_call.1} parent=1 // pred_fallthru
      _
    // Predicated region
    $region34: #{tpu_custom_call.1} parent=1 // pred_check
      _
    $region35: #{tpu_custom_call.1} parent=1 // pred_check_branch
      %61 = sbr.rel (0) target = $region37
    $region36: #{tpu_custom_call.1} parent=1 // pred_region
      %62 = dma.done [#allocation6], 2048
    $region37: #{tpu_custom_call.1} parent=1 // pred_fallthru
      _
    // Predicated region
    $region38: #{tpu_custom_call.1} parent=1 // pred_check
      _
    $region39: #{tpu_custom_call.1} parent=1 // pred_check_branch
      %64 = sbr.rel (0) target = $region41
    $region40: #{tpu_custom_call.1} parent=1 // pred_region
      %65 = dma.done [#allocation6], 32768
    $region41: #{tpu_custom_call.1} parent=1 // pred_fallthru
      _
    %v67 = vld [vmem:[#allocation3] sm:$0xff]
    %v68 = vpack.c.bf16 %v67, %v67
    %v69 = vld [vmem:[#allocation5] sm:$0xff]
    %v70 = vld [vmem:[#allocation5 + $0x8] sm:$0xff]
    %v71 = vld [vmem:[#allocation5 + $0x10] sm:$0xff]
    %v72 = vld [vmem:[#allocation5 + $0x18] sm:$0xff]
    %v73 = vld [vmem:[#allocation5 + $0x20] sm:$0xff]
    %v74 = vld [vmem:[#allocation5 + $0x28] sm:$0xff]
    %v75 = vld [vmem:[#allocation5 + $0x30] sm:$0xff]
    %v76 = vld [vmem:[#allocation5 + $0x38] sm:$0xff]
    %v77 = vld [vmem:[#allocation5 + $0x40] sm:$0xff]
    %v78 = vld [vmem:[#allocation5 + $0x48] sm:$0xff]
    %v79 = vld [vmem:[#allocation5 + $0x50] sm:$0xff]
    %v80 = vld [vmem:[#allocation5 + $0x58] sm:$0xff]
    %v81 = vld [vmem:[#allocation5 + $0x60] sm:$0xff]
    %v82 = vld [vmem:[#allocation5 + $0x68] sm:$0xff]
    %v83 = vld [vmem:[#allocation5 + $0x70] sm:$0xff]
    %v84 = vld [vmem:[#allocation5 + $0x78] sm:$0xff]
    %v85 = vld [vmem:[%s2] sm:$0xff]
    %v87 = vlaneseq
    %v88 = vshrl.u32 %v87, 7
    %v89 = vsub.s32 0, %v88
    %v90 = vrot.slane %v85, %v89
    %v91 = vlaneseq
    %v92 = vshrl.u32 %v91, 7
    %v93 = vsub.s32 1, %v92
    %v94 = vrot.slane %v85, %v93
    %v95 = vlaneseq
    %v96 = vshrl.u32 %v95, 7
    %v97 = vsub.s32 2, %v96
    %v98 = vrot.slane %v85, %v97
    %v99 = vlaneseq
    %v100 = vshrl.u32 %v99, 7
    %v101 = vsub.s32 3, %v100
    %v102 = vrot.slane %v85, %v101
    %v103 = vlaneseq
    %v104 = vshrl.u32 %v103, 7
    %v105 = vsub.s32 4, %v104
    %v106 = vrot.slane %v85, %v105
    %v107 = vlaneseq
    %v108 = vshrl.u32 %v107, 7
    %v109 = vsub.s32 5, %v108
    %v110 = vrot.slane %v85, %v109
    %v111 = vlaneseq
    %v112 = vshrl.u32 %v111, 7
    %v113 = vsub.s32 6, %v112
    %v114 = vrot.slane %v85, %v113
    %v115 = vlaneseq
    %v116 = vshrl.u32 %v115, 7
    %v117 = vsub.s32 7, %v116
    %v118 = vrot.slane %v85, %v117
    %v143 = vunpack.c.l.b16 %v69
    %v144 = vunpack.c.h.b16 %v69
    %v145 = vunpack.c.l.b16 %v70
    %v146 = vunpack.c.h.b16 %v70
    %v147 = vunpack.c.l.b16 %v71
    %v148 = vunpack.c.h.b16 %v71
    %v149 = vunpack.c.l.b16 %v72
    %v150 = vunpack.c.h.b16 %v72
    %v151 = vunpack.c.l.b16 %v73
    %v152 = vunpack.c.h.b16 %v73
    %v153 = vunpack.c.l.b16 %v74
    %v154 = vunpack.c.h.b16 %v74
    %v155 = vunpack.c.l.b16 %v75
    %v156 = vunpack.c.h.b16 %v75
    %v157 = vunpack.c.l.b16 %v76
    %v158 = vunpack.c.h.b16 %v76
    %v159 = vunpack.c.l.b16 %v77
    %v160 = vunpack.c.h.b16 %v77
    %v161 = vunpack.c.l.b16 %v78
    %v162 = vunpack.c.h.b16 %v78
    %v163 = vunpack.c.l.b16 %v79
    %v164 = vunpack.c.h.b16 %v79
    %v165 = vunpack.c.l.b16 %v80
    %v166 = vunpack.c.h.b16 %v80
    %v167 = vunpack.c.l.b16 %v81
    %v168 = vunpack.c.h.b16 %v81
    %v169 = vunpack.c.l.b16 %v82
    %v170 = vunpack.c.h.b16 %v82
    %v171 = vunpack.c.l.b16 %v83
    %v172 = vunpack.c.h.b16 %v83
    %v173 = vunpack.c.l.b16 %v84
    %v174 = vunpack.c.h.b16 %v84
    %v175 = vpack.c.b16 %v151, %v143
    %v176 = vpack.c.b16 %v152, %v144
    %v177 = vpack.c.b16 %v153, %v145
    %v178 = vpack.c.b16 %v154, %v146
    %v179 = vpack.c.b16 %v155, %v147
    %v180 = vpack.c.b16 %v156, %v148
    %v181 = vpack.c.b16 %v157, %v149
    %v182 = vpack.c.b16 %v158, %v150
    %v183 = vpack.c.b16 %v167, %v159
    %v184 = vpack.c.b16 %v168, %v160
    %v185 = vpack.c.b16 %v169, %v161
    %v186 = vpack.c.b16 %v170, %v162
    %v187 = vpack.c.b16 %v171, %v163
    %v188 = vpack.c.b16 %v172, %v164
    %v189 = vpack.c.b16 %v173, %v165
    %v190 = vpack.c.b16 %v174, %v166
    %vm207 = vcmask 261120
    %v209 = vsel %vm207, %v68, 0
    %211 = vmatprep.subr.bf16.mxu0 %v176
    %212 = vmatpush1.bf16.msra.mxu0 %v175
    %213 = vmatprep.subr.bf16.mxu0 %v184
    %214 = vmatpush1.bf16.msra.mxu0 %v183
    %215 = vmatprep.subr.bf16.mxu0 0
    %216 = vmatpush1.bf16.msra.mxu0 0
    %217 = vmatprep.subr.bf16.mxu0 0
    %218 = vmatpush1.bf16.msra.mxu0 0
    %219 = vmatprep.subr.bf16.mxu0 0
    %220 = vmatpush1.bf16.msra.mxu0 0
    %221 = vmatprep.subr.bf16.mxu0 0
    %222 = vmatpush1.bf16.msra.mxu0 0
    %223 = vmatprep.subr.bf16.mxu0 0
    %224 = vmatpush1.bf16.msra.mxu0 0
    %225 = vmatprep.subr.bf16.mxu0 0
    %226 = vmatpush1.bf16.msra.mxu0 0
    %227 = vmatprep.subr.bf16.mxu0 0
    %228 = vmatpush1.bf16.msra.mxu0 0
    %229 = vmatprep.subr.bf16.mxu0 0
    %230 = vmatpush1.bf16.msra.mxu0 0
    %231 = vmatprep.subr.bf16.mxu0 0
    %232 = vmatpush1.bf16.msra.mxu0 0
    %233 = vmatprep.subr.bf16.mxu0 0
    %234 = vmatpush1.bf16.msra.mxu0 0
    %235 = vmatprep.subr.bf16.mxu0 0
    %236 = vmatpush1.bf16.msra.mxu0 0
    %237 = vmatprep.subr.bf16.mxu0 0
    %238 = vmatpush1.bf16.msra.mxu0 0
    %239 = vmatprep.subr.bf16.mxu0 0
    %240 = vmatpush1.bf16.msra.mxu0 0
    %241 = vmatprep.subr.bf16.mxu0 0
    %242 = vmatpush1.bf16.msra.mxu0 0
    %243 = vmatprep.mubr.bf16.mxu0 0
    %244 = vmatmul.mubr.bf16.gmra.mrb[0].mxu0 %v209
    %v245 = vpop.f32.mrb[0].mxu0
    %v246 = vadd.f32 %v90, %v245
    %v247 = vpop.f32.mrb[0].mxu0
    %v248 = vadd.f32 %v94, %v247
    %v249 = vpop.f32.mrb[0].mxu0
    %v250 = vpop.f32.mrb[0].mxu0
    %251 = vdwg.mxu0
    %252 = vmatprep.subr.bf16.mxu0 %v178
    %253 = vmatpush1.bf16.msra.mxu0 %v177
    %254 = vmatprep.subr.bf16.mxu0 %v186
    %255 = vmatpush1.bf16.msra.mxu0 %v185
    %256 = vmatprep.subr.bf16.mxu0 0
    %257 = vmatpush1.bf16.msra.mxu0 0
    %258 = vmatprep.subr.bf16.mxu0 0
    %259 = vmatpush1.bf16.msra.mxu0 0
    %260 = vmatprep.subr.bf16.mxu0 0
    %261 = vmatpush1.bf16.msra.mxu0 0
    %262 = vmatprep.subr.bf16.mxu0 0
    %263 = vmatpush1.bf16.msra.mxu0 0
    %264 = vmatprep.subr.bf16.mxu0 0
    %265 = vmatpush1.bf16.msra.mxu0 0
    %266 = vmatprep.subr.bf16.mxu0 0
    %267 = vmatpush1.bf16.msra.mxu0 0
    %268 = vmatprep.subr.bf16.mxu0 0
    %269 = vmatpush1.bf16.msra.mxu0 0
    %270 = vmatprep.subr.bf16.mxu0 0
    %271 = vmatpush1.bf16.msra.mxu0 0
    %272 = vmatprep.subr.bf16.mxu0 0
    %273 = vmatpush1.bf16.msra.mxu0 0
    %274 = vmatprep.subr.bf16.mxu0 0
    %275 = vmatpush1.bf16.msra.mxu0 0
    %276 = vmatprep.subr.bf16.mxu0 0
    %277 = vmatpush1.bf16.msra.mxu0 0
    %278 = vmatprep.subr.bf16.mxu0 0
    %279 = vmatpush1.bf16.msra.mxu0 0
    %280 = vmatprep.subr.bf16.mxu0 0
    %281 = vmatpush1.bf16.msra.mxu0 0
    %282 = vmatprep.subr.bf16.mxu0 0
    %283 = vmatpush1.bf16.msra.mxu0 0
    %284 = vmatprep.mubr.bf16.mxu0 0
    %285 = vmatmul.mubr.bf16.gmra.mrb[0].mxu0 %v209
    %v286 = vpop.f32.mrb[0].mxu0
    %v287 = vadd.f32 %v98, %v286
    %v288 = vpop.f32.mrb[0].mxu0
    %v289 = vadd.f32 %v102, %v288
    %v290 = vpop.f32.mrb[0].mxu0
    %v291 = vpop.f32.mrb[0].mxu0
    %292 = vdwg.mxu0
    %293 = vmatprep.subr.bf16.mxu0 %v180
    %294 = vmatpush1.bf16.msra.mxu0 %v179
    %295 = vmatprep.subr.bf16.mxu0 %v188
    %296 = vmatpush1.bf16.msra.mxu0 %v187
    %297 = vmatprep.subr.bf16.mxu0 0
    %298 = vmatpush1.bf16.msra.mxu0 0
    %299 = vmatprep.subr.bf16.mxu0 0
    %300 = vmatpush1.bf16.msra.mxu0 0
    %301 = vmatprep.subr.bf16.mxu0 0
    %302 = vmatpush1.bf16.msra.mxu0 0
    %303 = vmatprep.subr.bf16.mxu0 0
    %304 = vmatpush1.bf16.msra.mxu0 0
    %305 = vmatprep.subr.bf16.mxu0 0
    %306 = vmatpush1.bf16.msra.mxu0 0
    %307 = vmatprep.subr.bf16.mxu0 0
    %308 = vmatpush1.bf16.msra.mxu0 0
    %309 = vmatprep.subr.bf16.mxu0 0
    %310 = vmatpush1.bf16.msra.mxu0 0
    %311 = vmatprep.subr.bf16.mxu0 0
    %312 = vmatpush1.bf16.msra.mxu0 0
    %313 = vmatprep.subr.bf16.mxu0 0
    %314 = vmatpush1.bf16.msra.mxu0 0
    %315 = vmatprep.subr.bf16.mxu0 0
    %316 = vmatpush1.bf16.msra.mxu0 0
    %317 = vmatprep.subr.bf16.mxu0 0
    %318 = vmatpush1.bf16.msra.mxu0 0
    %319 = vmatprep.subr.bf16.mxu0 0
    %320 = vmatpush1.bf16.msra.mxu0 0
    %321 = vmatprep.subr.bf16.mxu0 0
    %322 = vmatpush1.bf16.msra.mxu0 0
    %323 = vmatprep.subr.bf16.mxu0 0
    %324 = vmatpush1.bf16.msra.mxu0 0
    %325 = vmatprep.mubr.bf16.mxu0 0
    %326 = vmatmul.mubr.bf16.gmra.mrb[0].mxu0 %v209
    %v327 = vpop.f32.mrb[0].mxu0
    %v328 = vadd.f32 %v106, %v327
    %v329 = vpop.f32.mrb[0].mxu0
    %v330 = vadd.f32 %v110, %v329
    %v331 = vpop.f32.mrb[0].mxu0
    %v332 = vpop.f32.mrb[0].mxu0
    %333 = vdwg.mxu0
    %334 = vmatprep.subr.bf16.mxu0 %v182
    %335 = vmatpush1.bf16.msra.mxu0 %v181
    %336 = vmatprep.subr.bf16.mxu0 %v190
    %337 = vmatpush1.bf16.msra.mxu0 %v189
    %338 = vmatprep.subr.bf16.mxu0 0
    %339 = vmatpush1.bf16.msra.mxu0 0
    %340 = vmatprep.subr.bf16.mxu0 0
    %341 = vmatpush1.bf16.msra.mxu0 0
    %342 = vmatprep.subr.bf16.mxu0 0
    %343 = vmatpush1.bf16.msra.mxu0 0
    %344 = vmatprep.subr.bf16.mxu0 0
    %345 = vmatpush1.bf16.msra.mxu0 0
    %346 = vmatprep.subr.bf16.mxu0 0
    %347 = vmatpush1.bf16.msra.mxu0 0
    %348 = vmatprep.subr.bf16.mxu0 0
    %349 = vmatpush1.bf16.msra.mxu0 0
    %350 = vmatprep.subr.bf16.mxu0 0
    %351 = vmatpush1.bf16.msra.mxu0 0
    %352 = vmatprep.subr.bf16.mxu0 0
    %353 = vmatpush1.bf16.msra.mxu0 0
    %354 = vmatprep.subr.bf16.mxu0 0
    %355 = vmatpush1.bf16.msra.mxu0 0
    %356 = vmatprep.subr.bf16.mxu0 0
    %357 = vmatpush1.bf16.msra.mxu0 0
    %358 = vmatprep.subr.bf16.mxu0 0
    %359 = vmatpush1.bf16.msra.mxu0 0
    %360 = vmatprep.subr.bf16.mxu0 0
    %361 = vmatpush1.bf16.msra.mxu0 0
    %362 = vmatprep.subr.bf16.mxu0 0
    %363 = vmatpush1.bf16.msra.mxu0 0
    %364 = vmatprep.subr.bf16.mxu0 0
    %365 = vmatpush1.bf16.msra.mxu0 0
    %366 = vmatprep.mubr.bf16.mxu0 0
    %367 = vmatmul.mubr.bf16.gmra.mrb[0].mxu0 %v209
    %v368 = vpop.f32.mrb[0].mxu0
    %v369 = vadd.f32 %v114, %v368
    %v370 = vpop.f32.mrb[0].mxu0
    %v371 = vadd.f32 %v118, %v370
    %v372 = vpop.f32.mrb[0].mxu0
    %v373 = vpop.f32.mrb[0].mxu0
    %374 = vdwg.mxu0
    %v375 = vmax.f32 %v246, 0.0
    %v376 = vmax.f32 %v248, 0.0
    %v377 = vmax.f32 %v287, 0.0
    %v378 = vmax.f32 %v289, 0.0
    %v379 = vmax.f32 %v328, 0.0
    %v380 = vmax.f32 %v330, 0.0
    %v381 = vmax.f32 %v369, 0.0
    %v382 = vmax.f32 %v371, 0.0
    %v383 = vpack.c.bf16 %v375, %v375
    %v384 = vpack.c.bf16 %v376, %v376
    %v385 = vpack.c.bf16 %v377, %v377
    %v386 = vpack.c.bf16 %v378, %v378
    %v387 = vpack.c.bf16 %v379, %v379
    %v388 = vpack.c.bf16 %v380, %v380
    %v389 = vpack.c.bf16 %v381, %v381
    %v390 = vpack.c.bf16 %v382, %v382
    %v391 = vld [vmem:[#allocation7] sm:$0xff]
    %v392 = vld [vmem:[#allocation7 + $0x8] sm:$0xff]
    %v393 = vld [vmem:[#allocation7 + $0x10] sm:$0xff]
    %v394 = vld [vmem:[#allocation7 + $0x18] sm:$0xff]
    %v395 = vld [vmem:[#allocation7 + $0x20] sm:$0xff]
    %v396 = vld [vmem:[#allocation7 + $0x28] sm:$0xff]
    %v397 = vld [vmem:[#allocation7 + $0x30] sm:$0xff]
    %v398 = vld [vmem:[#allocation7 + $0x38] sm:$0xff]
    %v399 = vld [vmem:[#allocation7 + $0x40] sm:$0xff]
    %v400 = vld [vmem:[#allocation7 + $0x48] sm:$0xff]
    %v401 = vld [vmem:[#allocation7 + $0x50] sm:$0xff]
    %v402 = vld [vmem:[#allocation7 + $0x58] sm:$0xff]
    %v403 = vld [vmem:[#allocation7 + $0x60] sm:$0xff]
    %v404 = vld [vmem:[#allocation7 + $0x68] sm:$0xff]
    %v405 = vld [vmem:[#allocation7 + $0x70] sm:$0xff]
    %v406 = vld [vmem:[#allocation7 + $0x78] sm:$0xff]
    %v407 = vld [vmem:[#allocation7 + $0x80] sm:$0xff]
    %v408 = vld [vmem:[#allocation7 + $0x88] sm:$0xff]
    %v409 = vld [vmem:[#allocation7 + $0x90] sm:$0xff]
    %v410 = vld [vmem:[#allocation7 + $0x98] sm:$0xff]
    %v411 = vld [vmem:[#allocation7 + $0xa0] sm:$0xff]
    %v412 = vld [vmem:[#allocation7 + $0xa8] sm:$0xff]
    %v413 = vld [vmem:[#allocation7 + $0xb0] sm:$0xff]
    %v414 = vld [vmem:[#allocation7 + $0xb8] sm:$0xff]
    %v415 = vld [vmem:[#allocation7 + $0xc0] sm:$0xff]
    %v416 = vld [vmem:[#allocation7 + $0xc8] sm:$0xff]
    %v417 = vld [vmem:[#allocation7 + $0xd0] sm:$0xff]
    %v418 = vld [vmem:[#allocation7 + $0xd8] sm:$0xff]
    %v419 = vld [vmem:[#allocation7 + $0xe0] sm:$0xff]
    %v420 = vld [vmem:[#allocation7 + $0xe8] sm:$0xff]
    %v421 = vld [vmem:[#allocation7 + $0xf0] sm:$0xff]
    %v422 = vld [vmem:[#allocation7 + $0xf8] sm:$0xff]
    %v423 = vld [vmem:[#allocation7 + $0x100] sm:$0xff]
    %v424 = vld [vmem:[#allocation7 + $0x108] sm:$0xff]
    %v425 = vld [vmem:[#allocation7 + $0x110] sm:$0xff]
    %v426 = vld [vmem:[#allocation7 + $0x118] sm:$0xff]
    %v427 = vld [vmem:[#allocation7 + $0x120] sm:$0xff]
    %v428 = vld [vmem:[#allocation7 + $0x128] sm:$0xff]
    %v429 = vld [vmem:[#allocation7 + $0x130] sm:$0xff]
    %v430 = vld [vmem:[#allocation7 + $0x138] sm:$0xff]
    %v431 = vld [vmem:[#allocation7 + $0x140] sm:$0xff]
    %v432 = vld [vmem:[#allocation7 + $0x148] sm:$0xff]
    %v433 = vld [vmem:[#allocation7 + $0x150] sm:$0xff]
    %v434 = vld [vmem:[#allocation7 + $0x158] sm:$0xff]
    %v435 = vld [vmem:[#allocation7 + $0x160] sm:$0xff]
    %v436 = vld [vmem:[#allocation7 + $0x168] sm:$0xff]
    %v437 = vld [vmem:[#allocation7 + $0x170] sm:$0xff]
    %v438 = vld [vmem:[#allocation7 + $0x178] sm:$0xff]
    %v439 = vld [vmem:[#allocation7 + $0x180] sm:$0xff]
    %v440 = vld [vmem:[#allocation7 + $0x188] sm:$0xff]
    %v441 = vld [vmem:[#allocation7 + $0x190] sm:$0xff]
    %v442 = vld [vmem:[#allocation7 + $0x198] sm:$0xff]
    %v443 = vld [vmem:[#allocation7 + $0x1a0] sm:$0xff]
    %v444 = vld [vmem:[#allocation7 + $0x1a8] sm:$0xff]
    %v445 = vld [vmem:[#allocation7 + $0x1b0] sm:$0xff]
    %v446 = vld [vmem:[#allocation7 + $0x1b8] sm:$0xff]
    %v447 = vld [vmem:[#allocation7 + $0x1c0] sm:$0xff]
    %v448 = vld [vmem:[#allocation7 + $0x1c8] sm:$0xff]
    %v449 = vld [vmem:[#allocation7 + $0x1d0] sm:$0xff]
    %v450 = vld [vmem:[#allocation7 + $0x1d8] sm:$0xff]
    %v451 = vld [vmem:[#allocation7 + $0x1e0] sm:$0xff]
    %v452 = vld [vmem:[#allocation7 + $0x1e8] sm:$0xff]
    %v453 = vld [vmem:[#allocation7 + $0x1f0] sm:$0xff]
    %v454 = vld [vmem:[#allocation7 + $0x1f8] sm:$0xff]
    %v455 = vld [vmem:[#allocation7 + $0x200] sm:$0xff]
    %v456 = vld [vmem:[#allocation7 + $0x208] sm:$0xff]
    %v457 = vld [vmem:[#allocation7 + $0x210] sm:$0xff]
    %v458 = vld [vmem:[#allocation7 + $0x218] sm:$0xff]
    %v459 = vld [vmem:[#allocation7 + $0x220] sm:$0xff]
    %v460 = vld [vmem:[#allocation7 + $0x228] sm:$0xff]
    %v461 = vld [vmem:[#allocation7 + $0x230] sm:$0xff]
    %v462 = vld [vmem:[#allocation7 + $0x238] sm:$0xff]
    %v463 = vld [vmem:[#allocation7 + $0x240] sm:$0xff]
    %v464 = vld [vmem:[#allocation7 + $0x248] sm:$0xff]
    %v465 = vld [vmem:[#allocation7 + $0x250] sm:$0xff]
    %v466 = vld [vmem:[#allocation7 + $0x258] sm:$0xff]
    %v467 = vld [vmem:[#allocation7 + $0x260] sm:$0xff]
    %v468 = vld [vmem:[#allocation7 + $0x268] sm:$0xff]
    %v469 = vld [vmem:[#allocation7 + $0x270] sm:$0xff]
    %v470 = vld [vmem:[#allocation7 + $0x278] sm:$0xff]
    %v471 = vld [vmem:[#allocation7 + $0x280] sm:$0xff]
    %v472 = vld [vmem:[#allocation7 + $0x288] sm:$0xff]
    %v473 = vld [vmem:[#allocation7 + $0x290] sm:$0xff]
    %v474 = vld [vmem:[#allocation7 + $0x298] sm:$0xff]
    %v475 = vld [vmem:[#allocation7 + $0x2a0] sm:$0xff]
    %v476 = vld [vmem:[#allocation7 + $0x2a8] sm:$0xff]
    %v477 = vld [vmem:[#allocation7 + $0x2b0] sm:$0xff]
    %v478 = vld [vmem:[#allocation7 + $0x2b8] sm:$0xff]
    %v479 = vld [vmem:[#allocation7 + $0x2c0] sm:$0xff]
    %v480 = vld [vmem:[#allocation7 + $0x2c8] sm:$0xff]
    %v481 = vld [vmem:[#allocation7 + $0x2d0] sm:$0xff]
    %v482 = vld [vmem:[#allocation7 + $0x2d8] sm:$0xff]
    %v483 = vld [vmem:[#allocation7 + $0x2e0] sm:$0xff]
    %v484 = vld [vmem:[#allocation7 + $0x2e8] sm:$0xff]
    %v485 = vld [vmem:[#allocation7 + $0x2f0] sm:$0xff]
    %v486 = vld [vmem:[#allocation7 + $0x2f8] sm:$0xff]
    %v487 = vld [vmem:[#allocation7 + $0x300] sm:$0xff]
    %v488 = vld [vmem:[#allocation7 + $0x308] sm:$0xff]
    %v489 = vld [vmem:[#allocation7 + $0x310] sm:$0xff]
    %v490 = vld [vmem:[#allocation7 + $0x318] sm:$0xff]
    %v491 = vld [vmem:[#allocation7 + $0x320] sm:$0xff]
    %v492 = vld [vmem:[#allocation7 + $0x328] sm:$0xff]
    %v493 = vld [vmem:[#allocation7 + $0x330] sm:$0xff]
    %v494 = vld [vmem:[#allocation7 + $0x338] sm:$0xff]
    %v495 = vld [vmem:[#allocation7 + $0x340] sm:$0xff]
    %v496 = vld [vmem:[#allocation7 + $0x348] sm:$0xff]
    %v497 = vld [vmem:[#allocation7 + $0x350] sm:$0xff]
    %v498 = vld [vmem:[#allocation7 + $0x358] sm:$0xff]
    %v499 = vld [vmem:[#allocation7 + $0x360] sm:$0xff]
    %v500 = vld [vmem:[#allocation7 + $0x368] sm:$0xff]
    %v501 = vld [vmem:[#allocation7 + $0x370] sm:$0xff]
    %v502 = vld [vmem:[#allocation7 + $0x378] sm:$0xff]
    %v503 = vld [vmem:[#allocation7 + $0x380] sm:$0xff]
    %v504 = vld [vmem:[#allocation7 + $0x388] sm:$0xff]
    %v505 = vld [vmem:[#allocation7 + $0x390] sm:$0xff]
    %v506 = vld [vmem:[#allocation7 + $0x398] sm:$0xff]
    %v507 = vld [vmem:[#allocation7 + $0x3a0] sm:$0xff]
    %v508 = vld [vmem:[#allocation7 + $0x3a8] sm:$0xff]
    %v509 = vld [vmem:[#allocation7 + $0x3b0] sm:$0xff]
    %v510 = vld [vmem:[#allocation7 + $0x3b8] sm:$0xff]
    %v511 = vld [vmem:[#allocation7 + $0x3c0] sm:$0xff]
    %v512 = vld [vmem:[#allocation7 + $0x3c8] sm:$0xff]
    %v513 = vld [vmem:[#allocation7 + $0x3d0] sm:$0xff]
    %v514 = vld [vmem:[#allocation7 + $0x3d8] sm:$0xff]
    %v515 = vld [vmem:[#allocation7 + $0x3e0] sm:$0xff]
    %v516 = vld [vmem:[#allocation7 + $0x3e8] sm:$0xff]
    %v517 = vld [vmem:[#allocation7 + $0x3f0] sm:$0xff]
    %v518 = vld [vmem:[#allocation7 + $0x3f8] sm:$0xff]
    %v519 = vld [vmem:[#allocation7 + $0x400] sm:$0xff]
    %v520 = vld [vmem:[#allocation7 + $0x408] sm:$0xff]
    %v521 = vld [vmem:[#allocation7 + $0x410] sm:$0xff]
    %v522 = vld [vmem:[#allocation7 + $0x418] sm:$0xff]
    %v523 = vld [vmem:[#allocation7 + $0x420] sm:$0xff]
    %v524 = vld [vmem:[#allocation7 + $0x428] sm:$0xff]
    %v525 = vld [vmem:[#allocation7 + $0x430] sm:$0xff]
    %v526 = vld [vmem:[#allocation7 + $0x438] sm:$0xff]
    %v527 = vld [vmem:[#allocation7 + $0x440] sm:$0xff]
    %v528 = vld [vmem:[#allocation7 + $0x448] sm:$0xff]
    %v529 = vld [vmem:[#allocation7 + $0x450] sm:$0xff]
    %v530 = vld [vmem:[#allocation7 + $0x458] sm:$0xff]
    %v531 = vld [vmem:[#allocation7 + $0x460] sm:$0xff]
    %v532 = vld [vmem:[#allocation7 + $0x468] sm:$0xff]
    %v533 = vld [vmem:[#allocation7 + $0x470] sm:$0xff]
    %v534 = vld [vmem:[#allocation7 + $0x478] sm:$0xff]
    %v535 = vld [vmem:[#allocation7 + $0x480] sm:$0xff]
    %v536 = vld [vmem:[#allocation7 + $0x488] sm:$0xff]
    %v537 = vld [vmem:[#allocation7 + $0x490] sm:$0xff]
    %v538 = vld [vmem:[#allocation7 + $0x498] sm:$0xff]
    %v539 = vld [vmem:[#allocation7 + $0x4a0] sm:$0xff]
    %v540 = vld [vmem:[#allocation7 + $0x4a8] sm:$0xff]
    %v541 = vld [vmem:[#allocation7 + $0x4b0] sm:$0xff]
    %v542 = vld [vmem:[#allocation7 + $0x4b8] sm:$0xff]
    %v543 = vld [vmem:[#allocation7 + $0x4c0] sm:$0xff]
    %v544 = vld [vmem:[#allocation7 + $0x4c8] sm:$0xff]
    %v545 = vld [vmem:[#allocation7 + $0x4d0] sm:$0xff]
    %v546 = vld [vmem:[#allocation7 + $0x4d8] sm:$0xff]
    %v547 = vld [vmem:[#allocation7 + $0x4e0] sm:$0xff]
    %v548 = vld [vmem:[#allocation7 + $0x4e8] sm:$0xff]
    %v549 = vld [vmem:[#allocation7 + $0x4f0] sm:$0xff]
    %v550 = vld [vmem:[#allocation7 + $0x4f8] sm:$0xff]
    %v551 = vld [vmem:[#allocation7 + $0x500] sm:$0xff]
    %v552 = vld [vmem:[#allocation7 + $0x508] sm:$0xff]
    %v553 = vld [vmem:[#allocation7 + $0x510] sm:$0xff]
    %v554 = vld [vmem:[#allocation7 + $0x518] sm:$0xff]
    %v555 = vld [vmem:[#allocation7 + $0x520] sm:$0xff]
    %v556 = vld [vmem:[#allocation7 + $0x528] sm:$0xff]
    %v557 = vld [vmem:[#allocation7 + $0x530] sm:$0xff]
    %v558 = vld [vmem:[#allocation7 + $0x538] sm:$0xff]
    %v559 = vld [vmem:[#allocation7 + $0x540] sm:$0xff]
    %v560 = vld [vmem:[#allocation7 + $0x548] sm:$0xff]
    %v561 = vld [vmem:[#allocation7 + $0x550] sm:$0xff]
    %v562 = vld [vmem:[#allocation7 + $0x558] sm:$0xff]
    %v563 = vld [vmem:[#allocation7 + $0x560] sm:$0xff]
    %v564 = vld [vmem:[#allocation7 + $0x568] sm:$0xff]
    %v565 = vld [vmem:[#allocation7 + $0x570] sm:$0xff]
    %v566 = vld [vmem:[#allocation7 + $0x578] sm:$0xff]
    %v567 = vld [vmem:[#allocation7 + $0x580] sm:$0xff]
    %v568 = vld [vmem:[#allocation7 + $0x588] sm:$0xff]
    %v569 = vld [vmem:[#allocation7 + $0x590] sm:$0xff]
    %v570 = vld [vmem:[#allocation7 + $0x598] sm:$0xff]
    %v571 = vld [vmem:[#allocation7 + $0x5a0] sm:$0xff]
    %v572 = vld [vmem:[#allocation7 + $0x5a8] sm:$0xff]
    %v573 = vld [vmem:[#allocation7 + $0x5b0] sm:$0xff]
    %v574 = vld [vmem:[#allocation7 + $0x5b8] sm:$0xff]
    %v575 = vld [vmem:[#allocation7 + $0x5c0] sm:$0xff]
    %v576 = vld [vmem:[#allocation7 + $0x5c8] sm:$0xff]
    %v577 = vld [vmem:[#allocation7 + $0x5d0] sm:$0xff]
    %v578 = vld [vmem:[#allocation7 + $0x5d8] sm:$0xff]
    %v579 = vld [vmem:[#allocation7 + $0x5e0] sm:$0xff]
    %v580 = vld [vmem:[#allocation7 + $0x5e8] sm:$0xff]
    %v581 = vld [vmem:[#allocation7 + $0x5f0] sm:$0xff]
    %v582 = vld [vmem:[#allocation7 + $0x5f8] sm:$0xff]
    %v583 = vld [vmem:[#allocation7 + $0x600] sm:$0xff]
    %v584 = vld [vmem:[#allocation7 + $0x608] sm:$0xff]
    %v585 = vld [vmem:[#allocation7 + $0x610] sm:$0xff]
    %v586 = vld [vmem:[#allocation7 + $0x618] sm:$0xff]
    %v587 = vld [vmem:[#allocation7 + $0x620] sm:$0xff]
    %v588 = vld [vmem:[#allocation7 + $0x628] sm:$0xff]
    %v589 = vld [vmem:[#allocation7 + $0x630] sm:$0xff]
    %v590 = vld [vmem:[#allocation7 + $0x638] sm:$0xff]
    %v591 = vld [vmem:[#allocation7 + $0x640] sm:$0xff]
    %v592 = vld [vmem:[#allocation7 + $0x648] sm:$0xff]
    %v593 = vld [vmem:[#allocation7 + $0x650] sm:$0xff]
    %v594 = vld [vmem:[#allocation7 + $0x658] sm:$0xff]
    %v595 = vld [vmem:[#allocation7 + $0x660] sm:$0xff]
    %v596 = vld [vmem:[#allocation7 + $0x668] sm:$0xff]
    %v597 = vld [vmem:[#allocation7 + $0x670] sm:$0xff]
    %v598 = vld [vmem:[#allocation7 + $0x678] sm:$0xff]
    %v599 = vld [vmem:[#allocation7 + $0x680] sm:$0xff]
    %v600 = vld [vmem:[#allocation7 + $0x688] sm:$0xff]
    %v601 = vld [vmem:[#allocation7 + $0x690] sm:$0xff]
    %v602 = vld [vmem:[#allocation7 + $0x698] sm:$0xff]
    %v603 = vld [vmem:[#allocation7 + $0x6a0] sm:$0xff]
    %v604 = vld [vmem:[#allocation7 + $0x6a8] sm:$0xff]
    %v605 = vld [vmem:[#allocation7 + $0x6b0] sm:$0xff]
    %v606 = vld [vmem:[#allocation7 + $0x6b8] sm:$0xff]
    %v607 = vld [vmem:[#allocation7 + $0x6c0] sm:$0xff]
    %v608 = vld [vmem:[#allocation7 + $0x6c8] sm:$0xff]
    %v609 = vld [vmem:[#allocation7 + $0x6d0] sm:$0xff]
    %v610 = vld [vmem:[#allocation7 + $0x6d8] sm:$0xff]
    %v611 = vld [vmem:[#allocation7 + $0x6e0] sm:$0xff]
    %v612 = vld [vmem:[#allocation7 + $0x6e8] sm:$0xff]
    %v613 = vld [vmem:[#allocation7 + $0x6f0] sm:$0xff]
    %v614 = vld [vmem:[#allocation7 + $0x6f8] sm:$0xff]
    %v615 = vld [vmem:[#allocation7 + $0x700] sm:$0xff]
    %v616 = vld [vmem:[#allocation7 + $0x708] sm:$0xff]
    %v617 = vld [vmem:[#allocation7 + $0x710] sm:$0xff]
    %v618 = vld [vmem:[#allocation7 + $0x718] sm:$0xff]
    %v619 = vld [vmem:[#allocation7 + $0x720] sm:$0xff]
    %v620 = vld [vmem:[#allocation7 + $0x728] sm:$0xff]
    %v621 = vld [vmem:[#allocation7 + $0x730] sm:$0xff]
    %v622 = vld [vmem:[#allocation7 + $0x738] sm:$0xff]
    %v623 = vld [vmem:[#allocation7 + $0x740] sm:$0xff]
    %v624 = vld [vmem:[#allocation7 + $0x748] sm:$0xff]
    %v625 = vld [vmem:[#allocation7 + $0x750] sm:$0xff]
    %v626 = vld [vmem:[#allocation7 + $0x758] sm:$0xff]
    %v627 = vld [vmem:[#allocation7 + $0x760] sm:$0xff]
    %v628 = vld [vmem:[#allocation7 + $0x768] sm:$0xff]
    %v629 = vld [vmem:[#allocation7 + $0x770] sm:$0xff]
    %v630 = vld [vmem:[#allocation7 + $0x778] sm:$0xff]
    %v631 = vld [vmem:[#allocation7 + $0x780] sm:$0xff]
    %v632 = vld [vmem:[#allocation7 + $0x788] sm:$0xff]
    %v633 = vld [vmem:[#allocation7 + $0x790] sm:$0xff]
    %v634 = vld [vmem:[#allocation7 + $0x798] sm:$0xff]
    %v635 = vld [vmem:[#allocation7 + $0x7a0] sm:$0xff]
    %v636 = vld [vmem:[#allocation7 + $0x7a8] sm:$0xff]
    %v637 = vld [vmem:[#allocation7 + $0x7b0] sm:$0xff]
    %v638 = vld [vmem:[#allocation7 + $0x7b8] sm:$0xff]
    %v639 = vld [vmem:[#allocation7 + $0x7c0] sm:$0xff]
    %v640 = vld [vmem:[#allocation7 + $0x7c8] sm:$0xff]
    %v641 = vld [vmem:[#allocation7 + $0x7d0] sm:$0xff]
    %v642 = vld [vmem:[#allocation7 + $0x7d8] sm:$0xff]
    %v643 = vld [vmem:[#allocation7 + $0x7e0] sm:$0xff]
    %v644 = vld [vmem:[#allocation7 + $0x7e8] sm:$0xff]
    %v645 = vld [vmem:[#allocation7 + $0x7f0] sm:$0xff]
    %v646 = vld [vmem:[#allocation7 + $0x7f8] sm:$0xff]
    %v647 = vld [vmem:[%s4] sm:$0xf]
    %v649 = vlaneseq
    %v650 = vshrl.u32 %v649, 7
    %v651 = vsub.s32 0, %v650
    %v652 = vrot.slane %v647, %v651
    %v653 = vlaneseq
    %v654 = vshrl.u32 %v653, 7
    %v655 = vsub.s32 1, %v654
    %v656 = vrot.slane %v647, %v655
    %v657 = vlaneseq
    %v658 = vshrl.u32 %v657, 7
    %v659 = vsub.s32 2, %v658
    %v660 = vrot.slane %v647, %v659
    %v661 = vlaneseq
    %v662 = vshrl.u32 %v661, 7
    %v663 = vsub.s32 3, %v662
    %v664 = vrot.slane %v647, %v663
    %v925 = vunpack.c.l.b16 %v391
    %v926 = vunpack.c.h.b16 %v391
    %v927 = vunpack.c.l.b16 %v392
    %v928 = vunpack.c.h.b16 %v392
    %v929 = vunpack.c.l.b16 %v393
    %v930 = vunpack.c.h.b16 %v393
    %v931 = vunpack.c.l.b16 %v394
    %v932 = vunpack.c.h.b16 %v394
    %v933 = vunpack.c.l.b16 %v395
    %v934 = vunpack.c.h.b16 %v395
    %v935 = vunpack.c.l.b16 %v396
    %v936 = vunpack.c.h.b16 %v396
    %v937 = vunpack.c.l.b16 %v397
    %v938 = vunpack.c.h.b16 %v397
    %v939 = vunpack.c.l.b16 %v398
    %v940 = vunpack.c.h.b16 %v398
    %v941 = vunpack.c.l.b16 %v399
    %v942 = vunpack.c.h.b16 %v399
    %v943 = vunpack.c.l.b16 %v400
    %v944 = vunpack.c.h.b16 %v400
    %v945 = vunpack.c.l.b16 %v401
    %v946 = vunpack.c.h.b16 %v401
    %v947 = vunpack.c.l.b16 %v402
    %v948 = vunpack.c.h.b16 %v402
    %v949 = vunpack.c.l.b16 %v403
    %v950 = vunpack.c.h.b16 %v403
    %v951 = vunpack.c.l.b16 %v404
    %v952 = vunpack.c.h.b16 %v404
    %v953 = vunpack.c.l.b16 %v405
    %v954 = vunpack.c.h.b16 %v405
    %v955 = vunpack.c.l.b16 %v406
    %v956 = vunpack.c.h.b16 %v406
    %v957 = vunpack.c.l.b16 %v407
    %v958 = vunpack.c.h.b16 %v407
    %v959 = vunpack.c.l.b16 %v408
    %v960 = vunpack.c.h.b16 %v408
    %v961 = vunpack.c.l.b16 %v409
    %v962 = vunpack.c.h.b16 %v409
    %v963 = vunpack.c.l.b16 %v410
    %v964 = vunpack.c.h.b16 %v410
    %v965 = vunpack.c.l.b16 %v411
    %v966 = vunpack.c.h.b16 %v411
    %v967 = vunpack.c.l.b16 %v412
    %v968 = vunpack.c.h.b16 %v412
    %v969 = vunpack.c.l.b16 %v413
    %v970 = vunpack.c.h.b16 %v413
    %v971 = vunpack.c.l.b16 %v414
    %v972 = vunpack.c.h.b16 %v414
    %v973 = vunpack.c.l.b16 %v415
    %v974 = vunpack.c.h.b16 %v415
    %v975 = vunpack.c.l.b16 %v416
    %v976 = vunpack.c.h.b16 %v416
    %v977 = vunpack.c.l.b16 %v417
    %v978 = vunpack.c.h.b16 %v417
    %v979 = vunpack.c.l.b16 %v418
    %v980 = vunpack.c.h.b16 %v418
    %v981 = vunpack.c.l.b16 %v419
    %v982 = vunpack.c.h.b16 %v419
    %v983 = vunpack.c.l.b16 %v420
    %v984 = vunpack.c.h.b16 %v420
    %v985 = vunpack.c.l.b16 %v421
    %v986 = vunpack.c.h.b16 %v421
    %v987 = vunpack.c.l.b16 %v422
    %v988 = vunpack.c.h.b16 %v422
    %v989 = vunpack.c.l.b16 %v423
    %v990 = vunpack.c.h.b16 %v423
    %v991 = vunpack.c.l.b16 %v424
    %v992 = vunpack.c.h.b16 %v424
    %v993 = vunpack.c.l.b16 %v425
    %v994 = vunpack.c.h.b16 %v425
    %v995 = vunpack.c.l.b16 %v426
    %v996 = vunpack.c.h.b16 %v426
    %v997 = vunpack.c.l.b16 %v427
    %v998 = vunpack.c.h.b16 %v427
    %v999 = vunpack.c.l.b16 %v428
    %v1000 = vunpack.c.h.b16 %v428
    %v1001 = vunpack.c.l.b16 %v429
    %v1002 = vunpack.c.h.b16 %v429
    %v1003 = vunpack.c.l.b16 %v430
    %v1004 = vunpack.c.h.b16 %v430
    %v1005 = vunpack.c.l.b16 %v431
    %v1006 = vunpack.c.h.b16 %v431
    %v1007 = vunpack.c.l.b16 %v432
    %v1008 = vunpack.c.h.b16 %v432
    %v1009 = vunpack.c.l.b16 %v433
    %v1010 = vunpack.c.h.b16 %v433
    %v1011 = vunpack.c.l.b16 %v434
    %v1012 = vunpack.c.h.b16 %v434
    %v1013 = vunpack.c.l.b16 %v435
    %v1014 = vunpack.c.h.b16 %v435
    %v1015 = vunpack.c.l.b16 %v436
    %v1016 = vunpack.c.h.b16 %v436
    %v1017 = vunpack.c.l.b16 %v437
    %v1018 = vunpack.c.h.b16 %v437
    %v1019 = vunpack.c.l.b16 %v438
    %v1020 = vunpack.c.h.b16 %v438
    %v1021 = vunpack.c.l.b16 %v439
    %v1022 = vunpack.c.h.b16 %v439
    %v1023 = vunpack.c.l.b16 %v440
    %v1024 = vunpack.c.h.b16 %v440
    %v1025 = vunpack.c.l.b16 %v441
    %v1026 = vunpack.c.h.b16 %v441
    %v1027 = vunpack.c.l.b16 %v442
    %v1028 = vunpack.c.h.b16 %v442
    %v1029 = vunpack.c.l.b16 %v443
    %v1030 = vunpack.c.h.b16 %v443
    %v1031 = vunpack.c.l.b16 %v444
    %v1032 = vunpack.c.h.b16 %v444
    %v1033 = vunpack.c.l.b16 %v445
    %v1034 = vunpack.c.h.b16 %v445
    %v1035 = vunpack.c.l.b16 %v446
    %v1036 = vunpack.c.h.b16 %v446
    %v1037 = vunpack.c.l.b16 %v447
    %v1038 = vunpack.c.h.b16 %v447
    %v1039 = vunpack.c.l.b16 %v448
    %v1040 = vunpack.c.h.b16 %v448
    %v1041 = vunpack.c.l.b16 %v449
    %v1042 = vunpack.c.h.b16 %v449
    %v1043 = vunpack.c.l.b16 %v450
    %v1044 = vunpack.c.h.b16 %v450
    %v1045 = vunpack.c.l.b16 %v451
    %v1046 = vunpack.c.h.b16 %v451
    %v1047 = vunpack.c.l.b16 %v452
    %v1048 = vunpack.c.h.b16 %v452
    %v1049 = vunpack.c.l.b16 %v453
    %v1050 = vunpack.c.h.b16 %v453
    %v1051 = vunpack.c.l.b16 %v454
    %v1052 = vunpack.c.h.b16 %v454
    %v1053 = vunpack.c.l.b16 %v455
    %v1054 = vunpack.c.h.b16 %v455
    %v1055 = vunpack.c.l.b16 %v456
    %v1056 = vunpack.c.h.b16 %v456
    %v1057 = vunpack.c.l.b16 %v457
    %v1058 = vunpack.c.h.b16 %v457
    %v1059 = vunpack.c.l.b16 %v458
    %v1060 = vunpack.c.h.b16 %v458
    %v1061 = vunpack.c.l.b16 %v459
    %v1062 = vunpack.c.h.b16 %v459
    %v1063 = vunpack.c.l.b16 %v460
    %v1064 = vunpack.c.h.b16 %v460
    %v1065 = vunpack.c.l.b16 %v461
    %v1066 = vunpack.c.h.b16 %v461
    %v1067 = vunpack.c.l.b16 %v462
    %v1068 = vunpack.c.h.b16 %v462
    %v1069 = vunpack.c.l.b16 %v463
    %v1070 = vunpack.c.h.b16 %v463
    %v1071 = vunpack.c.l.b16 %v464
    %v1072 = vunpack.c.h.b16 %v464
    %v1073 = vunpack.c.l.b16 %v465
    %v1074 = vunpack.c.h.b16 %v465
    %v1075 = vunpack.c.l.b16 %v466
    %v1076 = vunpack.c.h.b16 %v466
    %v1077 = vunpack.c.l.b16 %v467
    %v1078 = vunpack.c.h.b16 %v467
    %v1079 = vunpack.c.l.b16 %v468
    %v1080 = vunpack.c.h.b16 %v468
    %v1081 = vunpack.c.l.b16 %v469
    %v1082 = vunpack.c.h.b16 %v469
    %v1083 = vunpack.c.l.b16 %v470
    %v1084 = vunpack.c.h.b16 %v470
    %v1085 = vunpack.c.l.b16 %v471
    %v1086 = vunpack.c.h.b16 %v471
    %v1087 = vunpack.c.l.b16 %v472
    %v1088 = vunpack.c.h.b16 %v472
    %v1089 = vunpack.c.l.b16 %v473
    %v1090 = vunpack.c.h.b16 %v473
    %v1091 = vunpack.c.l.b16 %v474
    %v1092 = vunpack.c.h.b16 %v474
    %v1093 = vunpack.c.l.b16 %v475
    %v1094 = vunpack.c.h.b16 %v475
    %v1095 = vunpack.c.l.b16 %v476
    %v1096 = vunpack.c.h.b16 %v476
    %v1097 = vunpack.c.l.b16 %v477
    %v1098 = vunpack.c.h.b16 %v477
    %v1099 = vunpack.c.l.b16 %v478
    %v1100 = vunpack.c.h.b16 %v478
    %v1101 = vunpack.c.l.b16 %v479
    %v1102 = vunpack.c.h.b16 %v479
    %v1103 = vunpack.c.l.b16 %v480
    %v1104 = vunpack.c.h.b16 %v480
    %v1105 = vunpack.c.l.b16 %v481
    %v1106 = vunpack.c.h.b16 %v481
    %v1107 = vunpack.c.l.b16 %v482
    %v1108 = vunpack.c.h.b16 %v482
    %v1109 = vunpack.c.l.b16 %v483
    %v1110 = vunpack.c.h.b16 %v483
    %v1111 = vunpack.c.l.b16 %v484
    %v1112 = vunpack.c.h.b16 %v484
    %v1113 = vunpack.c.l.b16 %v485
    %v1114 = vunpack.c.h.b16 %v485
    %v1115 = vunpack.c.l.b16 %v486
    %v1116 = vunpack.c.h.b16 %v486
    %v1117 = vunpack.c.l.b16 %v487
    %v1118 = vunpack.c.h.b16 %v487
    %v1119 = vunpack.c.l.b16 %v488
    %v1120 = vunpack.c.h.b16 %v488
    %v1121 = vunpack.c.l.b16 %v489
    %v1122 = vunpack.c.h.b16 %v489
    %v1123 = vunpack.c.l.b16 %v490
    %v1124 = vunpack.c.h.b16 %v490
    %v1125 = vunpack.c.l.b16 %v491
    %v1126 = vunpack.c.h.b16 %v491
    %v1127 = vunpack.c.l.b16 %v492
    %v1128 = vunpack.c.h.b16 %v492
    %v1129 = vunpack.c.l.b16 %v493
    %v1130 = vunpack.c.h.b16 %v493
    %v1131 = vunpack.c.l.b16 %v494
    %v1132 = vunpack.c.h.b16 %v494
    %v1133 = vunpack.c.l.b16 %v495
    %v1134 = vunpack.c.h.b16 %v495
    %v1135 = vunpack.c.l.b16 %v496
    %v1136 = vunpack.c.h.b16 %v496
    %v1137 = vunpack.c.l.b16 %v497
    %v1138 = vunpack.c.h.b16 %v497
    %v1139 = vunpack.c.l.b16 %v498
    %v1140 = vunpack.c.h.b16 %v498
    %v1141 = vunpack.c.l.b16 %v499
    %v1142 = vunpack.c.h.b16 %v499
    %v1143 = vunpack.c.l.b16 %v500
    %v1144 = vunpack.c.h.b16 %v500
    %v1145 = vunpack.c.l.b16 %v501
    %v1146 = vunpack.c.h.b16 %v501
    %v1147 = vunpack.c.l.b16 %v502
    %v1148 = vunpack.c.h.b16 %v502
    %v1149 = vunpack.c.l.b16 %v503
    %v1150 = vunpack.c.h.b16 %v503
    %v1151 = vunpack.c.l.b16 %v504
    %v1152 = vunpack.c.h.b16 %v504
    %v1153 = vunpack.c.l.b16 %v505
    %v1154 = vunpack.c.h.b16 %v505
    %v1155 = vunpack.c.l.b16 %v506
    %v1156 = vunpack.c.h.b16 %v506
    %v1157 = vunpack.c.l.b16 %v507
    %v1158 = vunpack.c.h.b16 %v507
    %v1159 = vunpack.c.l.b16 %v508
    %v1160 = vunpack.c.h.b16 %v508
    %v1161 = vunpack.c.l.b16 %v509
    %v1162 = vunpack.c.h.b16 %v509
    %v1163 = vunpack.c.l.b16 %v510
    %v1164 = vunpack.c.h.b16 %v510
    %v1165 = vunpack.c.l.b16 %v511
    %v1166 = vunpack.c.h.b16 %v511
    %v1167 = vunpack.c.l.b16 %v512
    %v1168 = vunpack.c.h.b16 %v512
    %v1169 = vunpack.c.l.b16 %v513
    %v1170 = vunpack.c.h.b16 %v513
    %v1171 = vunpack.c.l.b16 %v514
    %v1172 = vunpack.c.h.b16 %v514
    %v1173 = vunpack.c.l.b16 %v515
    %v1174 = vunpack.c.h.b16 %v515
    %v1175 = vunpack.c.l.b16 %v516
    %v1176 = vunpack.c.h.b16 %v516
    %v1177 = vunpack.c.l.b16 %v517
    %v1178 = vunpack.c.h.b16 %v517
    %v1179 = vunpack.c.l.b16 %v518
    %v1180 = vunpack.c.h.b16 %v518
    %v1181 = vunpack.c.l.b16 %v519
    %v1182 = vunpack.c.h.b16 %v519
    %v1183 = vunpack.c.l.b16 %v520
    %v1184 = vunpack.c.h.b16 %v520
    %v1185 = vunpack.c.l.b16 %v521
    %v1186 = vunpack.c.h.b16 %v521
    %v1187 = vunpack.c.l.b16 %v522
    %v1188 = vunpack.c.h.b16 %v522
    %v1189 = vunpack.c.l.b16 %v523
    %v1190 = vunpack.c.h.b16 %v523
    %v1191 = vunpack.c.l.b16 %v524
    %v1192 = vunpack.c.h.b16 %v524
    %v1193 = vunpack.c.l.b16 %v525
    %v1194 = vunpack.c.h.b16 %v525
    %v1195 = vunpack.c.l.b16 %v526
    %v1196 = vunpack.c.h.b16 %v526
    %v1197 = vunpack.c.l.b16 %v527
    %v1198 = vunpack.c.h.b16 %v527
    %v1199 = vunpack.c.l.b16 %v528
    %v1200 = vunpack.c.h.b16 %v528
    %v1201 = vunpack.c.l.b16 %v529
    %v1202 = vunpack.c.h.b16 %v529
    %v1203 = vunpack.c.l.b16 %v530
    %v1204 = vunpack.c.h.b16 %v530
    %v1205 = vunpack.c.l.b16 %v531
    %v1206 = vunpack.c.h.b16 %v531
    %v1207 = vunpack.c.l.b16 %v532
    %v1208 = vunpack.c.h.b16 %v532
    %v1209 = vunpack.c.l.b16 %v533
    %v1210 = vunpack.c.h.b16 %v533
    %v1211 = vunpack.c.l.b16 %v534
    %v1212 = vunpack.c.h.b16 %v534
    %v1213 = vunpack.c.l.b16 %v535
    %v1214 = vunpack.c.h.b16 %v535
    %v1215 = vunpack.c.l.b16 %v536
    %v1216 = vunpack.c.h.b16 %v536
    %v1217 = vunpack.c.l.b16 %v537
    %v1218 = vunpack.c.h.b16 %v537
    %v1219 = vunpack.c.l.b16 %v538
    %v1220 = vunpack.c.h.b16 %v538
    %v1221 = vunpack.c.l.b16 %v539
    %v1222 = vunpack.c.h.b16 %v539
    %v1223 = vunpack.c.l.b16 %v540
    %v1224 = vunpack.c.h.b16 %v540
    %v1225 = vunpack.c.l.b16 %v541
    %v1226 = vunpack.c.h.b16 %v541
    %v1227 = vunpack.c.l.b16 %v542
    %v1228 = vunpack.c.h.b16 %v542
    %v1229 = vunpack.c.l.b16 %v543
    %v1230 = vunpack.c.h.b16 %v543
    %v1231 = vunpack.c.l.b16 %v544
    %v1232 = vunpack.c.h.b16 %v544
    %v1233 = vunpack.c.l.b16 %v545
    %v1234 = vunpack.c.h.b16 %v545
    %v1235 = vunpack.c.l.b16 %v546
    %v1236 = vunpack.c.h.b16 %v546
    %v1237 = vunpack.c.l.b16 %v547
    %v1238 = vunpack.c.h.b16 %v547
    %v1239 = vunpack.c.l.b16 %v548
    %v1240 = vunpack.c.h.b16 %v548
    %v1241 = vunpack.c.l.b16 %v549
    %v1242 = vunpack.c.h.b16 %v549
    %v1243 = vunpack.c.l.b16 %v550
    %v1244 = vunpack.c.h.b16 %v550
    %v1245 = vunpack.c.l.b16 %v551
    %v1246 = vunpack.c.h.b16 %v551
    %v1247 = vunpack.c.l.b16 %v552
    %v1248 = vunpack.c.h.b16 %v552
    %v1249 = vunpack.c.l.b16 %v553
    %v1250 = vunpack.c.h.b16 %v553
    %v1251 = vunpack.c.l.b16 %v554
    %v1252 = vunpack.c.h.b16 %v554
    %v1253 = vunpack.c.l.b16 %v555
    %v1254 = vunpack.c.h.b16 %v555
    %v1255 = vunpack.c.l.b16 %v556
    %v1256 = vunpack.c.h.b16 %v556
    %v1257 = vunpack.c.l.b16 %v557
    %v1258 = vunpack.c.h.b16 %v557
    %v1259 = vunpack.c.l.b16 %v558
    %v1260 = vunpack.c.h.b16 %v558
    %v1261 = vunpack.c.l.b16 %v559
    %v1262 = vunpack.c.h.b16 %v559
    %v1263 = vunpack.c.l.b16 %v560
    %v1264 = vunpack.c.h.b16 %v560
    %v1265 = vunpack.c.l.b16 %v561
    %v1266 = vunpack.c.h.b16 %v561
    %v1267 = vunpack.c.l.b16 %v562
    %v1268 = vunpack.c.h.b16 %v562
    %v1269 = vunpack.c.l.b16 %v563
    %v1270 = vunpack.c.h.b16 %v563
    %v1271 = vunpack.c.l.b16 %v564
    %v1272 = vunpack.c.h.b16 %v564
    %v1273 = vunpack.c.l.b16 %v565
    %v1274 = vunpack.c.h.b16 %v565
    %v1275 = vunpack.c.l.b16 %v566
    %v1276 = vunpack.c.h.b16 %v566
    %v1277 = vunpack.c.l.b16 %v567
    %v1278 = vunpack.c.h.b16 %v567
    %v1279 = vunpack.c.l.b16 %v568
    %v1280 = vunpack.c.h.b16 %v568
    %v1281 = vunpack.c.l.b16 %v569
    %v1282 = vunpack.c.h.b16 %v569
    %v1283 = vunpack.c.l.b16 %v570
    %v1284 = vunpack.c.h.b16 %v570
    %v1285 = vunpack.c.l.b16 %v571
    %v1286 = vunpack.c.h.b16 %v571
    %v1287 = vunpack.c.l.b16 %v572
    %v1288 = vunpack.c.h.b16 %v572
    %v1289 = vunpack.c.l.b16 %v573
    %v1290 = vunpack.c.h.b16 %v573
    %v1291 = vunpack.c.l.b16 %v574
    %v1292 = vunpack.c.h.b16 %v574
    %v1293 = vunpack.c.l.b16 %v575
    %v1294 = vunpack.c.h.b16 %v575
    %v1295 = vunpack.c.l.b16 %v576
    %v1296 = vunpack.c.h.b16 %v576
    %v1297 = vunpack.c.l.b16 %v577
    %v1298 = vunpack.c.h.b16 %v577
    %v1299 = vunpack.c.l.b16 %v578
    %v1300 = vunpack.c.h.b16 %v578
    %v1301 = vunpack.c.l.b16 %v579
    %v1302 = vunpack.c.h.b16 %v579
    %v1303 = vunpack.c.l.b16 %v580
    %v1304 = vunpack.c.h.b16 %v580
    %v1305 = vunpack.c.l.b16 %v581
    %v1306 = vunpack.c.h.b16 %v581
    %v1307 = vunpack.c.l.b16 %v582
    %v1308 = vunpack.c.h.b16 %v582
    %v1309 = vunpack.c.l.b16 %v583
    %v1310 = vunpack.c.h.b16 %v583
    %v1311 = vunpack.c.l.b16 %v584
    %v1312 = vunpack.c.h.b16 %v584
    %v1313 = vunpack.c.l.b16 %v585
    %v1314 = vunpack.c.h.b16 %v585
    %v1315 = vunpack.c.l.b16 %v586
    %v1316 = vunpack.c.h.b16 %v586
    %v1317 = vunpack.c.l.b16 %v587
    %v1318 = vunpack.c.h.b16 %v587
    %v1319 = vunpack.c.l.b16 %v588
    %v1320 = vunpack.c.h.b16 %v588
    %v1321 = vunpack.c.l.b16 %v589
    %v1322 = vunpack.c.h.b16 %v589
    %v1323 = vunpack.c.l.b16 %v590
    %v1324 = vunpack.c.h.b16 %v590
    %v1325 = vunpack.c.l.b16 %v591
    %v1326 = vunpack.c.h.b16 %v591
    %v1327 = vunpack.c.l.b16 %v592
    %v1328 = vunpack.c.h.b16 %v592
    %v1329 = vunpack.c.l.b16 %v593
    %v1330 = vunpack.c.h.b16 %v593
    %v1331 = vunpack.c.l.b16 %v594
    %v1332 = vunpack.c.h.b16 %v594
    %v1333 = vunpack.c.l.b16 %v595
    %v1334 = vunpack.c.h.b16 %v595
    %v1335 = vunpack.c.l.b16 %v596
    %v1336 = vunpack.c.h.b16 %v596
    %v1337 = vunpack.c.l.b16 %v597
    %v1338 = vunpack.c.h.b16 %v597
    %v1339 = vunpack.c.l.b16 %v598
    %v1340 = vunpack.c.h.b16 %v598
    %v1341 = vunpack.c.l.b16 %v599
    %v1342 = vunpack.c.h.b16 %v599
    %v1343 = vunpack.c.l.b16 %v600
    %v1344 = vunpack.c.h.b16 %v600
    %v1345 = vunpack.c.l.b16 %v601
    %v1346 = vunpack.c.h.b16 %v601
    %v1347 = vunpack.c.l.b16 %v602
    %v1348 = vunpack.c.h.b16 %v602
    %v1349 = vunpack.c.l.b16 %v603
    %v1350 = vunpack.c.h.b16 %v603
    %v1351 = vunpack.c.l.b16 %v604
    %v1352 = vunpack.c.h.b16 %v604
    %v1353 = vunpack.c.l.b16 %v605
    %v1354 = vunpack.c.h.b16 %v605
    %v1355 = vunpack.c.l.b16 %v606
    %v1356 = vunpack.c.h.b16 %v606
    %v1357 = vunpack.c.l.b16 %v607
    %v1358 = vunpack.c.h.b16 %v607
    %v1359 = vunpack.c.l.b16 %v608
    %v1360 = vunpack.c.h.b16 %v608
    %v1361 = vunpack.c.l.b16 %v609
    %v1362 = vunpack.c.h.b16 %v609
    %v1363 = vunpack.c.l.b16 %v610
    %v1364 = vunpack.c.h.b16 %v610
    %v1365 = vunpack.c.l.b16 %v611
    %v1366 = vunpack.c.h.b16 %v611
    %v1367 = vunpack.c.l.b16 %v612
    %v1368 = vunpack.c.h.b16 %v612
    %v1369 = vunpack.c.l.b16 %v613
    %v1370 = vunpack.c.h.b16 %v613
    %v1371 = vunpack.c.l.b16 %v614
    %v1372 = vunpack.c.h.b16 %v614
    %v1373 = vunpack.c.l.b16 %v615
    %v1374 = vunpack.c.h.b16 %v615
    %v1375 = vunpack.c.l.b16 %v616
    %v1376 = vunpack.c.h.b16 %v616
    %v1377 = vunpack.c.l.b16 %v617
    %v1378 = vunpack.c.h.b16 %v617
    %v1379 = vunpack.c.l.b16 %v618
    %v1380 = vunpack.c.h.b16 %v618
    %v1381 = vunpack.c.l.b16 %v619
    %v1382 = vunpack.c.h.b16 %v619
    %v1383 = vunpack.c.l.b16 %v620
    %v1384 = vunpack.c.h.b16 %v620
    %v1385 = vunpack.c.l.b16 %v621
    %v1386 = vunpack.c.h.b16 %v621
    %v1387 = vunpack.c.l.b16 %v622
    %v1388 = vunpack.c.h.b16 %v622
    %v1389 = vunpack.c.l.b16 %v623
    %v1390 = vunpack.c.h.b16 %v623
    %v1391 = vunpack.c.l.b16 %v624
    %v1392 = vunpack.c.h.b16 %v624
    %v1393 = vunpack.c.l.b16 %v625
    %v1394 = vunpack.c.h.b16 %v625
    %v1395 = vunpack.c.l.b16 %v626
    %v1396 = vunpack.c.h.b16 %v626
    %v1397 = vunpack.c.l.b16 %v627
    %v1398 = vunpack.c.h.b16 %v627
    %v1399 = vunpack.c.l.b16 %v628
    %v1400 = vunpack.c.h.b16 %v628
    %v1401 = vunpack.c.l.b16 %v629
    %v1402 = vunpack.c.h.b16 %v629
    %v1403 = vunpack.c.l.b16 %v630
    %v1404 = vunpack.c.h.b16 %v630
    %v1405 = vunpack.c.l.b16 %v631
    %v1406 = vunpack.c.h.b16 %v631
    %v1407 = vunpack.c.l.b16 %v632
    %v1408 = vunpack.c.h.b16 %v632
    %v1409 = vunpack.c.l.b16 %v633
    %v1410 = vunpack.c.h.b16 %v633
    %v1411 = vunpack.c.l.b16 %v634
    %v1412 = vunpack.c.h.b16 %v634
    %v1413 = vunpack.c.l.b16 %v635
    %v1414 = vunpack.c.h.b16 %v635
    %v1415 = vunpack.c.l.b16 %v636
    %v1416 = vunpack.c.h.b16 %v636
    %v1417 = vunpack.c.l.b16 %v637
    %v1418 = vunpack.c.h.b16 %v637
    %v1419 = vunpack.c.l.b16 %v638
    %v1420 = vunpack.c.h.b16 %v638
    %v1421 = vunpack.c.l.b16 %v639
    %v1422 = vunpack.c.h.b16 %v639
    %v1423 = vunpack.c.l.b16 %v640
    %v1424 = vunpack.c.h.b16 %v640
    %v1425 = vunpack.c.l.b16 %v641
    %v1426 = vunpack.c.h.b16 %v641
    %v1427 = vunpack.c.l.b16 %v642
    %v1428 = vunpack.c.h.b16 %v642
    %v1429 = vunpack.c.l.b16 %v643
    %v1430 = vunpack.c.h.b16 %v643
    %v1431 = vunpack.c.l.b16 %v644
    %v1432 = vunpack.c.h.b16 %v644
    %v1433 = vunpack.c.l.b16 %v645
    %v1434 = vunpack.c.h.b16 %v645
    %v1435 = vunpack.c.l.b16 %v646
    %v1436 = vunpack.c.h.b16 %v646
    %v1437 = vpack.c.b16 %v929, %v925
    %v1438 = vpack.c.b16 %v930, %v926
    %v1439 = vpack.c.b16 %v931, %v927
    %v1440 = vpack.c.b16 %v932, %v928
    %v1441 = vpack.c.b16 %v937, %v933
    %v1442 = vpack.c.b16 %v938, %v934
    %v1443 = vpack.c.b16 %v939, %v935
    %v1444 = vpack.c.b16 %v940, %v936
    %v1445 = vpack.c.b16 %v945, %v941
    %v1446 = vpack.c.b16 %v946, %v942
    %v1447 = vpack.c.b16 %v947, %v943
    %v1448 = vpack.c.b16 %v948, %v944
    %v1449 = vpack.c.b16 %v953, %v949
    %v1450 = vpack.c.b16 %v954, %v950
    %v1451 = vpack.c.b16 %v955, %v951
    %v1452 = vpack.c.b16 %v956, %v952
    %v1453 = vpack.c.b16 %v961, %v957
    %v1454 = vpack.c.b16 %v962, %v958
    %v1455 = vpack.c.b16 %v963, %v959
    %v1456 = vpack.c.b16 %v964, %v960
    %v1457 = vpack.c.b16 %v969, %v965
    %v1458 = vpack.c.b16 %v970, %v966
    %v1459 = vpack.c.b16 %v971, %v967
    %v1460 = vpack.c.b16 %v972, %v968
    %v1461 = vpack.c.b16 %v977, %v973
    %v1462 = vpack.c.b16 %v978, %v974
    %v1463 = vpack.c.b16 %v979, %v975
    %v1464 = vpack.c.b16 %v980, %v976
    %v1465 = vpack.c.b16 %v985, %v981
    %v1466 = vpack.c.b16 %v986, %v982
    %v1467 = vpack.c.b16 %v987, %v983
    %v1468 = vpack.c.b16 %v988, %v984
    %v1469 = vpack.c.b16 %v993, %v989
    %v1470 = vpack.c.b16 %v994, %v990
    %v1471 = vpack.c.b16 %v995, %v991
    %v1472 = vpack.c.b16 %v996, %v992
    %v1473 = vpack.c.b16 %v1001, %v997
    %v1474 = vpack.c.b16 %v1002, %v998
    %v1475 = vpack.c.b16 %v1003, %v999
    %v1476 = vpack.c.b16 %v1004, %v1000
    %v1477 = vpack.c.b16 %v1009, %v1005
    %v1478 = vpack.c.b16 %v1010, %v1006
    %v1479 = vpack.c.b16 %v1011, %v1007
    %v1480 = vpack.c.b16 %v1012, %v1008
    %v1481 = vpack.c.b16 %v1017, %v1013
    %v1482 = vpack.c.b16 %v1018, %v1014
    %v1483 = vpack.c.b16 %v1019, %v1015
    %v1484 = vpack.c.b16 %v1020, %v1016
    %v1485 = vpack.c.b16 %v1025, %v1021
    %v1486 = vpack.c.b16 %v1026, %v1022
    %v1487 = vpack.c.b16 %v1027, %v1023
    %v1488 = vpack.c.b16 %v1028, %v1024
    %v1489 = vpack.c.b16 %v1033, %v1029
    %v1490 = vpack.c.b16 %v1034, %v1030
    %v1491 = vpack.c.b16 %v1035, %v1031
    %v1492 = vpack.c.b16 %v1036, %v1032
    %v1493 = vpack.c.b16 %v1041, %v1037
    %v1494 = vpack.c.b16 %v1042, %v1038
    %v1495 = vpack.c.b16 %v1043, %v1039
    %v1496 = vpack.c.b16 %v1044, %v1040
    %v1497 = vpack.c.b16 %v1049, %v1045
    %v1498 = vpack.c.b16 %v1050, %v1046
    %v1499 = vpack.c.b16 %v1051, %v1047
    %v1500 = vpack.c.b16 %v1052, %v1048
    %v1501 = vpack.c.b16 %v1057, %v1053
    %v1502 = vpack.c.b16 %v1058, %v1054
    %v1503 = vpack.c.b16 %v1059, %v1055
    %v1504 = vpack.c.b16 %v1060, %v1056
    %v1505 = vpack.c.b16 %v1065, %v1061
    %v1506 = vpack.c.b16 %v1066, %v1062
    %v1507 = vpack.c.b16 %v1067, %v1063
    %v1508 = vpack.c.b16 %v1068, %v1064
    %v1509 = vpack.c.b16 %v1073, %v1069
    %v1510 = vpack.c.b16 %v1074, %v1070
    %v1511 = vpack.c.b16 %v1075, %v1071
    %v1512 = vpack.c.b16 %v1076, %v1072
    %v1513 = vpack.c.b16 %v1081, %v1077
    %v1514 = vpack.c.b16 %v1082, %v1078
    %v1515 = vpack.c.b16 %v1083, %v1079
    %v1516 = vpack.c.b16 %v1084, %v1080
    %v1517 = vpack.c.b16 %v1089, %v1085
    %v1518 = vpack.c.b16 %v1090, %v1086
    %v1519 = vpack.c.b16 %v1091, %v1087
    %v1520 = vpack.c.b16 %v1092, %v1088
    %v1521 = vpack.c.b16 %v1097, %v1093
    %v1522 = vpack.c.b16 %v1098, %v1094
    %v1523 = vpack.c.b16 %v1099, %v1095
    %v1524 = vpack.c.b16 %v1100, %v1096
    %v1525 = vpack.c.b16 %v1105, %v1101
    %v1526 = vpack.c.b16 %v1106, %v1102
    %v1527 = vpack.c.b16 %v1107, %v1103
    %v1528 = vpack.c.b16 %v1108, %v1104
    %v1529 = vpack.c.b16 %v1113, %v1109
    %v1530 = vpack.c.b16 %v1114, %v1110
    %v1531 = vpack.c.b16 %v1115, %v1111
    %v1532 = vpack.c.b16 %v1116, %v1112
    %v1533 = vpack.c.b16 %v1121, %v1117
    %v1534 = vpack.c.b16 %v1122, %v1118
    %v1535 = vpack.c.b16 %v1123, %v1119
    %v1536 = vpack.c.b16 %v1124, %v1120
    %v1537 = vpack.c.b16 %v1129, %v1125
    %v1538 = vpack.c.b16 %v1130, %v1126
    %v1539 = vpack.c.b16 %v1131, %v1127
    %v1540 = vpack.c.b16 %v1132, %v1128
    %v1541 = vpack.c.b16 %v1137, %v1133
    %v1542 = vpack.c.b16 %v1138, %v1134
    %v1543 = vpack.c.b16 %v1139, %v1135
    %v1544 = vpack.c.b16 %v1140, %v1136
    %v1545 = vpack.c.b16 %v1145, %v1141
    %v1546 = vpack.c.b16 %v1146, %v1142
    %v1547 = vpack.c.b16 %v1147, %v1143
    %v1548 = vpack.c.b16 %v1148, %v1144
    %v1549 = vpack.c.b16 %v1153, %v1149
    %v1550 = vpack.c.b16 %v1154, %v1150
    %v1551 = vpack.c.b16 %v1155, %v1151
    %v1552 = vpack.c.b16 %v1156, %v1152
    %v1553 = vpack.c.b16 %v1161, %v1157
    %v1554 = vpack.c.b16 %v1162, %v1158
    %v1555 = vpack.c.b16 %v1163, %v1159
    %v1556 = vpack.c.b16 %v1164, %v1160
    %v1557 = vpack.c.b16 %v1169, %v1165
    %v1558 = vpack.c.b16 %v1170, %v1166
    %v1559 = vpack.c.b16 %v1171, %v1167
    %v1560 = vpack.c.b16 %v1172, %v1168
    %v1561 = vpack.c.b16 %v1177, %v1173
    %v1562 = vpack.c.b16 %v1178, %v1174
    %v1563 = vpack.c.b16 %v1179, %v1175
    %v1564 = vpack.c.b16 %v1180, %v1176
    %v1565 = vpack.c.b16 %v1185, %v1181
    %v1566 = vpack.c.b16 %v1186, %v1182
    %v1567 = vpack.c.b16 %v1187, %v1183
    %v1568 = vpack.c.b16 %v1188, %v1184
    %v1569 = vpack.c.b16 %v1193, %v1189
    %v1570 = vpack.c.b16 %v1194, %v1190
    %v1571 = vpack.c.b16 %v1195, %v1191
    %v1572 = vpack.c.b16 %v1196, %v1192
    %v1573 = vpack.c.b16 %v1201, %v1197
    %v1574 = vpack.c.b16 %v1202, %v1198
    %v1575 = vpack.c.b16 %v1203, %v1199
    %v1576 = vpack.c.b16 %v1204, %v1200
    %v1577 = vpack.c.b16 %v1209, %v1205
    %v1578 = vpack.c.b16 %v1210, %v1206
    %v1579 = vpack.c.b16 %v1211, %v1207
    %v1580 = vpack.c.b16 %v1212, %v1208
    %v1581 = vpack.c.b16 %v1217, %v1213
    %v1582 = vpack.c.b16 %v1218, %v1214
    %v1583 = vpack.c.b16 %v1219, %v1215
    %v1584 = vpack.c.b16 %v1220, %v1216
    %v1585 = vpack.c.b16 %v1225, %v1221
    %v1586 = vpack.c.b16 %v1226, %v1222
    %v1587 = vpack.c.b16 %v1227, %v1223
    %v1588 = vpack.c.b16 %v1228, %v1224
    %v1589 = vpack.c.b16 %v1233, %v1229
    %v1590 = vpack.c.b16 %v1234, %v1230
    %v1591 = vpack.c.b16 %v1235, %v1231
    %v1592 = vpack.c.b16 %v1236, %v1232
    %v1593 = vpack.c.b16 %v1241, %v1237
    %v1594 = vpack.c.b16 %v1242, %v1238
    %v1595 = vpack.c.b16 %v1243, %v1239
    %v1596 = vpack.c.b16 %v1244, %v1240
    %v1597 = vpack.c.b16 %v1249, %v1245
    %v1598 = vpack.c.b16 %v1250, %v1246
    %v1599 = vpack.c.b16 %v1251, %v1247
    %v1600 = vpack.c.b16 %v1252, %v1248
    %v1601 = vpack.c.b16 %v1257, %v1253
    %v1602 = vpack.c.b16 %v1258, %v1254
    %v1603 = vpack.c.b16 %v1259, %v1255
    %v1604 = vpack.c.b16 %v1260, %v1256
    %v1605 = vpack.c.b16 %v1265, %v1261
    %v1606 = vpack.c.b16 %v1266, %v1262
    %v1607 = vpack.c.b16 %v1267, %v1263
    %v1608 = vpack.c.b16 %v1268, %v1264
    %v1609 = vpack.c.b16 %v1273, %v1269
    %v1610 = vpack.c.b16 %v1274, %v1270
    %v1611 = vpack.c.b16 %v1275, %v1271
    %v1612 = vpack.c.b16 %v1276, %v1272
    %v1613 = vpack.c.b16 %v1281, %v1277
    %v1614 = vpack.c.b16 %v1282, %v1278
    %v1615 = vpack.c.b16 %v1283, %v1279
    %v1616 = vpack.c.b16 %v1284, %v1280
    %v1617 = vpack.c.b16 %v1289, %v1285
    %v1618 = vpack.c.b16 %v1290, %v1286
    %v1619 = vpack.c.b16 %v1291, %v1287
    %v1620 = vpack.c.b16 %v1292, %v1288
    %v1621 = vpack.c.b16 %v1297, %v1293
    %v1622 = vpack.c.b16 %v1298, %v1294
    %v1623 = vpack.c.b16 %v1299, %v1295
    %v1624 = vpack.c.b16 %v1300, %v1296
    %v1625 = vpack.c.b16 %v1305, %v1301
    %v1626 = vpack.c.b16 %v1306, %v1302
    %v1627 = vpack.c.b16 %v1307, %v1303
    %v1628 = vpack.c.b16 %v1308, %v1304
    %v1629 = vpack.c.b16 %v1313, %v1309
    %v1630 = vpack.c.b16 %v1314, %v1310
    %v1631 = vpack.c.b16 %v1315, %v1311
    %v1632 = vpack.c.b16 %v1316, %v1312
    %v1633 = vpack.c.b16 %v1321, %v1317
    %v1634 = vpack.c.b16 %v1322, %v1318
    %v1635 = vpack.c.b16 %v1323, %v1319
    %v1636 = vpack.c.b16 %v1324, %v1320
    %v1637 = vpack.c.b16 %v1329, %v1325
    %v1638 = vpack.c.b16 %v1330, %v1326
    %v1639 = vpack.c.b16 %v1331, %v1327
    %v1640 = vpack.c.b16 %v1332, %v1328
    %v1641 = vpack.c.b16 %v1337, %v1333
    %v1642 = vpack.c.b16 %v1338, %v1334
    %v1643 = vpack.c.b16 %v1339, %v1335
    %v1644 = vpack.c.b16 %v1340, %v1336
    %v1645 = vpack.c.b16 %v1345, %v1341
    %v1646 = vpack.c.b16 %v1346, %v1342
    %v1647 = vpack.c.b16 %v1347, %v1343
    %v1648 = vpack.c.b16 %v1348, %v1344
    %v1649 = vpack.c.b16 %v1353, %v1349
    %v1650 = vpack.c.b16 %v1354, %v1350
    %v1651 = vpack.c.b16 %v1355, %v1351
    %v1652 = vpack.c.b16 %v1356, %v1352
    %v1653 = vpack.c.b16 %v1361, %v1357
    %v1654 = vpack.c.b16 %v1362, %v1358
    %v1655 = vpack.c.b16 %v1363, %v1359
    %v1656 = vpack.c.b16 %v1364, %v1360
    %v1657 = vpack.c.b16 %v1369, %v1365
    %v1658 = vpack.c.b16 %v1370, %v1366
    %v1659 = vpack.c.b16 %v1371, %v1367
    %v1660 = vpack.c.b16 %v1372, %v1368
    %v1661 = vpack.c.b16 %v1377, %v1373
    %v1662 = vpack.c.b16 %v1378, %v1374
    %v1663 = vpack.c.b16 %v1379, %v1375
    %v1664 = vpack.c.b16 %v1380, %v1376
    %v1665 = vpack.c.b16 %v1385, %v1381
    %v1666 = vpack.c.b16 %v1386, %v1382
    %v1667 = vpack.c.b16 %v1387, %v1383
    %v1668 = vpack.c.b16 %v1388, %v1384
    %v1669 = vpack.c.b16 %v1393, %v1389
    %v1670 = vpack.c.b16 %v1394, %v1390
    %v1671 = vpack.c.b16 %v1395, %v1391
    %v1672 = vpack.c.b16 %v1396, %v1392
    %v1673 = vpack.c.b16 %v1401, %v1397
    %v1674 = vpack.c.b16 %v1402, %v1398
    %v1675 = vpack.c.b16 %v1403, %v1399
    %v1676 = vpack.c.b16 %v1404, %v1400
    %v1677 = vpack.c.b16 %v1409, %v1405
    %v1678 = vpack.c.b16 %v1410, %v1406
    %v1679 = vpack.c.b16 %v1411, %v1407
    %v1680 = vpack.c.b16 %v1412, %v1408
    %v1681 = vpack.c.b16 %v1417, %v1413
    %v1682 = vpack.c.b16 %v1418, %v1414
    %v1683 = vpack.c.b16 %v1419, %v1415
    %v1684 = vpack.c.b16 %v1420, %v1416
    %v1685 = vpack.c.b16 %v1425, %v1421
    %v1686 = vpack.c.b16 %v1426, %v1422
    %v1687 = vpack.c.b16 %v1427, %v1423
    %v1688 = vpack.c.b16 %v1428, %v1424
    %v1689 = vpack.c.b16 %v1433, %v1429
    %v1690 = vpack.c.b16 %v1434, %v1430
    %v1691 = vpack.c.b16 %v1435, %v1431
    %v1692 = vpack.c.b16 %v1436, %v1432
    %1949 = vmatprep.subr.bf16.mxu0 %v1438
    %1950 = vmatpush1.bf16.msra.mxu0 %v1437
    %1951 = vmatprep.subr.bf16.mxu0 %v1442
    %1952 = vmatpush1.bf16.msra.mxu0 %v1441
    %1953 = vmatprep.subr.bf16.mxu0 %v1446
    %1954 = vmatpush1.bf16.msra.mxu0 %v1445
    %1955 = vmatprep.subr.bf16.mxu0 %v1450
    %1956 = vmatpush1.bf16.msra.mxu0 %v1449
    %1957 = vmatprep.subr.bf16.mxu0 %v1454
    %1958 = vmatpush1.bf16.msra.mxu0 %v1453
    %1959 = vmatprep.subr.bf16.mxu0 %v1458
    %1960 = vmatpush1.bf16.msra.mxu0 %v1457
    %1961 = vmatprep.subr.bf16.mxu0 %v1462
    %1962 = vmatpush1.bf16.msra.mxu0 %v1461
    %1963 = vmatprep.subr.bf16.mxu0 %v1466
    %1964 = vmatpush1.bf16.msra.mxu0 %v1465
    %1965 = vmatprep.subr.bf16.mxu0 %v1470
    %1966 = vmatpush1.bf16.msra.mxu0 %v1469
    %1967 = vmatprep.subr.bf16.mxu0 %v1474
    %1968 = vmatpush1.bf16.msra.mxu0 %v1473
    %1969 = vmatprep.subr.bf16.mxu0 %v1478
    %1970 = vmatpush1.bf16.msra.mxu0 %v1477
    %1971 = vmatprep.subr.bf16.mxu0 %v1482
    %1972 = vmatpush1.bf16.msra.mxu0 %v1481
    %1973 = vmatprep.subr.bf16.mxu0 %v1486
    %1974 = vmatpush1.bf16.msra.mxu0 %v1485
    %1975 = vmatprep.subr.bf16.mxu0 %v1490
    %1976 = vmatpush1.bf16.msra.mxu0 %v1489
    %1977 = vmatprep.subr.bf16.mxu0 %v1494
    %1978 = vmatpush1.bf16.msra.mxu0 %v1493
    %1979 = vmatprep.subr.bf16.mxu0 %v1498
    %1980 = vmatpush1.bf16.msra.mxu0 %v1497
    %1981 = vmatprep.mubr.bf16.mxu0 %v384
    %1982 = vmatmul.mubr.bf16.gmra.mrb[0].mxu0 %v383
    %v1983 = vpop.f32.mrb[0].mxu0
    %v1984 = vadd.f32 %v652, %v1983
    %v1985 = vpop.f32.mrb[0].mxu0
    %v1986 = vadd.f32 %v656, %v1985
    %v1987 = vpop.f32.mrb[0].mxu0
    %v1988 = vpop.f32.mrb[0].mxu0
    %1989 = vdwg.mxu0
    %1990 = vmatprep.subr.bf16.mxu0 %v1502
    %1991 = vmatpush1.bf16.msra.mxu0 %v1501
    %1992 = vmatprep.subr.bf16.mxu0 %v1506
    %1993 = vmatpush1.bf16.msra.mxu0 %v1505
    %1994 = vmatprep.subr.bf16.mxu0 %v1510
    %1995 = vmatpush1.bf16.msra.mxu0 %v1509
    %1996 = vmatprep.subr.bf16.mxu0 %v1514
    %1997 = vmatpush1.bf16.msra.mxu0 %v1513
    %1998 = vmatprep.subr.bf16.mxu0 %v1518
    %1999 = vmatpush1.bf16.msra.mxu0 %v1517
    %2000 = vmatprep.subr.bf16.mxu0 %v1522
    %2001 = vmatpush1.bf16.msra.mxu0 %v1521
    %2002 = vmatprep.subr.bf16.mxu0 %v1526
    %2003 = vmatpush1.bf16.msra.mxu0 %v1525
    %2004 = vmatprep.subr.bf16.mxu0 %v1530
    %2005 = vmatpush1.bf16.msra.mxu0 %v1529
    %2006 = vmatprep.subr.bf16.mxu0 %v1534
    %2007 = vmatpush1.bf16.msra.mxu0 %v1533
    %2008 = vmatprep.subr.bf16.mxu0 %v1538
    %2009 = vmatpush1.bf16.msra.mxu0 %v1537
    %2010 = vmatprep.subr.bf16.mxu0 %v1542
    %2011 = vmatpush1.bf16.msra.mxu0 %v1541
    %2012 = vmatprep.subr.bf16.mxu0 %v1546
    %2013 = vmatpush1.bf16.msra.mxu0 %v1545
    %2014 = vmatprep.subr.bf16.mxu0 %v1550
    %2015 = vmatpush1.bf16.msra.mxu0 %v1549
    %2016 = vmatprep.subr.bf16.mxu0 %v1554
    %2017 = vmatpush1.bf16.msra.mxu0 %v1553
    %2018 = vmatprep.subr.bf16.mxu0 %v1558
    %2019 = vmatpush1.bf16.msra.mxu0 %v1557
    %2020 = vmatprep.subr.bf16.mxu0 %v1562
    %2021 = vmatpush1.bf16.msra.mxu0 %v1561
    %2022 = vmatprep.mubr.bf16.mxu0 %v386
    %2023 = vmatmul.mubr.bf16.gmra.mrb[0].mxu0 %v385
    %v2024 = vpop.f32.mrb[0].mxu0
    %v2025 = vadd.f32 %v1984, %v2024
    %v2026 = vpop.f32.mrb[0].mxu0
    %v2027 = vadd.f32 %v1986, %v2026
    %v2028 = vpop.f32.mrb[0].mxu0
    %v2029 = vpop.f32.mrb[0].mxu0
    %2030 = vdwg.mxu0
    %2031 = vmatprep.subr.bf16.mxu0 %v1566
    %2032 = vmatpush1.bf16.msra.mxu0 %v1565
    %2033 = vmatprep.subr.bf16.mxu0 %v1570
    %2034 = vmatpush1.bf16.msra.mxu0 %v1569
    %2035 = vmatprep.subr.bf16.mxu0 %v1574
    %2036 = vmatpush1.bf16.msra.mxu0 %v1573
    %2037 = vmatprep.subr.bf16.mxu0 %v1578
    %2038 = vmatpush1.bf16.msra.mxu0 %v1577
    %2039 = vmatprep.subr.bf16.mxu0 %v1582
    %2040 = vmatpush1.bf16.msra.mxu0 %v1581
    %2041 = vmatprep.subr.bf16.mxu0 %v1586
    %2042 = vmatpush1.bf16.msra.mxu0 %v1585
    %2043 = vmatprep.subr.bf16.mxu0 %v1590
    %2044 = vmatpush1.bf16.msra.mxu0 %v1589
    %2045 = vmatprep.subr.bf16.mxu0 %v1594
    %2046 = vmatpush1.bf16.msra.mxu0 %v1593
    %2047 = vmatprep.subr.bf16.mxu0 %v1598
    %2048 = vmatpush1.bf16.msra.mxu0 %v1597
    %2049 = vmatprep.subr.bf16.mxu0 %v1602
    %2050 = vmatpush1.bf16.msra.mxu0 %v1601
    %2051 = vmatprep.subr.bf16.mxu0 %v1606
    %2052 = vmatpush1.bf16.msra.mxu0 %v1605
    %2053 = vmatprep.subr.bf16.mxu0 %v1610
    %2054 = vmatpush1.bf16.msra.mxu0 %v1609
    %2055 = vmatprep.subr.bf16.mxu0 %v1614
    %2056 = vmatpush1.bf16.msra.mxu0 %v1613
    %2057 = vmatprep.subr.bf16.mxu0 %v1618
    %2058 = vmatpush1.bf16.msra.mxu0 %v1617
    %2059 = vmatprep.subr.bf16.mxu0 %v1622
    %2060 = vmatpush1.bf16.msra.mxu0 %v1621
    %2061 = vmatprep.subr.bf16.mxu0 %v1626
    %2062 = vmatpush1.bf16.msra.mxu0 %v1625
    %2063 = vmatprep.mubr.bf16.mxu0 %v388
    %2064 = vmatmul.mubr.bf16.gmra.mrb[0].mxu0 %v387
    %v2065 = vpop.f32.mrb[0].mxu0
    %v2066 = vadd.f32 %v2025, %v2065
    %v2067 = vpop.f32.mrb[0].mxu0
    %v2068 = vadd.f32 %v2027, %v2067
    %v2069 = vpop.f32.mrb[0].mxu0
    %v2070 = vpop.f32.mrb[0].mxu0
    %2071 = vdwg.mxu0
    %2072 = vmatprep.subr.bf16.mxu0 %v1630
    %2073 = vmatpush1.bf16.msra.mxu0 %v1629
    %2074 = vmatprep.subr.bf16.mxu0 %v1634
    %2075 = vmatpush1.bf16.msra.mxu0 %v1633
    %2076 = vmatprep.subr.bf16.mxu0 %v1638
    %2077 = vmatpush1.bf16.msra.mxu0 %v1637
    %2078 = vmatprep.subr.bf16.mxu0 %v1642
    %2079 = vmatpush1.bf16.msra.mxu0 %v1641
    %2080 = vmatprep.subr.bf16.mxu0 %v1646
    %2081 = vmatpush1.bf16.msra.mxu0 %v1645
    %2082 = vmatprep.subr.bf16.mxu0 %v1650
    %2083 = vmatpush1.bf16.msra.mxu0 %v1649
    %2084 = vmatprep.subr.bf16.mxu0 %v1654
    %2085 = vmatpush1.bf16.msra.mxu0 %v1653
    %2086 = vmatprep.subr.bf16.mxu0 %v1658
    %2087 = vmatpush1.bf16.msra.mxu0 %v1657
    %2088 = vmatprep.subr.bf16.mxu0 %v1662
    %2089 = vmatpush1.bf16.msra.mxu0 %v1661
    %2090 = vmatprep.subr.bf16.mxu0 %v1666
    %2091 = vmatpush1.bf16.msra.mxu0 %v1665
    %2092 = vmatprep.subr.bf16.mxu0 %v1670
    %2093 = vmatpush1.bf16.msra.mxu0 %v1669
    %2094 = vmatprep.subr.bf16.mxu0 %v1674
    %2095 = vmatpush1.bf16.msra.mxu0 %v1673
    %2096 = vmatprep.subr.bf16.mxu0 %v1678
    %2097 = vmatpush1.bf16.msra.mxu0 %v1677
    %2098 = vmatprep.subr.bf16.mxu0 %v1682
    %2099 = vmatpush1.bf16.msra.mxu0 %v1681
    %2100 = vmatprep.subr.bf16.mxu0 %v1686
    %2101 = vmatpush1.bf16.msra.mxu0 %v1685
    %2102 = vmatprep.subr.bf16.mxu0 %v1690
    %2103 = vmatpush1.bf16.msra.mxu0 %v1689
    %2104 = vmatprep.mubr.bf16.mxu0 %v390
    %2105 = vmatmul.mubr.bf16.gmra.mrb[0].mxu0 %v389
    %v2106 = vpop.f32.mrb[0].mxu0
    %v2107 = vadd.f32 %v2066, %v2106
    %v2108 = vpop.f32.mrb[0].mxu0
    %v2109 = vadd.f32 %v2068, %v2108
    %v2110 = vpop.f32.mrb[0].mxu0
    %v2111 = vpop.f32.mrb[0].mxu0
    %2112 = vdwg.mxu0
    %2113 = vmatprep.subr.bf16.mxu0 %v1440
    %2114 = vmatpush1.bf16.msra.mxu0 %v1439
    %2115 = vmatprep.subr.bf16.mxu0 %v1444
    %2116 = vmatpush1.bf16.msra.mxu0 %v1443
    %2117 = vmatprep.subr.bf16.mxu0 %v1448
    %2118 = vmatpush1.bf16.msra.mxu0 %v1447
    %2119 = vmatprep.subr.bf16.mxu0 %v1452
    %2120 = vmatpush1.bf16.msra.mxu0 %v1451
    %2121 = vmatprep.subr.bf16.mxu0 %v1456
    %2122 = vmatpush1.bf16.msra.mxu0 %v1455
    %2123 = vmatprep.subr.bf16.mxu0 %v1460
    %2124 = vmatpush1.bf16.msra.mxu0 %v1459
    %2125 = vmatprep.subr.bf16.mxu0 %v1464
    %2126 = vmatpush1.bf16.msra.mxu0 %v1463
    %2127 = vmatprep.subr.bf16.mxu0 %v1468
    %2128 = vmatpush1.bf16.msra.mxu0 %v1467
    %2129 = vmatprep.subr.bf16.mxu0 %v1472
    %2130 = vmatpush1.bf16.msra.mxu0 %v1471
    %2131 = vmatprep.subr.bf16.mxu0 %v1476
    %2132 = vmatpush1.bf16.msra.mxu0 %v1475
    %2133 = vmatprep.subr.bf16.mxu0 %v1480
    %2134 = vmatpush1.bf16.msra.mxu0 %v1479
    %2135 = vmatprep.subr.bf16.mxu0 %v1484
    %2136 = vmatpush1.bf16.msra.mxu0 %v1483
    %2137 = vmatprep.subr.bf16.mxu0 %v1488
    %2138 = vmatpush1.bf16.msra.mxu0 %v1487
    %2139 = vmatprep.subr.bf16.mxu0 %v1492
    %2140 = vmatpush1.bf16.msra.mxu0 %v1491
    %2141 = vmatprep.subr.bf16.mxu0 %v1496
    %2142 = vmatpush1.bf16.msra.mxu0 %v1495
    %2143 = vmatprep.subr.bf16.mxu0 %v1500
    %2144 = vmatpush1.bf16.msra.mxu0 %v1499
    %2145 = vmatprep.mubr.bf16.mxu0 %v384
    %2146 = vmatmul.mubr.bf16.gmra.mrb[0].mxu0 %v383
    %v2147 = vpop.f32.mrb[0].mxu0
    %v2148 = vadd.f32 %v660, %v2147
    %v2149 = vpop.f32.mrb[0].mxu0
    %v2150 = vadd.f32 %v664, %v2149
    %v2151 = vpop.f32.mrb[0].mxu0
    %v2152 = vpop.f32.mrb[0].mxu0
    %2153 = vdwg.mxu0
    %2154 = vmatprep.subr.bf16.mxu0 %v1504
    %2155 = vmatpush1.bf16.msra.mxu0 %v1503
    %2156 = vmatprep.subr.bf16.mxu0 %v1508
    %2157 = vmatpush1.bf16.msra.mxu0 %v1507
    %2158 = vmatprep.subr.bf16.mxu0 %v1512
    %2159 = vmatpush1.bf16.msra.mxu0 %v1511
    %2160 = vmatprep.subr.bf16.mxu0 %v1516
    %2161 = vmatpush1.bf16.msra.mxu0 %v1515
    %2162 = vmatprep.subr.bf16.mxu0 %v1520
    %2163 = vmatpush1.bf16.msra.mxu0 %v1519
    %2164 = vmatprep.subr.bf16.mxu0 %v1524
    %2165 = vmatpush1.bf16.msra.mxu0 %v1523
    %2166 = vmatprep.subr.bf16.mxu0 %v1528
    %2167 = vmatpush1.bf16.msra.mxu0 %v1527
    %2168 = vmatprep.subr.bf16.mxu0 %v1532
    %2169 = vmatpush1.bf16.msra.mxu0 %v1531
    %2170 = vmatprep.subr.bf16.mxu0 %v1536
    %2171 = vmatpush1.bf16.msra.mxu0 %v1535
    %2172 = vmatprep.subr.bf16.mxu0 %v1540
    %2173 = vmatpush1.bf16.msra.mxu0 %v1539
    %2174 = vmatprep.subr.bf16.mxu0 %v1544
    %2175 = vmatpush1.bf16.msra.mxu0 %v1543
    %2176 = vmatprep.subr.bf16.mxu0 %v1548
    %2177 = vmatpush1.bf16.msra.mxu0 %v1547
    %2178 = vmatprep.subr.bf16.mxu0 %v1552
    %2179 = vmatpush1.bf16.msra.mxu0 %v1551
    %2180 = vmatprep.subr.bf16.mxu0 %v1556
    %2181 = vmatpush1.bf16.msra.mxu0 %v1555
    %2182 = vmatprep.subr.bf16.mxu0 %v1560
    %2183 = vmatpush1.bf16.msra.mxu0 %v1559
    %2184 = vmatprep.subr.bf16.mxu0 %v1564
    %2185 = vmatpush1.bf16.msra.mxu0 %v1563
    %2186 = vmatprep.mubr.bf16.mxu0 %v386
    %2187 = vmatmul.mubr.bf16.gmra.mrb[0].mxu0 %v385
    %v2188 = vpop.f32.mrb[0].mxu0
    %v2189 = vadd.f32 %v2148, %v2188
    %v2190 = vpop.f32.mrb[0].mxu0
    %v2191 = vadd.f32 %v2150, %v2190
    %v2192 = vpop.f32.mrb[0].mxu0
    %v2193 = vpop.f32.mrb[0].mxu0
    %2194 = vdwg.mxu0
    %2195 = vmatprep.subr.bf16.mxu0 %v1568
    %2196 = vmatpush1.bf16.msra.mxu0 %v1567
    %2197 = vmatprep.subr.bf16.mxu0 %v1572
    %2198 = vmatpush1.bf16.msra.mxu0 %v1571
    %2199 = vmatprep.subr.bf16.mxu0 %v1576
    %2200 = vmatpush1.bf16.msra.mxu0 %v1575
    %2201 = vmatprep.subr.bf16.mxu0 %v1580
    %2202 = vmatpush1.bf16.msra.mxu0 %v1579
    %2203 = vmatprep.subr.bf16.mxu0 %v1584
    %2204 = vmatpush1.bf16.msra.mxu0 %v1583
    %2205 = vmatprep.subr.bf16.mxu0 %v1588
    %2206 = vmatpush1.bf16.msra.mxu0 %v1587
    %2207 = vmatprep.subr.bf16.mxu0 %v1592
    %2208 = vmatpush1.bf16.msra.mxu0 %v1591
    %2209 = vmatprep.subr.bf16.mxu0 %v1596
    %2210 = vmatpush1.bf16.msra.mxu0 %v1595
    %2211 = vmatprep.subr.bf16.mxu0 %v1600
    %2212 = vmatpush1.bf16.msra.mxu0 %v1599
    %2213 = vmatprep.subr.bf16.mxu0 %v1604
    %2214 = vmatpush1.bf16.msra.mxu0 %v1603
    %2215 = vmatprep.subr.bf16.mxu0 %v1608
    %2216 = vmatpush1.bf16.msra.mxu0 %v1607
    %2217 = vmatprep.subr.bf16.mxu0 %v1612
    %2218 = vmatpush1.bf16.msra.mxu0 %v1611
    %2219 = vmatprep.subr.bf16.mxu0 %v1616
    %2220 = vmatpush1.bf16.msra.mxu0 %v1615
    %2221 = vmatprep.subr.bf16.mxu0 %v1620
    %2222 = vmatpush1.bf16.msra.mxu0 %v1619
    %2223 = vmatprep.subr.bf16.mxu0 %v1624
    %2224 = vmatpush1.bf16.msra.mxu0 %v1623
    %2225 = vmatprep.subr.bf16.mxu0 %v1628
    %2226 = vmatpush1.bf16.msra.mxu0 %v1627
    %2227 = vmatprep.mubr.bf16.mxu0 %v388
    %2228 = vmatmul.mubr.bf16.gmra.mrb[0].mxu0 %v387
    %v2229 = vpop.f32.mrb[0].mxu0
    %v2230 = vadd.f32 %v2189, %v2229
    %v2231 = vpop.f32.mrb[0].mxu0
    %v2232 = vadd.f32 %v2191, %v2231
    %v2233 = vpop.f32.mrb[0].mxu0
    %v2234 = vpop.f32.mrb[0].mxu0
    %2235 = vdwg.mxu0
    %2236 = vmatprep.subr.bf16.mxu0 %v1632
    %2237 = vmatpush1.bf16.msra.mxu0 %v1631
    %2238 = vmatprep.subr.bf16.mxu0 %v1636
    %2239 = vmatpush1.bf16.msra.mxu0 %v1635
    %2240 = vmatprep.subr.bf16.mxu0 %v1640
    %2241 = vmatpush1.bf16.msra.mxu0 %v1639
    %2242 = vmatprep.subr.bf16.mxu0 %v1644
    %2243 = vmatpush1.bf16.msra.mxu0 %v1643
    %2244 = vmatprep.subr.bf16.mxu0 %v1648
    %2245 = vmatpush1.bf16.msra.mxu0 %v1647
    %2246 = vmatprep.subr.bf16.mxu0 %v1652
    %2247 = vmatpush1.bf16.msra.mxu0 %v1651
    %2248 = vmatprep.subr.bf16.mxu0 %v1656
    %2249 = vmatpush1.bf16.msra.mxu0 %v1655
    %2250 = vmatprep.subr.bf16.mxu0 %v1660
    %2251 = vmatpush1.bf16.msra.mxu0 %v1659
    %2252 = vmatprep.subr.bf16.mxu0 %v1664
    %2253 = vmatpush1.bf16.msra.mxu0 %v1663
    %2254 = vmatprep.subr.bf16.mxu0 %v1668
    %2255 = vmatpush1.bf16.msra.mxu0 %v1667
    %2256 = vmatprep.subr.bf16.mxu0 %v1672
    %2257 = vmatpush1.bf16.msra.mxu0 %v1671
    %2258 = vmatprep.subr.bf16.mxu0 %v1676
    %2259 = vmatpush1.bf16.msra.mxu0 %v1675
    %2260 = vmatprep.subr.bf16.mxu0 %v1680
    %2261 = vmatpush1.bf16.msra.mxu0 %v1679
    %2262 = vmatprep.subr.bf16.mxu0 %v1684
    %2263 = vmatpush1.bf16.msra.mxu0 %v1683
    %2264 = vmatprep.subr.bf16.mxu0 %v1688
    %2265 = vmatpush1.bf16.msra.mxu0 %v1687
    %2266 = vmatprep.subr.bf16.mxu0 %v1692
    %2267 = vmatpush1.bf16.msra.mxu0 %v1691
    %2268 = vmatprep.mubr.bf16.mxu0 %v390
    %2269 = vmatmul.mubr.bf16.gmra.mrb[0].mxu0 %v389
    %v2270 = vpop.f32.mrb[0].mxu0
    %v2271 = vadd.f32 %v2230, %v2270
    %v2272 = vpop.f32.mrb[0].mxu0
    %v2273 = vadd.f32 %v2232, %v2272
    %v2274 = vpop.f32.mrb[0].mxu0
    %v2275 = vpop.f32.mrb[0].mxu0
    %2276 = vdwg.mxu0
    %v2277 = vmax.f32 %v2107, 0.0
    %v2278 = vmax.f32 %v2109, 0.0
    %v2279 = vmax.f32 %v2271, 0.0
    %v2280 = vmax.f32 %v2273, 0.0
    %v2281 = vld [vmem:[%s5] sm:$0xf]
    %v2283 = vlaneseq
    %v2284 = vshrl.u32 %v2283, 7
    %v2285 = vsub.s32 0, %v2284
    %v2286 = vrot.slane %v2281, %v2285
    %v2287 = vlaneseq
    %v2288 = vshrl.u32 %v2287, 7
    %v2289 = vsub.s32 1, %v2288
    %v2290 = vrot.slane %v2281, %v2289
    %v2291 = vlaneseq
    %v2292 = vshrl.u32 %v2291, 7
    %v2293 = vsub.s32 2, %v2292
    %v2294 = vrot.slane %v2281, %v2293
    %v2295 = vlaneseq
    %v2296 = vshrl.u32 %v2295, 7
    %v2297 = vsub.s32 3, %v2296
    %v2298 = vrot.slane %v2281, %v2297
    %v2303 = vmul.f32 %v2277, %v2286
    %v2304 = vmul.f32 %v2278, %v2290
    %v2305 = vmul.f32 %v2279, %v2294
    %v2306 = vmul.f32 %v2280, %v2298
    %v2307 = vadd.f32 %v2303, %v2304
    %v2308 = vadd.f32 %v2307, %v2305
    %v2309 = vadd.f32 %v2308, %v2306
    %2310 = vadd.xlane.f32.xlu0 %v2309
    %v2311 = vpop.xlane.xlu0 %2310
    %s2312 = sld [smem:[#allocation2]]
    %v2313 = vstv %s2312
    %v2314 = vadd.f32 %v2311, %v2313
    %v2315 = vxor.u32 %v2314, 2147483648
    %v2316 = vmul.f32 %v2315, 1.442695
    %v2317 = vpow.pop %v2316
    %v2318 = vadd.f32 %v2317, 1.0
    %v2319 = vrcp.pop %v2318
    %v2320 = vmul.f32 1.0, %v2319
    %vm2321 = vcmask 7168
    %2322 = vst.msk [vmem:[%s7] sm:$0xff] %vm2321, %v2320
    // Predicated region
    $region42: #{tpu_custom_call.1} parent=1 // pred_check
      _
    $region43: #{tpu_custom_call.1} parent=1 // pred_check_branch
      %2324 = sbr.rel (0) target = $region45
    $region44: #{tpu_custom_call.1} parent=1 // pred_region
      _
    $region45: #{tpu_custom_call.1} parent=1 // pred_fallthru
      _
    // Predicated region
    $region46: #{tpu_custom_call.1} parent=1 // pred_check
      _
    $region47: #{tpu_custom_call.1} parent=1 // pred_check_branch
      %2326 = sbr.rel (0) target = $region49
    $region48: #{tpu_custom_call.1} parent=1 // pred_region
      _
    $region49: #{tpu_custom_call.1} parent=1 // pred_fallthru
      _
    %2327 = vsyncpa [#allocation4], 1
    %2328 = vsyncpa [#allocation6], 1

// kernel: tpu_custom_call.1
$region0: #{tpu_custom_call.1}
  #allocation0 [shape = 'u32[]', space=smem, size = 0x4, offset = 0x4, fixed_abs, tag = 'smem constant byte address 0x4 - core index']
  #allocation1 [shape = 'u32[144,128]{1,0:T(1,128)}', space=vmem, size = 0x12000, scoped, tag = 'internal scratch']
  #allocation2 [shape = 'f32[1,1]{1,0:T(1,128)S(6)}', space=smem, size = 0x200, scoped, tag = 'scoped memory for tpu_custom_call.1']
  %s0 = inlined_call_operand.hbm [shape: f32[8,32], index: 0, kind: input, shape index: {}]
  %s1 = inlined_call_operand.hbm [shape: bf16[32,1024], index: 1, kind: input, shape index: {}]
  %s2 = inlined_call_operand.vmem [shape: f32[1,1024], index: 2, kind: input, shape index: {}]
  %s3 = inlined_call_operand.hbm [shape: bf16[1024,512], index: 3, kind: input, shape index: {}]
  %s4 = inlined_call_operand.vmem [shape: f32[1,512], index: 4, kind: input, shape index: {}]
  %s5 = inlined_call_operand.vmem [shape: f32[1,512], index: 5, kind: input, shape index: {}]
  %s6 = inlined_call_operand.<no memory space> [shape: f32[1,1], index: 6, kind: input, shape index: {}]
  %s7 = inlined_call_operand.vmem [shape: f32[8,1], index: 7, kind: output, shape index: {}]
  %s8 = sld [smem:[#allocation0]]
  $region50: #{tpu_custom_call.1} parent=0
    _
  %s10 = ssub.s32 1, %s8
  %s11 = scalar_select 0, %s10, %s8
  %12 = sst [smem:[#allocation2]] %s6
  $region1: #{tpu_custom_call.1} parent=0
    #allocation3 [shape = 'u8[4096]{0}', space=vmem, size = 0x1000, scoped, tag = 'input window, operand 0, single buffered']
    #allocation4 [shape = 's32[1]{0}', space=sflag, size = 0x4, scoped, tag = 'scoped memory for tpu_custom_call.1']
    #allocation5 [shape = 'u8[65536]{0}', space=vmem, size = 0x10000, scoped, tag = 'input window, operand 1, single buffered']
    #allocation6 [shape = 's32[1]{0}', space=sflag, size = 0x4, scoped, tag = 'scoped memory for tpu_custom_call.1']
    #allocation7 [shape = 'u8[1048576]{0}', space=vmem, size = 0x100000, scoped, tag = 'input window, operand 3, single buffered']
    %13 = vsyncpa [#allocation4], 0
    %14 = vsyncpa [#allocation6], 0
    // Predicated region
    $region2: #{tpu_custom_call.1} parent=1 // pred_check
      _
    $region3: #{tpu_custom_call.1} parent=1 // pred_check_branch
      %16 = sbr.rel (0) target = $region5
    $region4: #{tpu_custom_call.1} parent=1 // pred_region
      %s18 = ssub.s32 128, 128
      %19 = vsyncadd [#allocation4], %s18
      %s21 = sshll.u32 [#allocation3], 4
      %s22 = int_to_ptr.vmem [resolvable:$true] %s21
      %24 = dma.hbm_to_vmem [thread:$0]  %s0, 128, %s22, [#allocation4]
    $region5: #{tpu_custom_call.1} parent=1 // pred_fallthru
      _
    // Predicated region
    $region6: #{tpu_custom_call.1} parent=1 // pred_check
      _
    $region7: #{tpu_custom_call.1} parent=1 // pred_check_branch
      %26 = sbr.rel (0) target = $region9
    $region8: #{tpu_custom_call.1} parent=1 // pred_region
      %s28 = ssub.s32 2048, 2048
      %29 = vsyncadd [#allocation6], %s28
      %s30 = sshll.u32 [#allocation5], 4
      %s31 = int_to_ptr.vmem [resolvable:$true] %s30
      %36 = dma.hbm_to_vmem [thread:$0]  %s1, 2048, %s31, [#allocation6], 512, 512, 32
    $region9: #{tpu_custom_call.1} parent=1 // pred_fallthru
      _
    // Predicated region
    $region10: #{tpu_custom_call.1} parent=1 // pred_check
      _
    $region11: #{tpu_custom_call.1} parent=1 // pred_check_branch
      %38 = sbr.rel (0) target = $region13
    $region12: #{tpu_custom_call.1} parent=1 // pred_region
      _
    $region13: #{tpu_custom_call.1} parent=1 // pred_fallthru
      _
    // Predicated region
    $region14: #{tpu_custom_call.1} parent=1 // pred_check
      _
    $region15: #{tpu_custom_call.1} parent=1 // pred_check_branch
      %40 = sbr.rel (0) target = $region17
    $region16: #{tpu_custom_call.1} parent=1 // pred_region
      %s42 = ssub.s32 32768, 32768
      %43 = vsyncadd [#allocation6], %s42
      %s44 = sshll.u32 [#allocation7], 4
      %s45 = int_to_ptr.vmem [resolvable:$true] %s44
      %50 = dma.hbm_to_vmem [thread:$0]  %s3, 32768, %s45, [#allocation6], 256, 256, 16
    $region17: #{tpu_custom_call.1} parent=1 // pred_fallthru
      _
    // Predicated region
    $region18: #{tpu_custom_call.1} parent=1 // pred_check
      _
    $region19: #{tpu_custom_call.1} parent=1 // pred_check_branch
      %52 = sbr.rel (0) target = $region21
    $region20: #{tpu_custom_call.1} parent=1 // pred_region
      _
    $region21: #{tpu_custom_call.1} parent=1 // pred_fallthru
      _
    // Predicated region
    $region22: #{tpu_custom_call.1} parent=1 // pred_check
      _
    $region23: #{tpu_custom_call.1} parent=1 // pred_check_branch
      %54 = sbr.rel (0) target = $region25
    $region24: #{tpu_custom_call.1} parent=1 // pred_region
      _
    $region25: #{tpu_custom_call.1} parent=1 // pred_fallthru
      _
    // Predicated region
    $region26: #{tpu_custom_call.1} parent=1 // pred_check
      _
    $region27: #{tpu_custom_call.1} parent=1 // pred_check_branch
      %56 = sbr.rel (0) target = $region29
    $region28: #{tpu_custom_call.1} parent=1 // pred_region
      _
    $region29: #{tpu_custom_call.1} parent=1 // pred_fallthru
      _
    // Predicated region
    $region30: #{tpu_custom_call.1} parent=1 // pred_check
      _
    $region31: #{tpu_custom_call.1} parent=1 // pred_check_branch
      %58 = sbr.rel (0) target = $region33
    $region32: #{tpu_custom_call.1} parent=1 // pred_region
      %59 = dma.done [#allocation4], 128
    $region33: #{tpu_custom_call.1} parent=1 // pred_fallthru
      _
    // Predicated region
    $region34: #{tpu_custom_call.1} parent=1 // pred_check
      _
    $region35: #{tpu_custom_call.1} parent=1 // pred_check_branch
      %61 = sbr.rel (0) target = $region37
    $region36: #{tpu_custom_call.1} parent=1 // pred_region
      %62 = dma.done [#allocation6], 2048
    $region37: #{tpu_custom_call.1} parent=1 // pred_fallthru
      _
    // Predicated region
    $region38: #{tpu_custom_call.1} parent=1 // pred_check
      _
    $region39: #{tpu_custom_call.1} parent=1 // pred_check_branch
      %64 = sbr.rel (0) target = $region41
    $region40: #{tpu_custom_call.1} parent=1 // pred_region
      %65 = dma.done [#allocation6], 32768
    $region41: #{tpu_custom_call.1} parent=1 // pred_fallthru
      _
    %v67 = vld [vmem:[#allocation3] sm:$0xff]
    %v68 = vpack.c.bf16 %v67, %v67
    %v69 = vld [vmem:[#allocation5] sm:$0xff]
    %v70 = vld [vmem:[#allocation5 + $0x8] sm:$0xff]
    %v71 = vld [vmem:[#allocation5 + $0x10] sm:$0xff]
    %v72 = vld [vmem:[#allocation5 + $0x18] sm:$0xff]
    %v73 = vld [vmem:[#allocation5 + $0x20] sm:$0xff]
    %v74 = vld [vmem:[#allocation5 + $0x28] sm:$0xff]
    %v75 = vld [vmem:[#allocation5 + $0x30] sm:$0xff]
    %v76 = vld [vmem:[#allocation5 + $0x38] sm:$0xff]
    %v77 = vld [vmem:[#allocation5 + $0x40] sm:$0xff]
    %v78 = vld [vmem:[#allocation5 + $0x48] sm:$0xff]
    %v79 = vld [vmem:[#allocation5 + $0x50] sm:$0xff]
    %v80 = vld [vmem:[#allocation5 + $0x58] sm:$0xff]
    %v81 = vld [vmem:[#allocation5 + $0x60] sm:$0xff]
    %v82 = vld [vmem:[#allocation5 + $0x68] sm:$0xff]
    %v83 = vld [vmem:[#allocation5 + $0x70] sm:$0xff]
    %v84 = vld [vmem:[#allocation5 + $0x78] sm:$0xff]
    %v85 = vld [vmem:[%s2] sm:$0xff]
    %v87 = vlaneseq
    %v88 = vshrl.u32 %v87, 7
    %v89 = vsub.s32 0, %v88
    %v90 = vrot.slane %v85, %v89
    %v91 = vlaneseq
    %v92 = vshrl.u32 %v91, 7
    %v93 = vsub.s32 1, %v92
    %v94 = vrot.slane %v85, %v93
    %v95 = vlaneseq
    %v96 = vshrl.u32 %v95, 7
    %v97 = vsub.s32 2, %v96
    %v98 = vrot.slane %v85, %v97
    %v99 = vlaneseq
    %v100 = vshrl.u32 %v99, 7
    %v101 = vsub.s32 3, %v100
    %v102 = vrot.slane %v85, %v101
    %v103 = vlaneseq
    %v104 = vshrl.u32 %v103, 7
    %v105 = vsub.s32 4, %v104
    %v106 = vrot.slane %v85, %v105
    %v107 = vlaneseq
    %v108 = vshrl.u32 %v107, 7
    %v109 = vsub.s32 5, %v108
    %v110 = vrot.slane %v85, %v109
    %v111 = vlaneseq
    %v112 = vshrl.u32 %v111, 7
    %v113 = vsub.s32 6, %v112
    %v114 = vrot.slane %v85, %v113
    %v115 = vlaneseq
    %v116 = vshrl.u32 %v115, 7
    %v117 = vsub.s32 7, %v116
    %v118 = vrot.slane %v85, %v117
    %v143 = vunpack.c.l.b16 %v69
    %v144 = vunpack.c.h.b16 %v69
    %v145 = vunpack.c.l.b16 %v70
    %v146 = vunpack.c.h.b16 %v70
    %v147 = vunpack.c.l.b16 %v71
    %v148 = vunpack.c.h.b16 %v71
    %v149 = vunpack.c.l.b16 %v72
    %v150 = vunpack.c.h.b16 %v72
    %v151 = vunpack.c.l.b16 %v73
    %v152 = vunpack.c.h.b16 %v73
    %v153 = vunpack.c.l.b16 %v74
    %v154 = vunpack.c.h.b16 %v74
    %v155 = vunpack.c.l.b16 %v75
    %v156 = vunpack.c.h.b16 %v75
    %v157 = vunpack.c.l.b16 %v76
    %v158 = vunpack.c.h.b16 %v76
    %v159 = vunpack.c.l.b16 %v77
    %v160 = vunpack.c.h.b16 %v77
    %v161 = vunpack.c.l.b16 %v78
    %v162 = vunpack.c.h.b16 %v78
    %v163 = vunpack.c.l.b16 %v79
    %v164 = vunpack.c.h.b16 %v79
    %v165 = vunpack.c.l.b16 %v80
    %v166 = vunpack.c.h.b16 %v80
    %v167 = vunpack.c.l.b16 %v81
    %v168 = vunpack.c.h.b16 %v81
    %v169 = vunpack.c.l.b16 %v82
    %v170 = vunpack.c.h.b16 %v82
    %v171 = vunpack.c.l.b16 %v83
    %v172 = vunpack.c.h.b16 %v83
    %v173 = vunpack.c.l.b16 %v84
    %v174 = vunpack.c.h.b16 %v84
    %v175 = vpack.c.b16 %v151, %v143
    %v176 = vpack.c.b16 %v152, %v144
    %v177 = vpack.c.b16 %v153, %v145
    %v178 = vpack.c.b16 %v154, %v146
    %v179 = vpack.c.b16 %v155, %v147
    %v180 = vpack.c.b16 %v156, %v148
    %v181 = vpack.c.b16 %v157, %v149
    %v182 = vpack.c.b16 %v158, %v150
    %v183 = vpack.c.b16 %v167, %v159
    %v184 = vpack.c.b16 %v168, %v160
    %v185 = vpack.c.b16 %v169, %v161
    %v186 = vpack.c.b16 %v170, %v162
    %v187 = vpack.c.b16 %v171, %v163
    %v188 = vpack.c.b16 %v172, %v164
    %v189 = vpack.c.b16 %v173, %v165
    %v190 = vpack.c.b16 %v174, %v166
    %vm207 = vcmask 261120
    %v209 = vsel %vm207, %v68, 0
    %211 = vmatprep.subr.bf16.mxu0 %v176
    %212 = vmatpush1.bf16.msra.mxu0 %v175
    %213 = vmatprep.subr.bf16.mxu0 %v184
    %214 = vmatpush1.bf16.msra.mxu0 %v183
    %215 = vmatprep.subr.bf16.mxu0 0
    %216 = vmatpush1.bf16.msra.mxu0 0
    %217 = vmatprep.subr.bf16.mxu0 0
    %218 = vmatpush1.bf16.msra.mxu0 0
    %219 = vmatprep.subr.bf16.mxu0 0
    %220 = vmatpush1.bf16.msra.mxu0 0
    %221 = vmatprep.subr.bf16.mxu0 0
    %222 = vmatpush1.bf16.msra.mxu0 0
    %223 = vmatprep.subr.bf16.mxu0 0
    %224 = vmatpush1.bf16.msra.mxu0 0
    %225 = vmatprep.subr.bf16.mxu0 0
    %226 = vmatpush1.bf16.msra.mxu0 0
    %227 = vmatprep.subr.bf16.mxu0 0
    %228 = vmatpush1.bf16.msra.mxu0 0
    %229 = vmatprep.subr.bf16.mxu0 0
    %230 = vmatpush1.bf16.msra.mxu0 0
    %231 = vmatprep.subr.bf16.mxu0 0
    %232 = vmatpush1.bf16.msra.mxu0 0
    %233 = vmatprep.subr.bf16.mxu0 0
    %234 = vmatpush1.bf16.msra.mxu0 0
    %235 = vmatprep.subr.bf16.mxu0 0
    %236 = vmatpush1.bf16.msra.mxu0 0
    %237 = vmatprep.subr.bf16.mxu0 0
    %238 = vmatpush1.bf16.msra.mxu0 0
    %239 = vmatprep.subr.bf16.mxu0 0
    %240 = vmatpush1.bf16.msra.mxu0 0
    %241 = vmatprep.subr.bf16.mxu0 0
    %242 = vmatpush1.bf16.msra.mxu0 0
    %243 = vmatprep.mubr.bf16.mxu0 0
    %244 = vmatmul.mubr.bf16.gmra.mrb[0].mxu0 %v209
    %v245 = vpop.f32.mrb[0].mxu0
    %v246 = vadd.f32 %v90, %v245
    %v247 = vpop.f32.mrb[0].mxu0
    %v248 = vadd.f32 %v94, %v247
    %v249 = vpop.f32.mrb[0].mxu0
    %v250 = vpop.f32.mrb[0].mxu0
    %251 = vdwg.mxu0
    %252 = vmatprep.subr.bf16.mxu0 %v178
    %253 = vmatpush1.bf16.msra.mxu0 %v177
    %254 = vmatprep.subr.bf16.mxu0 %v186
    %255 = vmatpush1.bf16.msra.mxu0 %v185
    %256 = vmatprep.subr.bf16.mxu0 0
    %257 = vmatpush1.bf16.msra.mxu0 0
    %258 = vmatprep.subr.bf16.mxu0 0
    %259 = vmatpush1.bf16.msra.mxu0 0
    %260 = vmatprep.subr.bf16.mxu0 0
    %261 = vmatpush1.bf16.msra.mxu0 0
    %262 = vmatprep.subr.bf16.mxu0 0
    %263 = vmatpush1.bf16.msra.mxu0 0
    %264 = vmatprep.subr.bf16.mxu0 0
    %265 = vmatpush1.bf16.msra.mxu0 0
    %266 = vmatprep.subr.bf16.mxu0 0
    %267 = vmatpush1.bf16.msra.mxu0 0
    %268 = vmatprep.subr.bf16.mxu0 0
    %269 = vmatpush1.bf16.msra.mxu0 0
    %270 = vmatprep.subr.bf16.mxu0 0
    %271 = vmatpush1.bf16.msra.mxu0 0
    %272 = vmatprep.subr.bf16.mxu0 0
    %273 = vmatpush1.bf16.msra.mxu0 0
    %274 = vmatprep.subr.bf16.mxu0 0
    %275 = vmatpush1.bf16.msra.mxu0 0
    %276 = vmatprep.subr.bf16.mxu0 0
    %277 = vmatpush1.bf16.msra.mxu0 0
    %278 = vmatprep.subr.bf16.mxu0 0
    %279 = vmatpush1.bf16.msra.mxu0 0
    %280 = vmatprep.subr.bf16.mxu0 0
    %281 = vmatpush1.bf16.msra.mxu0 0
    %282 = vmatprep.subr.bf16.mxu0 0
    %283 = vmatpush1.bf16.msra.mxu0 0
    %284 = vmatprep.mubr.bf16.mxu0 0
    %285 = vmatmul.mubr.bf16.gmra.mrb[0].mxu0 %v209
    %v286 = vpop.f32.mrb[0].mxu0
    %v287 = vadd.f32 %v98, %v286
    %v288 = vpop.f32.mrb[0].mxu0
    %v289 = vadd.f32 %v102, %v288
    %v290 = vpop.f32.mrb[0].mxu0
    %v291 = vpop.f32.mrb[0].mxu0
    %292 = vdwg.mxu0
    %293 = vmatprep.subr.bf16.mxu0 %v180
    %294 = vmatpush1.bf16.msra.mxu0 %v179
    %295 = vmatprep.subr.bf16.mxu0 %v188
    %296 = vmatpush1.bf16.msra.mxu0 %v187
    %297 = vmatprep.subr.bf16.mxu0 0
    %298 = vmatpush1.bf16.msra.mxu0 0
    %299 = vmatprep.subr.bf16.mxu0 0
    %300 = vmatpush1.bf16.msra.mxu0 0
    %301 = vmatprep.subr.bf16.mxu0 0
    %302 = vmatpush1.bf16.msra.mxu0 0
    %303 = vmatprep.subr.bf16.mxu0 0
    %304 = vmatpush1.bf16.msra.mxu0 0
    %305 = vmatprep.subr.bf16.mxu0 0
    %306 = vmatpush1.bf16.msra.mxu0 0
    %307 = vmatprep.subr.bf16.mxu0 0
    %308 = vmatpush1.bf16.msra.mxu0 0
    %309 = vmatprep.subr.bf16.mxu0 0
    %310 = vmatpush1.bf16.msra.mxu0 0
    %311 = vmatprep.subr.bf16.mxu0 0
    %312 = vmatpush1.bf16.msra.mxu0 0
    %313 = vmatprep.subr.bf16.mxu0 0
    %314 = vmatpush1.bf16.msra.mxu0 0
    %315 = vmatprep.subr.bf16.mxu0 0
    %316 = vmatpush1.bf16.msra.mxu0 0
    %317 = vmatprep.subr.bf16.mxu0 0
    %318 = vmatpush1.bf16.msra.mxu0 0
    %319 = vmatprep.subr.bf16.mxu0 0
    %320 = vmatpush1.bf16.msra.mxu0 0
    %321 = vmatprep.subr.bf16.mxu0 0
    %322 = vmatpush1.bf16.msra.mxu0 0
    %323 = vmatprep.subr.bf16.mxu0 0
    %324 = vmatpush1.bf16.msra.mxu0 0
    %325 = vmatprep.mubr.bf16.mxu0 0
    %326 = vmatmul.mubr.bf16.gmra.mrb[0].mxu0 %v209
    %v327 = vpop.f32.mrb[0].mxu0
    %v328 = vadd.f32 %v106, %v327
    %v329 = vpop.f32.mrb[0].mxu0
    %v330 = vadd.f32 %v110, %v329
    %v331 = vpop.f32.mrb[0].mxu0
    %v332 = vpop.f32.mrb[0].mxu0
    %333 = vdwg.mxu0
    %334 = vmatprep.subr.bf16.mxu0 %v182
    %335 = vmatpush1.bf16.msra.mxu0 %v181
    %336 = vmatprep.subr.bf16.mxu0 %v190
    %337 = vmatpush1.bf16.msra.mxu0 %v189
    %338 = vmatprep.subr.bf16.mxu0 0
    %339 = vmatpush1.bf16.msra.mxu0 0
    %340 = vmatprep.subr.bf16.mxu0 0
    %341 = vmatpush1.bf16.msra.mxu0 0
    %342 = vmatprep.subr.bf16.mxu0 0
    %343 = vmatpush1.bf16.msra.mxu0 0
    %344 = vmatprep.subr.bf16.mxu0 0
    %345 = vmatpush1.bf16.msra.mxu0 0
    %346 = vmatprep.subr.bf16.mxu0 0
    %347 = vmatpush1.bf16.msra.mxu0 0
    %348 = vmatprep.subr.bf16.mxu0 0
    %349 = vmatpush1.bf16.msra.mxu0 0
    %350 = vmatprep.subr.bf16.mxu0 0
    %351 = vmatpush1.bf16.msra.mxu0 0
    %352 = vmatprep.subr.bf16.mxu0 0
    %353 = vmatpush1.bf16.msra.mxu0 0
    %354 = vmatprep.subr.bf16.mxu0 0
    %355 = vmatpush1.bf16.msra.mxu0 0
    %356 = vmatprep.subr.bf16.mxu0 0
    %357 = vmatpush1.bf16.msra.mxu0 0
    %358 = vmatprep.subr.bf16.mxu0 0
    %359 = vmatpush1.bf16.msra.mxu0 0
    %360 = vmatprep.subr.bf16.mxu0 0
    %361 = vmatpush1.bf16.msra.mxu0 0
    %362 = vmatprep.subr.bf16.mxu0 0
    %363 = vmatpush1.bf16.msra.mxu0 0
    %364 = vmatprep.subr.bf16.mxu0 0
    %365 = vmatpush1.bf16.msra.mxu0 0
    %366 = vmatprep.mubr.bf16.mxu0 0
    %367 = vmatmul.mubr.bf16.gmra.mrb[0].mxu0 %v209
    %v368 = vpop.f32.mrb[0].mxu0
    %v369 = vadd.f32 %v114, %v368
    %v370 = vpop.f32.mrb[0].mxu0
    %v371 = vadd.f32 %v118, %v370
    %v372 = vpop.f32.mrb[0].mxu0
    %v373 = vpop.f32.mrb[0].mxu0
    %374 = vdwg.mxu0
    %v375 = vmax.f32 %v246, 0.0
    %v376 = vmax.f32 %v248, 0.0
    %v377 = vmax.f32 %v287, 0.0
    %v378 = vmax.f32 %v289, 0.0
    %v379 = vmax.f32 %v328, 0.0
    %v380 = vmax.f32 %v330, 0.0
    %v381 = vmax.f32 %v369, 0.0
    %v382 = vmax.f32 %v371, 0.0
    %v383 = vpack.c.bf16 %v375, %v375
    %v384 = vpack.c.bf16 %v376, %v376
    %v385 = vpack.c.bf16 %v377, %v377
    %v386 = vpack.c.bf16 %v378, %v378
    %v387 = vpack.c.bf16 %v379, %v379
    %v388 = vpack.c.bf16 %v380, %v380
    %v389 = vpack.c.bf16 %v381, %v381
    %v390 = vpack.c.bf16 %v382, %v382
    %v391 = vld [vmem:[#allocation7] sm:$0xff]
    %v392 = vld [vmem:[#allocation7 + $0x8] sm:$0xff]
    %v393 = vld [vmem:[#allocation7 + $0x10] sm:$0xff]
    %v394 = vld [vmem:[#allocation7 + $0x18] sm:$0xff]
    %v395 = vld [vmem:[#allocation7 + $0x20] sm:$0xff]
    %v396 = vld [vmem:[#allocation7 + $0x28] sm:$0xff]
    %v397 = vld [vmem:[#allocation7 + $0x30] sm:$0xff]
    %v398 = vld [vmem:[#allocation7 + $0x38] sm:$0xff]
    %v399 = vld [vmem:[#allocation7 + $0x40] sm:$0xff]
    %v400 = vld [vmem:[#allocation7 + $0x48] sm:$0xff]
    %v401 = vld [vmem:[#allocation7 + $0x50] sm:$0xff]
    %v402 = vld [vmem:[#allocation7 + $0x58] sm:$0xff]
    %v403 = vld [vmem:[#allocation7 + $0x60] sm:$0xff]
    %v404 = vld [vmem:[#allocation7 + $0x68] sm:$0xff]
    %v405 = vld [vmem:[#allocation7 + $0x70] sm:$0xff]
    %v406 = vld [vmem:[#allocation7 + $0x78] sm:$0xff]
    %v407 = vld [vmem:[#allocation7 + $0x80] sm:$0xff]
    %v408 = vld [vmem:[#allocation7 + $0x88] sm:$0xff]
    %v409 = vld [vmem:[#allocation7 + $0x90] sm:$0xff]
    %v410 = vld [vmem:[#allocation7 + $0x98] sm:$0xff]
    %v411 = vld [vmem:[#allocation7 + $0xa0] sm:$0xff]
    %v412 = vld [vmem:[#allocation7 + $0xa8] sm:$0xff]
    %v413 = vld [vmem:[#allocation7 + $0xb0] sm:$0xff]
    %v414 = vld [vmem:[#allocation7 + $0xb8] sm:$0xff]
    %v415 = vld [vmem:[#allocation7 + $0xc0] sm:$0xff]
    %v416 = vld [vmem:[#allocation7 + $0xc8] sm:$0xff]
    %v417 = vld [vmem:[#allocation7 + $0xd0] sm:$0xff]
    %v418 = vld [vmem:[#allocation7 + $0xd8] sm:$0xff]
    %v419 = vld [vmem:[#allocation7 + $0xe0] sm:$0xff]
    %v420 = vld [vmem:[#allocation7 + $0xe8] sm:$0xff]
    %v421 = vld [vmem:[#allocation7 + $0xf0] sm:$0xff]
    %v422 = vld [vmem:[#allocation7 + $0xf8] sm:$0xff]
    %v423 = vld [vmem:[#allocation7 + $0x100] sm:$0xff]
    %v424 = vld [vmem:[#allocation7 + $0x108] sm:$0xff]
    %v425 = vld [vmem:[#allocation7 + $0x110] sm:$0xff]
    %v426 = vld [vmem:[#allocation7 + $0x118] sm:$0xff]
    %v427 = vld [vmem:[#allocation7 + $0x120] sm:$0xff]
    %v428 = vld [vmem:[#allocation7 + $0x128] sm:$0xff]
    %v429 = vld [vmem:[#allocation7 + $0x130] sm:$0xff]
    %v430 = vld [vmem:[#allocation7 + $0x138] sm:$0xff]
    %v431 = vld [vmem:[#allocation7 + $0x140] sm:$0xff]
    %v432 = vld [vmem:[#allocation7 + $0x148] sm:$0xff]
    %v433 = vld [vmem:[#allocation7 + $0x150] sm:$0xff]
    %v434 = vld [vmem:[#allocation7 + $0x158] sm:$0xff]
    %v435 = vld [vmem:[#allocation7 + $0x160] sm:$0xff]
    %v436 = vld [vmem:[#allocation7 + $0x168] sm:$0xff]
    %v437 = vld [vmem:[#allocation7 + $0x170] sm:$0xff]
    %v438 = vld [vmem:[#allocation7 + $0x178] sm:$0xff]
    %v439 = vld [vmem:[#allocation7 + $0x180] sm:$0xff]
    %v440 = vld [vmem:[#allocation7 + $0x188] sm:$0xff]
    %v441 = vld [vmem:[#allocation7 + $0x190] sm:$0xff]
    %v442 = vld [vmem:[#allocation7 + $0x198] sm:$0xff]
    %v443 = vld [vmem:[#allocation7 + $0x1a0] sm:$0xff]
    %v444 = vld [vmem:[#allocation7 + $0x1a8] sm:$0xff]
    %v445 = vld [vmem:[#allocation7 + $0x1b0] sm:$0xff]
    %v446 = vld [vmem:[#allocation7 + $0x1b8] sm:$0xff]
    %v447 = vld [vmem:[#allocation7 + $0x1c0] sm:$0xff]
    %v448 = vld [vmem:[#allocation7 + $0x1c8] sm:$0xff]
    %v449 = vld [vmem:[#allocation7 + $0x1d0] sm:$0xff]
    %v450 = vld [vmem:[#allocation7 + $0x1d8] sm:$0xff]
    %v451 = vld [vmem:[#allocation7 + $0x1e0] sm:$0xff]
    %v452 = vld [vmem:[#allocation7 + $0x1e8] sm:$0xff]
    %v453 = vld [vmem:[#allocation7 + $0x1f0] sm:$0xff]
    %v454 = vld [vmem:[#allocation7 + $0x1f8] sm:$0xff]
    %v455 = vld [vmem:[#allocation7 + $0x200] sm:$0xff]
    %v456 = vld [vmem:[#allocation7 + $0x208] sm:$0xff]
    %v457 = vld [vmem:[#allocation7 + $0x210] sm:$0xff]
    %v458 = vld [vmem:[#allocation7 + $0x218] sm:$0xff]
    %v459 = vld [vmem:[#allocation7 + $0x220] sm:$0xff]
    %v460 = vld [vmem:[#allocation7 + $0x228] sm:$0xff]
    %v461 = vld [vmem:[#allocation7 + $0x230] sm:$0xff]
    %v462 = vld [vmem:[#allocation7 + $0x238] sm:$0xff]
    %v463 = vld [vmem:[#allocation7 + $0x240] sm:$0xff]
    %v464 = vld [vmem:[#allocation7 + $0x248] sm:$0xff]
    %v465 = vld [vmem:[#allocation7 + $0x250] sm:$0xff]
    %v466 = vld [vmem:[#allocation7 + $0x258] sm:$0xff]
    %v467 = vld [vmem:[#allocation7 + $0x260] sm:$0xff]
    %v468 = vld [vmem:[#allocation7 + $0x268] sm:$0xff]
    %v469 = vld [vmem:[#allocation7 + $0x270] sm:$0xff]
    %v470 = vld [vmem:[#allocation7 + $0x278] sm:$0xff]
    %v471 = vld [vmem:[#allocation7 + $0x280] sm:$0xff]
    %v472 = vld [vmem:[#allocation7 + $0x288] sm:$0xff]
    %v473 = vld [vmem:[#allocation7 + $0x290] sm:$0xff]
    %v474 = vld [vmem:[#allocation7 + $0x298] sm:$0xff]
    %v475 = vld [vmem:[#allocation7 + $0x2a0] sm:$0xff]
    %v476 = vld [vmem:[#allocation7 + $0x2a8] sm:$0xff]
    %v477 = vld [vmem:[#allocation7 + $0x2b0] sm:$0xff]
    %v478 = vld [vmem:[#allocation7 + $0x2b8] sm:$0xff]
    %v479 = vld [vmem:[#allocation7 + $0x2c0] sm:$0xff]
    %v480 = vld [vmem:[#allocation7 + $0x2c8] sm:$0xff]
    %v481 = vld [vmem:[#allocation7 + $0x2d0] sm:$0xff]
    %v482 = vld [vmem:[#allocation7 + $0x2d8] sm:$0xff]
    %v483 = vld [vmem:[#allocation7 + $0x2e0] sm:$0xff]
    %v484 = vld [vmem:[#allocation7 + $0x2e8] sm:$0xff]
    %v485 = vld [vmem:[#allocation7 + $0x2f0] sm:$0xff]
    %v486 = vld [vmem:[#allocation7 + $0x2f8] sm:$0xff]
    %v487 = vld [vmem:[#allocation7 + $0x300] sm:$0xff]
    %v488 = vld [vmem:[#allocation7 + $0x308] sm:$0xff]
    %v489 = vld [vmem:[#allocation7 + $0x310] sm:$0xff]
    %v490 = vld [vmem:[#allocation7 + $0x318] sm:$0xff]
    %v491 = vld [vmem:[#allocation7 + $0x320] sm:$0xff]
    %v492 = vld [vmem:[#allocation7 + $0x328] sm:$0xff]
    %v493 = vld [vmem:[#allocation7 + $0x330] sm:$0xff]
    %v494 = vld [vmem:[#allocation7 + $0x338] sm:$0xff]
    %v495 = vld [vmem:[#allocation7 + $0x340] sm:$0xff]
    %v496 = vld [vmem:[#allocation7 + $0x348] sm:$0xff]
    %v497 = vld [vmem:[#allocation7 + $0x350] sm:$0xff]
    %v498 = vld [vmem:[#allocation7 + $0x358] sm:$0xff]
    %v499 = vld [vmem:[#allocation7 + $0x360] sm:$0xff]
    %v500 = vld [vmem:[#allocation7 + $0x368] sm:$0xff]
    %v501 = vld [vmem:[#allocation7 + $0x370] sm:$0xff]
    %v502 = vld [vmem:[#allocation7 + $0x378] sm:$0xff]
    %v503 = vld [vmem:[#allocation7 + $0x380] sm:$0xff]
    %v504 = vld [vmem:[#allocation7 + $0x388] sm:$0xff]
    %v505 = vld [vmem:[#allocation7 + $0x390] sm:$0xff]
    %v506 = vld [vmem:[#allocation7 + $0x398] sm:$0xff]
    %v507 = vld [vmem:[#allocation7 + $0x3a0] sm:$0xff]
    %v508 = vld [vmem:[#allocation7 + $0x3a8] sm:$0xff]
    %v509 = vld [vmem:[#allocation7 + $0x3b0] sm:$0xff]
    %v510 = vld [vmem:[#allocation7 + $0x3b8] sm:$0xff]
    %v511 = vld [vmem:[#allocation7 + $0x3c0] sm:$0xff]
    %v512 = vld [vmem:[#allocation7 + $0x3c8] sm:$0xff]
    %v513 = vld [vmem:[#allocation7 + $0x3d0] sm:$0xff]
    %v514 = vld [vmem:[#allocation7 + $0x3d8] sm:$0xff]
    %v515 = vld [vmem:[#allocation7 + $0x3e0] sm:$0xff]
    %v516 = vld [vmem:[#allocation7 + $0x3e8] sm:$0xff]
    %v517 = vld [vmem:[#allocation7 + $0x3f0] sm:$0xff]
    %v518 = vld [vmem:[#allocation7 + $0x3f8] sm:$0xff]
    %v519 = vld [vmem:[#allocation7 + $0x400] sm:$0xff]
    %v520 = vld [vmem:[#allocation7 + $0x408] sm:$0xff]
    %v521 = vld [vmem:[#allocation7 + $0x410] sm:$0xff]
    %v522 = vld [vmem:[#allocation7 + $0x418] sm:$0xff]
    %v523 = vld [vmem:[#allocation7 + $0x420] sm:$0xff]
    %v524 = vld [vmem:[#allocation7 + $0x428] sm:$0xff]
    %v525 = vld [vmem:[#allocation7 + $0x430] sm:$0xff]
    %v526 = vld [vmem:[#allocation7 + $0x438] sm:$0xff]
    %v527 = vld [vmem:[#allocation7 + $0x440] sm:$0xff]
    %v528 = vld [vmem:[#allocation7 + $0x448] sm:$0xff]
    %v529 = vld [vmem:[#allocation7 + $0x450] sm:$0xff]
    %v530 = vld [vmem:[#allocation7 + $0x458] sm:$0xff]
    %v531 = vld [vmem:[#allocation7 + $0x460] sm:$0xff]
    %v532 = vld [vmem:[#allocation7 + $0x468] sm:$0xff]
    %v533 = vld [vmem:[#allocation7 + $0x470] sm:$0xff]
    %v534 = vld [vmem:[#allocation7 + $0x478] sm:$0xff]
    %v535 = vld [vmem:[#allocation7 + $0x480] sm:$0xff]
    %v536 = vld [vmem:[#allocation7 + $0x488] sm:$0xff]
    %v537 = vld [vmem:[#allocation7 + $0x490] sm:$0xff]
    %v538 = vld [vmem:[#allocation7 + $0x498] sm:$0xff]
    %v539 = vld [vmem:[#allocation7 + $0x4a0] sm:$0xff]
    %v540 = vld [vmem:[#allocation7 + $0x4a8] sm:$0xff]
    %v541 = vld [vmem:[#allocation7 + $0x4b0] sm:$0xff]
    %v542 = vld [vmem:[#allocation7 + $0x4b8] sm:$0xff]
    %v543 = vld [vmem:[#allocation7 + $0x4c0] sm:$0xff]
    %v544 = vld [vmem:[#allocation7 + $0x4c8] sm:$0xff]
    %v545 = vld [vmem:[#allocation7 + $0x4d0] sm:$0xff]
    %v546 = vld [vmem:[#allocation7 + $0x4d8] sm:$0xff]
    %v547 = vld [vmem:[#allocation7 + $0x4e0] sm:$0xff]
    %v548 = vld [vmem:[#allocation7 + $0x4e8] sm:$0xff]
    %v549 = vld [vmem:[#allocation7 + $0x4f0] sm:$0xff]
    %v550 = vld [vmem:[#allocation7 + $0x4f8] sm:$0xff]
    %v551 = vld [vmem:[#allocation7 + $0x500] sm:$0xff]
    %v552 = vld [vmem:[#allocation7 + $0x508] sm:$0xff]
    %v553 = vld [vmem:[#allocation7 + $0x510] sm:$0xff]
    %v554 = vld [vmem:[#allocation7 + $0x518] sm:$0xff]
    %v555 = vld [vmem:[#allocation7 + $0x520] sm:$0xff]
    %v556 = vld [vmem:[#allocation7 + $0x528] sm:$0xff]
    %v557 = vld [vmem:[#allocation7 + $0x530] sm:$0xff]
    %v558 = vld [vmem:[#allocation7 + $0x538] sm:$0xff]
    %v559 = vld [vmem:[#allocation7 + $0x540] sm:$0xff]
    %v560 = vld [vmem:[#allocation7 + $0x548] sm:$0xff]
    %v561 = vld [vmem:[#allocation7 + $0x550] sm:$0xff]
    %v562 = vld [vmem:[#allocation7 + $0x558] sm:$0xff]
    %v563 = vld [vmem:[#allocation7 + $0x560] sm:$0xff]
    %v564 = vld [vmem:[#allocation7 + $0x568] sm:$0xff]
    %v565 = vld [vmem:[#allocation7 + $0x570] sm:$0xff]
    %v566 = vld [vmem:[#allocation7 + $0x578] sm:$0xff]
    %v567 = vld [vmem:[#allocation7 + $0x580] sm:$0xff]
    %v568 = vld [vmem:[#allocation7 + $0x588] sm:$0xff]
    %v569 = vld [vmem:[#allocation7 + $0x590] sm:$0xff]
    %v570 = vld [vmem:[#allocation7 + $0x598] sm:$0xff]
    %v571 = vld [vmem:[#allocation7 + $0x5a0] sm:$0xff]
    %v572 = vld [vmem:[#allocation7 + $0x5a8] sm:$0xff]
    %v573 = vld [vmem:[#allocation7 + $0x5b0] sm:$0xff]
    %v574 = vld [vmem:[#allocation7 + $0x5b8] sm:$0xff]
    %v575 = vld [vmem:[#allocation7 + $0x5c0] sm:$0xff]
    %v576 = vld [vmem:[#allocation7 + $0x5c8] sm:$0xff]
    %v577 = vld [vmem:[#allocation7 + $0x5d0] sm:$0xff]
    %v578 = vld [vmem:[#allocation7 + $0x5d8] sm:$0xff]
    %v579 = vld [vmem:[#allocation7 + $0x5e0] sm:$0xff]
    %v580 = vld [vmem:[#allocation7 + $0x5e8] sm:$0xff]
    %v581 = vld [vmem:[#allocation7 + $0x5f0] sm:$0xff]
    %v582 = vld [vmem:[#allocation7 + $0x5f8] sm:$0xff]
    %v583 = vld [vmem:[#allocation7 + $0x600] sm:$0xff]
    %v584 = vld [vmem:[#allocation7 + $0x608] sm:$0xff]
    %v585 = vld [vmem:[#allocation7 + $0x610] sm:$0xff]
    %v586 = vld [vmem:[#allocation7 + $0x618] sm:$0xff]
    %v587 = vld [vmem:[#allocation7 + $0x620] sm:$0xff]
    %v588 = vld [vmem:[#allocation7 + $0x628] sm:$0xff]
    %v589 = vld [vmem:[#allocation7 + $0x630] sm:$0xff]
    %v590 = vld [vmem:[#allocation7 + $0x638] sm:$0xff]
    %v591 = vld [vmem:[#allocation7 + $0x640] sm:$0xff]
    %v592 = vld [vmem:[#allocation7 + $0x648] sm:$0xff]
    %v593 = vld [vmem:[#allocation7 + $0x650] sm:$0xff]
    %v594 = vld [vmem:[#allocation7 + $0x658] sm:$0xff]
    %v595 = vld [vmem:[#allocation7 + $0x660] sm:$0xff]
    %v596 = vld [vmem:[#allocation7 + $0x668] sm:$0xff]
    %v597 = vld [vmem:[#allocation7 + $0x670] sm:$0xff]
    %v598 = vld [vmem:[#allocation7 + $0x678] sm:$0xff]
    %v599 = vld [vmem:[#allocation7 + $0x680] sm:$0xff]
    %v600 = vld [vmem:[#allocation7 + $0x688] sm:$0xff]
    %v601 = vld [vmem:[#allocation7 + $0x690] sm:$0xff]
    %v602 = vld [vmem:[#allocation7 + $0x698] sm:$0xff]
    %v603 = vld [vmem:[#allocation7 + $0x6a0] sm:$0xff]
    %v604 = vld [vmem:[#allocation7 + $0x6a8] sm:$0xff]
    %v605 = vld [vmem:[#allocation7 + $0x6b0] sm:$0xff]
    %v606 = vld [vmem:[#allocation7 + $0x6b8] sm:$0xff]
    %v607 = vld [vmem:[#allocation7 + $0x6c0] sm:$0xff]
    %v608 = vld [vmem:[#allocation7 + $0x6c8] sm:$0xff]
    %v609 = vld [vmem:[#allocation7 + $0x6d0] sm:$0xff]
    %v610 = vld [vmem:[#allocation7 + $0x6d8] sm:$0xff]
    %v611 = vld [vmem:[#allocation7 + $0x6e0] sm:$0xff]
    %v612 = vld [vmem:[#allocation7 + $0x6e8] sm:$0xff]
    %v613 = vld [vmem:[#allocation7 + $0x6f0] sm:$0xff]
    %v614 = vld [vmem:[#allocation7 + $0x6f8] sm:$0xff]
    %v615 = vld [vmem:[#allocation7 + $0x700] sm:$0xff]
    %v616 = vld [vmem:[#allocation7 + $0x708] sm:$0xff]
    %v617 = vld [vmem:[#allocation7 + $0x710] sm:$0xff]
    %v618 = vld [vmem:[#allocation7 + $0x718] sm:$0xff]
    %v619 = vld [vmem:[#allocation7 + $0x720] sm:$0xff]
    %v620 = vld [vmem:[#allocation7 + $0x728] sm:$0xff]
    %v621 = vld [vmem:[#allocation7 + $0x730] sm:$0xff]
    %v622 = vld [vmem:[#allocation7 + $0x738] sm:$0xff]
    %v623 = vld [vmem:[#allocation7 + $0x740] sm:$0xff]
    %v624 = vld [vmem:[#allocation7 + $0x748] sm:$0xff]
    %v625 = vld [vmem:[#allocation7 + $0x750] sm:$0xff]
    %v626 = vld [vmem:[#allocation7 + $0x758] sm:$0xff]
    %v627 = vld [vmem:[#allocation7 + $0x760] sm:$0xff]
    %v628 = vld [vmem:[#allocation7 + $0x768] sm:$0xff]
    %v629 = vld [vmem:[#allocation7 + $0x770] sm:$0xff]
    %v630 = vld [vmem:[#allocation7 + $0x778] sm:$0xff]
    %v631 = vld [vmem:[#allocation7 + $0x780] sm:$0xff]
    %v632 = vld [vmem:[#allocation7 + $0x788] sm:$0xff]
    %v633 = vld [vmem:[#allocation7 + $0x790] sm:$0xff]
    %v634 = vld [vmem:[#allocation7 + $0x798] sm:$0xff]
    %v635 = vld [vmem:[#allocation7 + $0x7a0] sm:$0xff]
    %v636 = vld [vmem:[#allocation7 + $0x7a8] sm:$0xff]
    %v637 = vld [vmem:[#allocation7 + $0x7b0] sm:$0xff]
    %v638 = vld [vmem:[#allocation7 + $0x7b8] sm:$0xff]
    %v639 = vld [vmem:[#allocation7 + $0x7c0] sm:$0xff]
    %v640 = vld [vmem:[#allocation7 + $0x7c8] sm:$0xff]
    %v641 = vld [vmem:[#allocation7 + $0x7d0] sm:$0xff]
    %v642 = vld [vmem:[#allocation7 + $0x7d8] sm:$0xff]
    %v643 = vld [vmem:[#allocation7 + $0x7e0] sm:$0xff]
    %v644 = vld [vmem:[#allocation7 + $0x7e8] sm:$0xff]
    %v645 = vld [vmem:[#allocation7 + $0x7f0] sm:$0xff]
    %v646 = vld [vmem:[#allocation7 + $0x7f8] sm:$0xff]
    %v647 = vld [vmem:[%s4] sm:$0xf]
    %v649 = vlaneseq
    %v650 = vshrl.u32 %v649, 7
    %v651 = vsub.s32 0, %v650
    %v652 = vrot.slane %v647, %v651
    %v653 = vlaneseq
    %v654 = vshrl.u32 %v653, 7
    %v655 = vsub.s32 1, %v654
    %v656 = vrot.slane %v647, %v655
    %v657 = vlaneseq
    %v658 = vshrl.u32 %v657, 7
    %v659 = vsub.s32 2, %v658
    %v660 = vrot.slane %v647, %v659
    %v661 = vlaneseq
    %v662 = vshrl.u32 %v661, 7
    %v663 = vsub.s32 3, %v662
    %v664 = vrot.slane %v647, %v663
    %v925 = vunpack.c.l.b16 %v391
    %v926 = vunpack.c.h.b16 %v391
    %v927 = vunpack.c.l.b16 %v392
    %v928 = vunpack.c.h.b16 %v392
    %v929 = vunpack.c.l.b16 %v393
    %v930 = vunpack.c.h.b16 %v393
    %v931 = vunpack.c.l.b16 %v394
    %v932 = vunpack.c.h.b16 %v394
    %v933 = vunpack.c.l.b16 %v395
    %v934 = vunpack.c.h.b16 %v395
    %v935 = vunpack.c.l.b16 %v396
    %v936 = vunpack.c.h.b16 %v396
    %v937 = vunpack.c.l.b16 %v397
    %v938 = vunpack.c.h.b16 %v397
    %v939 = vunpack.c.l.b16 %v398
    %v940 = vunpack.c.h.b16 %v398
    %v941 = vunpack.c.l.b16 %v399
    %v942 = vunpack.c.h.b16 %v399
    %v943 = vunpack.c.l.b16 %v400
    %v944 = vunpack.c.h.b16 %v400
    %v945 = vunpack.c.l.b16 %v401
    %v946 = vunpack.c.h.b16 %v401
    %v947 = vunpack.c.l.b16 %v402
    %v948 = vunpack.c.h.b16 %v402
    %v949 = vunpack.c.l.b16 %v403
    %v950 = vunpack.c.h.b16 %v403
    %v951 = vunpack.c.l.b16 %v404
    %v952 = vunpack.c.h.b16 %v404
    %v953 = vunpack.c.l.b16 %v405
    %v954 = vunpack.c.h.b16 %v405
    %v955 = vunpack.c.l.b16 %v406
    %v956 = vunpack.c.h.b16 %v406
    %v957 = vunpack.c.l.b16 %v407
    %v958 = vunpack.c.h.b16 %v407
    %v959 = vunpack.c.l.b16 %v408
    %v960 = vunpack.c.h.b16 %v408
    %v961 = vunpack.c.l.b16 %v409
    %v962 = vunpack.c.h.b16 %v409
    %v963 = vunpack.c.l.b16 %v410
    %v964 = vunpack.c.h.b16 %v410
    %v965 = vunpack.c.l.b16 %v411
    %v966 = vunpack.c.h.b16 %v411
    %v967 = vunpack.c.l.b16 %v412
    %v968 = vunpack.c.h.b16 %v412
    %v969 = vunpack.c.l.b16 %v413
    %v970 = vunpack.c.h.b16 %v413
    %v971 = vunpack.c.l.b16 %v414
    %v972 = vunpack.c.h.b16 %v414
    %v973 = vunpack.c.l.b16 %v415
    %v974 = vunpack.c.h.b16 %v415
    %v975 = vunpack.c.l.b16 %v416
    %v976 = vunpack.c.h.b16 %v416
    %v977 = vunpack.c.l.b16 %v417
    %v978 = vunpack.c.h.b16 %v417
    %v979 = vunpack.c.l.b16 %v418
    %v980 = vunpack.c.h.b16 %v418
    %v981 = vunpack.c.l.b16 %v419
    %v982 = vunpack.c.h.b16 %v419
    %v983 = vunpack.c.l.b16 %v420
    %v984 = vunpack.c.h.b16 %v420
    %v985 = vunpack.c.l.b16 %v421
    %v986 = vunpack.c.h.b16 %v421
    %v987 = vunpack.c.l.b16 %v422
    %v988 = vunpack.c.h.b16 %v422
    %v989 = vunpack.c.l.b16 %v423
    %v990 = vunpack.c.h.b16 %v423
    %v991 = vunpack.c.l.b16 %v424
    %v992 = vunpack.c.h.b16 %v424
    %v993 = vunpack.c.l.b16 %v425
    %v994 = vunpack.c.h.b16 %v425
    %v995 = vunpack.c.l.b16 %v426
    %v996 = vunpack.c.h.b16 %v426
    %v997 = vunpack.c.l.b16 %v427
    %v998 = vunpack.c.h.b16 %v427
    %v999 = vunpack.c.l.b16 %v428
    %v1000 = vunpack.c.h.b16 %v428
    %v1001 = vunpack.c.l.b16 %v429
    %v1002 = vunpack.c.h.b16 %v429
    %v1003 = vunpack.c.l.b16 %v430
    %v1004 = vunpack.c.h.b16 %v430
    %v1005 = vunpack.c.l.b16 %v431
    %v1006 = vunpack.c.h.b16 %v431
    %v1007 = vunpack.c.l.b16 %v432
    %v1008 = vunpack.c.h.b16 %v432
    %v1009 = vunpack.c.l.b16 %v433
    %v1010 = vunpack.c.h.b16 %v433
    %v1011 = vunpack.c.l.b16 %v434
    %v1012 = vunpack.c.h.b16 %v434
    %v1013 = vunpack.c.l.b16 %v435
    %v1014 = vunpack.c.h.b16 %v435
    %v1015 = vunpack.c.l.b16 %v436
    %v1016 = vunpack.c.h.b16 %v436
    %v1017 = vunpack.c.l.b16 %v437
    %v1018 = vunpack.c.h.b16 %v437
    %v1019 = vunpack.c.l.b16 %v438
    %v1020 = vunpack.c.h.b16 %v438
    %v1021 = vunpack.c.l.b16 %v439
    %v1022 = vunpack.c.h.b16 %v439
    %v1023 = vunpack.c.l.b16 %v440
    %v1024 = vunpack.c.h.b16 %v440
    %v1025 = vunpack.c.l.b16 %v441
    %v1026 = vunpack.c.h.b16 %v441
    %v1027 = vunpack.c.l.b16 %v442
    %v1028 = vunpack.c.h.b16 %v442
    %v1029 = vunpack.c.l.b16 %v443
    %v1030 = vunpack.c.h.b16 %v443
    %v1031 = vunpack.c.l.b16 %v444
    %v1032 = vunpack.c.h.b16 %v444
    %v1033 = vunpack.c.l.b16 %v445
    %v1034 = vunpack.c.h.b16 %v445
    %v1035 = vunpack.c.l.b16 %v446
    %v1036 = vunpack.c.h.b16 %v446
    %v1037 = vunpack.c.l.b16 %v447
    %v1038 = vunpack.c.h.b16 %v447
    %v1039 = vunpack.c.l.b16 %v448
    %v1040 = vunpack.c.h.b16 %v448
    %v1041 = vunpack.c.l.b16 %v449
    %v1042 = vunpack.c.h.b16 %v449
    %v1043 = vunpack.c.l.b16 %v450
    %v1044 = vunpack.c.h.b16 %v450
    %v1045 = vunpack.c.l.b16 %v451
    %v1046 = vunpack.c.h.b16 %v451
    %v1047 = vunpack.c.l.b16 %v452
    %v1048 = vunpack.c.h.b16 %v452
    %v1049 = vunpack.c.l.b16 %v453
    %v1050 = vunpack.c.h.b16 %v453
    %v1051 = vunpack.c.l.b16 %v454
    %v1052 = vunpack.c.h.b16 %v454
    %v1053 = vunpack.c.l.b16 %v455
    %v1054 = vunpack.c.h.b16 %v455
    %v1055 = vunpack.c.l.b16 %v456
    %v1056 = vunpack.c.h.b16 %v456
    %v1057 = vunpack.c.l.b16 %v457
    %v1058 = vunpack.c.h.b16 %v457
    %v1059 = vunpack.c.l.b16 %v458
    %v1060 = vunpack.c.h.b16 %v458
    %v1061 = vunpack.c.l.b16 %v459
    %v1062 = vunpack.c.h.b16 %v459
    %v1063 = vunpack.c.l.b16 %v460
    %v1064 = vunpack.c.h.b16 %v460
    %v1065 = vunpack.c.l.b16 %v461
    %v1066 = vunpack.c.h.b16 %v461
    %v1067 = vunpack.c.l.b16 %v462
    %v1068 = vunpack.c.h.b16 %v462
    %v1069 = vunpack.c.l.b16 %v463
    %v1070 = vunpack.c.h.b16 %v463
    %v1071 = vunpack.c.l.b16 %v464
    %v1072 = vunpack.c.h.b16 %v464
    %v1073 = vunpack.c.l.b16 %v465
    %v1074 = vunpack.c.h.b16 %v465
    %v1075 = vunpack.c.l.b16 %v466
    %v1076 = vunpack.c.h.b16 %v466
    %v1077 = vunpack.c.l.b16 %v467
    %v1078 = vunpack.c.h.b16 %v467
    %v1079 = vunpack.c.l.b16 %v468
    %v1080 = vunpack.c.h.b16 %v468
    %v1081 = vunpack.c.l.b16 %v469
    %v1082 = vunpack.c.h.b16 %v469
    %v1083 = vunpack.c.l.b16 %v470
    %v1084 = vunpack.c.h.b16 %v470
    %v1085 = vunpack.c.l.b16 %v471
    %v1086 = vunpack.c.h.b16 %v471
    %v1087 = vunpack.c.l.b16 %v472
    %v1088 = vunpack.c.h.b16 %v472
    %v1089 = vunpack.c.l.b16 %v473
    %v1090 = vunpack.c.h.b16 %v473
    %v1091 = vunpack.c.l.b16 %v474
    %v1092 = vunpack.c.h.b16 %v474
    %v1093 = vunpack.c.l.b16 %v475
    %v1094 = vunpack.c.h.b16 %v475
    %v1095 = vunpack.c.l.b16 %v476
    %v1096 = vunpack.c.h.b16 %v476
    %v1097 = vunpack.c.l.b16 %v477
    %v1098 = vunpack.c.h.b16 %v477
    %v1099 = vunpack.c.l.b16 %v478
    %v1100 = vunpack.c.h.b16 %v478
    %v1101 = vunpack.c.l.b16 %v479
    %v1102 = vunpack.c.h.b16 %v479
    %v1103 = vunpack.c.l.b16 %v480
    %v1104 = vunpack.c.h.b16 %v480
    %v1105 = vunpack.c.l.b16 %v481
    %v1106 = vunpack.c.h.b16 %v481
    %v1107 = vunpack.c.l.b16 %v482
    %v1108 = vunpack.c.h.b16 %v482
    %v1109 = vunpack.c.l.b16 %v483
    %v1110 = vunpack.c.h.b16 %v483
    %v1111 = vunpack.c.l.b16 %v484
    %v1112 = vunpack.c.h.b16 %v484
    %v1113 = vunpack.c.l.b16 %v485
    %v1114 = vunpack.c.h.b16 %v485
    %v1115 = vunpack.c.l.b16 %v486
    %v1116 = vunpack.c.h.b16 %v486
    %v1117 = vunpack.c.l.b16 %v487
    %v1118 = vunpack.c.h.b16 %v487
    %v1119 = vunpack.c.l.b16 %v488
    %v1120 = vunpack.c.h.b16 %v488
    %v1121 = vunpack.c.l.b16 %v489
    %v1122 = vunpack.c.h.b16 %v489
    %v1123 = vunpack.c.l.b16 %v490
    %v1124 = vunpack.c.h.b16 %v490
    %v1125 = vunpack.c.l.b16 %v491
    %v1126 = vunpack.c.h.b16 %v491
    %v1127 = vunpack.c.l.b16 %v492
    %v1128 = vunpack.c.h.b16 %v492
    %v1129 = vunpack.c.l.b16 %v493
    %v1130 = vunpack.c.h.b16 %v493
    %v1131 = vunpack.c.l.b16 %v494
    %v1132 = vunpack.c.h.b16 %v494
    %v1133 = vunpack.c.l.b16 %v495
    %v1134 = vunpack.c.h.b16 %v495
    %v1135 = vunpack.c.l.b16 %v496
    %v1136 = vunpack.c.h.b16 %v496
    %v1137 = vunpack.c.l.b16 %v497
    %v1138 = vunpack.c.h.b16 %v497
    %v1139 = vunpack.c.l.b16 %v498
    %v1140 = vunpack.c.h.b16 %v498
    %v1141 = vunpack.c.l.b16 %v499
    %v1142 = vunpack.c.h.b16 %v499
    %v1143 = vunpack.c.l.b16 %v500
    %v1144 = vunpack.c.h.b16 %v500
    %v1145 = vunpack.c.l.b16 %v501
    %v1146 = vunpack.c.h.b16 %v501
    %v1147 = vunpack.c.l.b16 %v502
    %v1148 = vunpack.c.h.b16 %v502
    %v1149 = vunpack.c.l.b16 %v503
    %v1150 = vunpack.c.h.b16 %v503
    %v1151 = vunpack.c.l.b16 %v504
    %v1152 = vunpack.c.h.b16 %v504
    %v1153 = vunpack.c.l.b16 %v505
    %v1154 = vunpack.c.h.b16 %v505
    %v1155 = vunpack.c.l.b16 %v506
    %v1156 = vunpack.c.h.b16 %v506
    %v1157 = vunpack.c.l.b16 %v507
    %v1158 = vunpack.c.h.b16 %v507
    %v1159 = vunpack.c.l.b16 %v508
    %v1160 = vunpack.c.h.b16 %v508
    %v1161 = vunpack.c.l.b16 %v509
    %v1162 = vunpack.c.h.b16 %v509
    %v1163 = vunpack.c.l.b16 %v510
    %v1164 = vunpack.c.h.b16 %v510
    %v1165 = vunpack.c.l.b16 %v511
    %v1166 = vunpack.c.h.b16 %v511
    %v1167 = vunpack.c.l.b16 %v512
    %v1168 = vunpack.c.h.b16 %v512
    %v1169 = vunpack.c.l.b16 %v513
    %v1170 = vunpack.c.h.b16 %v513
    %v1171 = vunpack.c.l.b16 %v514
    %v1172 = vunpack.c.h.b16 %v514
    %v1173 = vunpack.c.l.b16 %v515
    %v1174 = vunpack.c.h.b16 %v515
    %v1175 = vunpack.c.l.b16 %v516
    %v1176 = vunpack.c.h.b16 %v516
    %v1177 = vunpack.c.l.b16 %v517
    %v1178 = vunpack.c.h.b16 %v517
    %v1179 = vunpack.c.l.b16 %v518
    %v1180 = vunpack.c.h.b16 %v518
    %v1181 = vunpack.c.l.b16 %v519
    %v1182 = vunpack.c.h.b16 %v519
    %v1183 = vunpack.c.l.b16 %v520
    %v1184 = vunpack.c.h.b16 %v520
    %v1185 = vunpack.c.l.b16 %v521
    %v1186 = vunpack.c.h.b16 %v521
    %v1187 = vunpack.c.l.b16 %v522
    %v1188 = vunpack.c.h.b16 %v522
    %v1189 = vunpack.c.l.b16 %v523
    %v1190 = vunpack.c.h.b16 %v523
    %v1191 = vunpack.c.l.b16 %v524
    %v1192 = vunpack.c.h.b16 %v524
    %v1193 = vunpack.c.l.b16 %v525
    %v1194 = vunpack.c.h.b16 %v525
    %v1195 = vunpack.c.l.b16 %v526
    %v1196 = vunpack.c.h.b16 %v526
    %v1197 = vunpack.c.l.b16 %v527
    %v1198 = vunpack.c.h.b16 %v527
    %v1199 = vunpack.c.l.b16 %v528
    %v1200 = vunpack.c.h.b16 %v528
    %v1201 = vunpack.c.l.b16 %v529
    %v1202 = vunpack.c.h.b16 %v529
    %v1203 = vunpack.c.l.b16 %v530
    %v1204 = vunpack.c.h.b16 %v530
    %v1205 = vunpack.c.l.b16 %v531
    %v1206 = vunpack.c.h.b16 %v531
    %v1207 = vunpack.c.l.b16 %v532
    %v1208 = vunpack.c.h.b16 %v532
    %v1209 = vunpack.c.l.b16 %v533
    %v1210 = vunpack.c.h.b16 %v533
    %v1211 = vunpack.c.l.b16 %v534
    %v1212 = vunpack.c.h.b16 %v534
    %v1213 = vunpack.c.l.b16 %v535
    %v1214 = vunpack.c.h.b16 %v535
    %v1215 = vunpack.c.l.b16 %v536
    %v1216 = vunpack.c.h.b16 %v536
    %v1217 = vunpack.c.l.b16 %v537
    %v1218 = vunpack.c.h.b16 %v537
    %v1219 = vunpack.c.l.b16 %v538
    %v1220 = vunpack.c.h.b16 %v538
    %v1221 = vunpack.c.l.b16 %v539
    %v1222 = vunpack.c.h.b16 %v539
    %v1223 = vunpack.c.l.b16 %v540
    %v1224 = vunpack.c.h.b16 %v540
    %v1225 = vunpack.c.l.b16 %v541
    %v1226 = vunpack.c.h.b16 %v541
    %v1227 = vunpack.c.l.b16 %v542
    %v1228 = vunpack.c.h.b16 %v542
    %v1229 = vunpack.c.l.b16 %v543
    %v1230 = vunpack.c.h.b16 %v543
    %v1231 = vunpack.c.l.b16 %v544
    %v1232 = vunpack.c.h.b16 %v544
    %v1233 = vunpack.c.l.b16 %v545
    %v1234 = vunpack.c.h.b16 %v545
    %v1235 = vunpack.c.l.b16 %v546
    %v1236 = vunpack.c.h.b16 %v546
    %v1237 = vunpack.c.l.b16 %v547
    %v1238 = vunpack.c.h.b16 %v547
    %v1239 = vunpack.c.l.b16 %v548
    %v1240 = vunpack.c.h.b16 %v548
    %v1241 = vunpack.c.l.b16 %v549
    %v1242 = vunpack.c.h.b16 %v549
    %v1243 = vunpack.c.l.b16 %v550
    %v1244 = vunpack.c.h.b16 %v550
    %v1245 = vunpack.c.l.b16 %v551
    %v1246 = vunpack.c.h.b16 %v551
    %v1247 = vunpack.c.l.b16 %v552
    %v1248 = vunpack.c.h.b16 %v552
    %v1249 = vunpack.c.l.b16 %v553
    %v1250 = vunpack.c.h.b16 %v553
    %v1251 = vunpack.c.l.b16 %v554
    %v1252 = vunpack.c.h.b16 %v554
    %v1253 = vunpack.c.l.b16 %v555
    %v1254 = vunpack.c.h.b16 %v555
    %v1255 = vunpack.c.l.b16 %v556
    %v1256 = vunpack.c.h.b16 %v556
    %v1257 = vunpack.c.l.b16 %v557
    %v1258 = vunpack.c.h.b16 %v557
    %v1259 = vunpack.c.l.b16 %v558
    %v1260 = vunpack.c.h.b16 %v558
    %v1261 = vunpack.c.l.b16 %v559
    %v1262 = vunpack.c.h.b16 %v559
    %v1263 = vunpack.c.l.b16 %v560
    %v1264 = vunpack.c.h.b16 %v560
    %v1265 = vunpack.c.l.b16 %v561
    %v1266 = vunpack.c.h.b16 %v561
    %v1267 = vunpack.c.l.b16 %v562
    %v1268 = vunpack.c.h.b16 %v562
    %v1269 = vunpack.c.l.b16 %v563
    %v1270 = vunpack.c.h.b16 %v563
    %v1271 = vunpack.c.l.b16 %v564
    %v1272 = vunpack.c.h.b16 %v564
    %v1273 = vunpack.c.l.b16 %v565
    %v1274 = vunpack.c.h.b16 %v565
    %v1275 = vunpack.c.l.b16 %v566
    %v1276 = vunpack.c.h.b16 %v566
    %v1277 = vunpack.c.l.b16 %v567
    %v1278 = vunpack.c.h.b16 %v567
    %v1279 = vunpack.c.l.b16 %v568
    %v1280 = vunpack.c.h.b16 %v568
    %v1281 = vunpack.c.l.b16 %v569
    %v1282 = vunpack.c.h.b16 %v569
    %v1283 = vunpack.c.l.b16 %v570
    %v1284 = vunpack.c.h.b16 %v570
    %v1285 = vunpack.c.l.b16 %v571
    %v1286 = vunpack.c.h.b16 %v571
    %v1287 = vunpack.c.l.b16 %v572
    %v1288 = vunpack.c.h.b16 %v572
    %v1289 = vunpack.c.l.b16 %v573
    %v1290 = vunpack.c.h.b16 %v573
    %v1291 = vunpack.c.l.b16 %v574
    %v1292 = vunpack.c.h.b16 %v574
    %v1293 = vunpack.c.l.b16 %v575
    %v1294 = vunpack.c.h.b16 %v575
    %v1295 = vunpack.c.l.b16 %v576
    %v1296 = vunpack.c.h.b16 %v576
    %v1297 = vunpack.c.l.b16 %v577
    %v1298 = vunpack.c.h.b16 %v577
    %v1299 = vunpack.c.l.b16 %v578
    %v1300 = vunpack.c.h.b16 %v578
    %v1301 = vunpack.c.l.b16 %v579
    %v1302 = vunpack.c.h.b16 %v579
    %v1303 = vunpack.c.l.b16 %v580
    %v1304 = vunpack.c.h.b16 %v580
    %v1305 = vunpack.c.l.b16 %v581
    %v1306 = vunpack.c.h.b16 %v581
    %v1307 = vunpack.c.l.b16 %v582
    %v1308 = vunpack.c.h.b16 %v582
    %v1309 = vunpack.c.l.b16 %v583
    %v1310 = vunpack.c.h.b16 %v583
    %v1311 = vunpack.c.l.b16 %v584
    %v1312 = vunpack.c.h.b16 %v584
    %v1313 = vunpack.c.l.b16 %v585
    %v1314 = vunpack.c.h.b16 %v585
    %v1315 = vunpack.c.l.b16 %v586
    %v1316 = vunpack.c.h.b16 %v586
    %v1317 = vunpack.c.l.b16 %v587
    %v1318 = vunpack.c.h.b16 %v587
    %v1319 = vunpack.c.l.b16 %v588
    %v1320 = vunpack.c.h.b16 %v588
    %v1321 = vunpack.c.l.b16 %v589
    %v1322 = vunpack.c.h.b16 %v589
    %v1323 = vunpack.c.l.b16 %v590
    %v1324 = vunpack.c.h.b16 %v590
    %v1325 = vunpack.c.l.b16 %v591
    %v1326 = vunpack.c.h.b16 %v591
    %v1327 = vunpack.c.l.b16 %v592
    %v1328 = vunpack.c.h.b16 %v592
    %v1329 = vunpack.c.l.b16 %v593
    %v1330 = vunpack.c.h.b16 %v593
    %v1331 = vunpack.c.l.b16 %v594
    %v1332 = vunpack.c.h.b16 %v594
    %v1333 = vunpack.c.l.b16 %v595
    %v1334 = vunpack.c.h.b16 %v595
    %v1335 = vunpack.c.l.b16 %v596
    %v1336 = vunpack.c.h.b16 %v596
    %v1337 = vunpack.c.l.b16 %v597
    %v1338 = vunpack.c.h.b16 %v597
    %v1339 = vunpack.c.l.b16 %v598
    %v1340 = vunpack.c.h.b16 %v598
    %v1341 = vunpack.c.l.b16 %v599
    %v1342 = vunpack.c.h.b16 %v599
    %v1343 = vunpack.c.l.b16 %v600
    %v1344 = vunpack.c.h.b16 %v600
    %v1345 = vunpack.c.l.b16 %v601
    %v1346 = vunpack.c.h.b16 %v601
    %v1347 = vunpack.c.l.b16 %v602
    %v1348 = vunpack.c.h.b16 %v602
    %v1349 = vunpack.c.l.b16 %v603
    %v1350 = vunpack.c.h.b16 %v603
    %v1351 = vunpack.c.l.b16 %v604
    %v1352 = vunpack.c.h.b16 %v604
    %v1353 = vunpack.c.l.b16 %v605
    %v1354 = vunpack.c.h.b16 %v605
    %v1355 = vunpack.c.l.b16 %v606
    %v1356 = vunpack.c.h.b16 %v606
    %v1357 = vunpack.c.l.b16 %v607
    %v1358 = vunpack.c.h.b16 %v607
    %v1359 = vunpack.c.l.b16 %v608
    %v1360 = vunpack.c.h.b16 %v608
    %v1361 = vunpack.c.l.b16 %v609
    %v1362 = vunpack.c.h.b16 %v609
    %v1363 = vunpack.c.l.b16 %v610
    %v1364 = vunpack.c.h.b16 %v610
    %v1365 = vunpack.c.l.b16 %v611
    %v1366 = vunpack.c.h.b16 %v611
    %v1367 = vunpack.c.l.b16 %v612
    %v1368 = vunpack.c.h.b16 %v612
    %v1369 = vunpack.c.l.b16 %v613
    %v1370 = vunpack.c.h.b16 %v613
    %v1371 = vunpack.c.l.b16 %v614
    %v1372 = vunpack.c.h.b16 %v614
    %v1373 = vunpack.c.l.b16 %v615
    %v1374 = vunpack.c.h.b16 %v615
    %v1375 = vunpack.c.l.b16 %v616
    %v1376 = vunpack.c.h.b16 %v616
    %v1377 = vunpack.c.l.b16 %v617
    %v1378 = vunpack.c.h.b16 %v617
    %v1379 = vunpack.c.l.b16 %v618
    %v1380 = vunpack.c.h.b16 %v618
    %v1381 = vunpack.c.l.b16 %v619
    %v1382 = vunpack.c.h.b16 %v619
    %v1383 = vunpack.c.l.b16 %v620
    %v1384 = vunpack.c.h.b16 %v620
    %v1385 = vunpack.c.l.b16 %v621
    %v1386 = vunpack.c.h.b16 %v621
    %v1387 = vunpack.c.l.b16 %v622
    %v1388 = vunpack.c.h.b16 %v622
    %v1389 = vunpack.c.l.b16 %v623
    %v1390 = vunpack.c.h.b16 %v623
    %v1391 = vunpack.c.l.b16 %v624
    %v1392 = vunpack.c.h.b16 %v624
    %v1393 = vunpack.c.l.b16 %v625
    %v1394 = vunpack.c.h.b16 %v625
    %v1395 = vunpack.c.l.b16 %v626
    %v1396 = vunpack.c.h.b16 %v626
    %v1397 = vunpack.c.l.b16 %v627
    %v1398 = vunpack.c.h.b16 %v627
    %v1399 = vunpack.c.l.b16 %v628
    %v1400 = vunpack.c.h.b16 %v628
    %v1401 = vunpack.c.l.b16 %v629
    %v1402 = vunpack.c.h.b16 %v629
    %v1403 = vunpack.c.l.b16 %v630
    %v1404 = vunpack.c.h.b16 %v630
    %v1405 = vunpack.c.l.b16 %v631
    %v1406 = vunpack.c.h.b16 %v631
    %v1407 = vunpack.c.l.b16 %v632
    %v1408 = vunpack.c.h.b16 %v632
    %v1409 = vunpack.c.l.b16 %v633
    %v1410 = vunpack.c.h.b16 %v633
    %v1411 = vunpack.c.l.b16 %v634
    %v1412 = vunpack.c.h.b16 %v634
    %v1413 = vunpack.c.l.b16 %v635
    %v1414 = vunpack.c.h.b16 %v635
    %v1415 = vunpack.c.l.b16 %v636
    %v1416 = vunpack.c.h.b16 %v636
    %v1417 = vunpack.c.l.b16 %v637
    %v1418 = vunpack.c.h.b16 %v637
    %v1419 = vunpack.c.l.b16 %v638
    %v1420 = vunpack.c.h.b16 %v638
    %v1421 = vunpack.c.l.b16 %v639
    %v1422 = vunpack.c.h.b16 %v639
    %v1423 = vunpack.c.l.b16 %v640
    %v1424 = vunpack.c.h.b16 %v640
    %v1425 = vunpack.c.l.b16 %v641
    %v1426 = vunpack.c.h.b16 %v641
    %v1427 = vunpack.c.l.b16 %v642
    %v1428 = vunpack.c.h.b16 %v642
    %v1429 = vunpack.c.l.b16 %v643
    %v1430 = vunpack.c.h.b16 %v643
    %v1431 = vunpack.c.l.b16 %v644
    %v1432 = vunpack.c.h.b16 %v644
    %v1433 = vunpack.c.l.b16 %v645
    %v1434 = vunpack.c.h.b16 %v645
    %v1435 = vunpack.c.l.b16 %v646
    %v1436 = vunpack.c.h.b16 %v646
    %v1437 = vpack.c.b16 %v929, %v925
    %v1438 = vpack.c.b16 %v930, %v926
    %v1439 = vpack.c.b16 %v931, %v927
    %v1440 = vpack.c.b16 %v932, %v928
    %v1441 = vpack.c.b16 %v937, %v933
    %v1442 = vpack.c.b16 %v938, %v934
    %v1443 = vpack.c.b16 %v939, %v935
    %v1444 = vpack.c.b16 %v940, %v936
    %v1445 = vpack.c.b16 %v945, %v941
    %v1446 = vpack.c.b16 %v946, %v942
    %v1447 = vpack.c.b16 %v947, %v943
    %v1448 = vpack.c.b16 %v948, %v944
    %v1449 = vpack.c.b16 %v953, %v949
    %v1450 = vpack.c.b16 %v954, %v950
    %v1451 = vpack.c.b16 %v955, %v951
    %v1452 = vpack.c.b16 %v956, %v952
    %v1453 = vpack.c.b16 %v961, %v957
    %v1454 = vpack.c.b16 %v962, %v958
    %v1455 = vpack.c.b16 %v963, %v959
    %v1456 = vpack.c.b16 %v964, %v960
    %v1457 = vpack.c.b16 %v969, %v965
    %v1458 = vpack.c.b16 %v970, %v966
    %v1459 = vpack.c.b16 %v971, %v967
    %v1460 = vpack.c.b16 %v972, %v968
    %v1461 = vpack.c.b16 %v977, %v973
    %v1462 = vpack.c.b16 %v978, %v974
    %v1463 = vpack.c.b16 %v979, %v975
    %v1464 = vpack.c.b16 %v980, %v976
    %v1465 = vpack.c.b16 %v985, %v981
    %v1466 = vpack.c.b16 %v986, %v982
    %v1467 = vpack.c.b16 %v987, %v983
    %v1468 = vpack.c.b16 %v988, %v984
    %v1469 = vpack.c.b16 %v993, %v989
    %v1470 = vpack.c.b16 %v994, %v990
    %v1471 = vpack.c.b16 %v995, %v991
    %v1472 = vpack.c.b16 %v996, %v992
    %v1473 = vpack.c.b16 %v1001, %v997
    %v1474 = vpack.c.b16 %v1002, %v998
    %v1475 = vpack.c.b16 %v1003, %v999
    %v1476 = vpack.c.b16 %v1004, %v1000
    %v1477 = vpack.c.b16 %v1009, %v1005
    %v1478 = vpack.c.b16 %v1010, %v1006
    %v1479 = vpack.c.b16 %v1011, %v1007
    %v1480 = vpack.c.b16 %v1012, %v1008
    %v1481 = vpack.c.b16 %v1017, %v1013
    %v1482 = vpack.c.b16 %v1018, %v1014
    %v1483 = vpack.c.b16 %v1019, %v1015
    %v1484 = vpack.c.b16 %v1020, %v1016
    %v1485 = vpack.c.b16 %v1025, %v1021
    %v1486 = vpack.c.b16 %v1026, %v1022
    %v1487 = vpack.c.b16 %v1027, %v1023
    %v1488 = vpack.c.b16 %v1028, %v1024
    %v1489 = vpack.c.b16 %v1033, %v1029
    %v1490 = vpack.c.b16 %v1034, %v1030
    %v1491 = vpack.c.b16 %v1035, %v1031
    %v1492 = vpack.c.b16 %v1036, %v1032
    %v1493 = vpack.c.b16 %v1041, %v1037
    %v1494 = vpack.c.b16 %v1042, %v1038
    %v1495 = vpack.c.b16 %v1043, %v1039
    %v1496 = vpack.c.b16 %v1044, %v1040
    %v1497 = vpack.c.b16 %v1049, %v1045
    %v1498 = vpack.c.b16 %v1050, %v1046
    %v1499 = vpack.c.b16 %v1051, %v1047
    %v1500 = vpack.c.b16 %v1052, %v1048
    %v1501 = vpack.c.b16 %v1057, %v1053
    %v1502 = vpack.c.b16 %v1058, %v1054
    %v1503 = vpack.c.b16 %v1059, %v1055
    %v1504 = vpack.c.b16 %v1060, %v1056
    %v1505 = vpack.c.b16 %v1065, %v1061
    %v1506 = vpack.c.b16 %v1066, %v1062
    %v1507 = vpack.c.b16 %v1067, %v1063
    %v1508 = vpack.c.b16 %v1068, %v1064
    %v1509 = vpack.c.b16 %v1073, %v1069
    %v1510 = vpack.c.b16 %v1074, %v1070
    %v1511 = vpack.c.b16 %v1075, %v1071
    %v1512 = vpack.c.b16 %v1076, %v1072
    %v1513 = vpack.c.b16 %v1081, %v1077
    %v1514 = vpack.c.b16 %v1082, %v1078
    %v1515 = vpack.c.b16 %v1083, %v1079
    %v1516 = vpack.c.b16 %v1084, %v1080
    %v1517 = vpack.c.b16 %v1089, %v1085
    %v1518 = vpack.c.b16 %v1090, %v1086
    %v1519 = vpack.c.b16 %v1091, %v1087
    %v1520 = vpack.c.b16 %v1092, %v1088
    %v1521 = vpack.c.b16 %v1097, %v1093
    %v1522 = vpack.c.b16 %v1098, %v1094
    %v1523 = vpack.c.b16 %v1099, %v1095
    %v1524 = vpack.c.b16 %v1100, %v1096
    %v1525 = vpack.c.b16 %v1105, %v1101
    %v1526 = vpack.c.b16 %v1106, %v1102
    %v1527 = vpack.c.b16 %v1107, %v1103
    %v1528 = vpack.c.b16 %v1108, %v1104
    %v1529 = vpack.c.b16 %v1113, %v1109
    %v1530 = vpack.c.b16 %v1114, %v1110
    %v1531 = vpack.c.b16 %v1115, %v1111
    %v1532 = vpack.c.b16 %v1116, %v1112
    %v1533 = vpack.c.b16 %v1121, %v1117
    %v1534 = vpack.c.b16 %v1122, %v1118
    %v1535 = vpack.c.b16 %v1123, %v1119
    %v1536 = vpack.c.b16 %v1124, %v1120
    %v1537 = vpack.c.b16 %v1129, %v1125
    %v1538 = vpack.c.b16 %v1130, %v1126
    %v1539 = vpack.c.b16 %v1131, %v1127
    %v1540 = vpack.c.b16 %v1132, %v1128
    %v1541 = vpack.c.b16 %v1137, %v1133
    %v1542 = vpack.c.b16 %v1138, %v1134
    %v1543 = vpack.c.b16 %v1139, %v1135
    %v1544 = vpack.c.b16 %v1140, %v1136
    %v1545 = vpack.c.b16 %v1145, %v1141
    %v1546 = vpack.c.b16 %v1146, %v1142
    %v1547 = vpack.c.b16 %v1147, %v1143
    %v1548 = vpack.c.b16 %v1148, %v1144
    %v1549 = vpack.c.b16 %v1153, %v1149
    %v1550 = vpack.c.b16 %v1154, %v1150
    %v1551 = vpack.c.b16 %v1155, %v1151
    %v1552 = vpack.c.b16 %v1156, %v1152
    %v1553 = vpack.c.b16 %v1161, %v1157
    %v1554 = vpack.c.b16 %v1162, %v1158
    %v1555 = vpack.c.b16 %v1163, %v1159
    %v1556 = vpack.c.b16 %v1164, %v1160
    %v1557 = vpack.c.b16 %v1169, %v1165
    %v1558 = vpack.c.b16 %v1170, %v1166
    %v1559 = vpack.c.b16 %v1171, %v1167
    %v1560 = vpack.c.b16 %v1172, %v1168
    %v1561 = vpack.c.b16 %v1177, %v1173
    %v1562 = vpack.c.b16 %v1178, %v1174
    %v1563 = vpack.c.b16 %v1179, %v1175
    %v1564 = vpack.c.b16 %v1180, %v1176
    %v1565 = vpack.c.b16 %v1185, %v1181
    %v1566 = vpack.c.b16 %v1186, %v1182
    %v1567 = vpack.c.b16 %v1187, %v1183
    %v1568 = vpack.c.b16 %v1188, %v1184
    %v1569 = vpack.c.b16 %v1193, %v1189
    %v1570 = vpack.c.b16 %v1194, %v1190
    %v1571 = vpack.c.b16 %v1195, %v1191
    %v1572 = vpack.c.b16 %v1196, %v1192
    %v1573 = vpack.c.b16 %v1201, %v1197
    %v1574 = vpack.c.b16 %v1202, %v1198
    %v1575 = vpack.c.b16 %v1203, %v1199
    %v1576 = vpack.c.b16 %v1204, %v1200
    %v1577 = vpack.c.b16 %v1209, %v1205
    %v1578 = vpack.c.b16 %v1210, %v1206
    %v1579 = vpack.c.b16 %v1211, %v1207
    %v1580 = vpack.c.b16 %v1212, %v1208
    %v1581 = vpack.c.b16 %v1217, %v1213
    %v1582 = vpack.c.b16 %v1218, %v1214
    %v1583 = vpack.c.b16 %v1219, %v1215
    %v1584 = vpack.c.b16 %v1220, %v1216
    %v1585 = vpack.c.b16 %v1225, %v1221
    %v1586 = vpack.c.b16 %v1226, %v1222
    %v1587 = vpack.c.b16 %v1227, %v1223
    %v1588 = vpack.c.b16 %v1228, %v1224
    %v1589 = vpack.c.b16 %v1233, %v1229
    %v1590 = vpack.c.b16 %v1234, %v1230
    %v1591 = vpack.c.b16 %v1235, %v1231
    %v1592 = vpack.c.b16 %v1236, %v1232
    %v1593 = vpack.c.b16 %v1241, %v1237
    %v1594 = vpack.c.b16 %v1242, %v1238
    %v1595 = vpack.c.b16 %v1243, %v1239
    %v1596 = vpack.c.b16 %v1244, %v1240
    %v1597 = vpack.c.b16 %v1249, %v1245
    %v1598 = vpack.c.b16 %v1250, %v1246
    %v1599 = vpack.c.b16 %v1251, %v1247
    %v1600 = vpack.c.b16 %v1252, %v1248
    %v1601 = vpack.c.b16 %v1257, %v1253
    %v1602 = vpack.c.b16 %v1258, %v1254
    %v1603 = vpack.c.b16 %v1259, %v1255
    %v1604 = vpack.c.b16 %v1260, %v1256
    %v1605 = vpack.c.b16 %v1265, %v1261
    %v1606 = vpack.c.b16 %v1266, %v1262
    %v1607 = vpack.c.b16 %v1267, %v1263
    %v1608 = vpack.c.b16 %v1268, %v1264
    %v1609 = vpack.c.b16 %v1273, %v1269
    %v1610 = vpack.c.b16 %v1274, %v1270
    %v1611 = vpack.c.b16 %v1275, %v1271
    %v1612 = vpack.c.b16 %v1276, %v1272
    %v1613 = vpack.c.b16 %v1281, %v1277
    %v1614 = vpack.c.b16 %v1282, %v1278
    %v1615 = vpack.c.b16 %v1283, %v1279
    %v1616 = vpack.c.b16 %v1284, %v1280
    %v1617 = vpack.c.b16 %v1289, %v1285
    %v1618 = vpack.c.b16 %v1290, %v1286
    %v1619 = vpack.c.b16 %v1291, %v1287
    %v1620 = vpack.c.b16 %v1292, %v1288
    %v1621 = vpack.c.b16 %v1297, %v1293
    %v1622 = vpack.c.b16 %v1298, %v1294
    %v1623 = vpack.c.b16 %v1299, %v1295
    %v1624 = vpack.c.b16 %v1300, %v1296
    %v1625 = vpack.c.b16 %v1305, %v1301
    %v1626 = vpack.c.b16 %v1306, %v1302
    %v1627 = vpack.c.b16 %v1307, %v1303
    %v1628 = vpack.c.b16 %v1308, %v1304
    %v1629 = vpack.c.b16 %v1313, %v1309
    %v1630 = vpack.c.b16 %v1314, %v1310
    %v1631 = vpack.c.b16 %v1315, %v1311
    %v1632 = vpack.c.b16 %v1316, %v1312
    %v1633 = vpack.c.b16 %v1321, %v1317
    %v1634 = vpack.c.b16 %v1322, %v1318
    %v1635 = vpack.c.b16 %v1323, %v1319
    %v1636 = vpack.c.b16 %v1324, %v1320
    %v1637 = vpack.c.b16 %v1329, %v1325
    %v1638 = vpack.c.b16 %v1330, %v1326
    %v1639 = vpack.c.b16 %v1331, %v1327
    %v1640 = vpack.c.b16 %v1332, %v1328
    %v1641 = vpack.c.b16 %v1337, %v1333
    %v1642 = vpack.c.b16 %v1338, %v1334
    %v1643 = vpack.c.b16 %v1339, %v1335
    %v1644 = vpack.c.b16 %v1340, %v1336
    %v1645 = vpack.c.b16 %v1345, %v1341
    %v1646 = vpack.c.b16 %v1346, %v1342
    %v1647 = vpack.c.b16 %v1347, %v1343
    %v1648 = vpack.c.b16 %v1348, %v1344
    %v1649 = vpack.c.b16 %v1353, %v1349
    %v1650 = vpack.c.b16 %v1354, %v1350
    %v1651 = vpack.c.b16 %v1355, %v1351
    %v1652 = vpack.c.b16 %v1356, %v1352
    %v1653 = vpack.c.b16 %v1361, %v1357
    %v1654 = vpack.c.b16 %v1362, %v1358
    %v1655 = vpack.c.b16 %v1363, %v1359
    %v1656 = vpack.c.b16 %v1364, %v1360
    %v1657 = vpack.c.b16 %v1369, %v1365
    %v1658 = vpack.c.b16 %v1370, %v1366
    %v1659 = vpack.c.b16 %v1371, %v1367
    %v1660 = vpack.c.b16 %v1372, %v1368
    %v1661 = vpack.c.b16 %v1377, %v1373
    %v1662 = vpack.c.b16 %v1378, %v1374
    %v1663 = vpack.c.b16 %v1379, %v1375
    %v1664 = vpack.c.b16 %v1380, %v1376
    %v1665 = vpack.c.b16 %v1385, %v1381
    %v1666 = vpack.c.b16 %v1386, %v1382
    %v1667 = vpack.c.b16 %v1387, %v1383
    %v1668 = vpack.c.b16 %v1388, %v1384
    %v1669 = vpack.c.b16 %v1393, %v1389
    %v1670 = vpack.c.b16 %v1394, %v1390
    %v1671 = vpack.c.b16 %v1395, %v1391
    %v1672 = vpack.c.b16 %v1396, %v1392
    %v1673 = vpack.c.b16 %v1401, %v1397
    %v1674 = vpack.c.b16 %v1402, %v1398
    %v1675 = vpack.c.b16 %v1403, %v1399
    %v1676 = vpack.c.b16 %v1404, %v1400
    %v1677 = vpack.c.b16 %v1409, %v1405
    %v1678 = vpack.c.b16 %v1410, %v1406
    %v1679 = vpack.c.b16 %v1411, %v1407
    %v1680 = vpack.c.b16 %v1412, %v1408
    %v1681 = vpack.c.b16 %v1417, %v1413
    %v1682 = vpack.c.b16 %v1418, %v1414
    %v1683 = vpack.c.b16 %v1419, %v1415
    %v1684 = vpack.c.b16 %v1420, %v1416
    %v1685 = vpack.c.b16 %v1425, %v1421
    %v1686 = vpack.c.b16 %v1426, %v1422
    %v1687 = vpack.c.b16 %v1427, %v1423
    %v1688 = vpack.c.b16 %v1428, %v1424
    %v1689 = vpack.c.b16 %v1433, %v1429
    %v1690 = vpack.c.b16 %v1434, %v1430
    %v1691 = vpack.c.b16 %v1435, %v1431
    %v1692 = vpack.c.b16 %v1436, %v1432
    %1949 = vmatprep.subr.bf16.mxu0 %v1438
    %1950 = vmatpush1.bf16.msra.mxu0 %v1437
    %1951 = vmatprep.subr.bf16.mxu0 %v1442
    %1952 = vmatpush1.bf16.msra.mxu0 %v1441
    %1953 = vmatprep.subr.bf16.mxu0 %v1446
    %1954 = vmatpush1.bf16.msra.mxu0 %v1445
    %1955 = vmatprep.subr.bf16.mxu0 %v1450
    %1956 = vmatpush1.bf16.msra.mxu0 %v1449
    %1957 = vmatprep.subr.bf16.mxu0 %v1454
    %1958 = vmatpush1.bf16.msra.mxu0 %v1453
    %1959 = vmatprep.subr.bf16.mxu0 %v1458
    %1960 = vmatpush1.bf16.msra.mxu0 %v1457
    %1961 = vmatprep.subr.bf16.mxu0 %v1462
    %1962 = vmatpush1.bf16.msra.mxu0 %v1461
    %1963 = vmatprep.subr.bf16.mxu0 %v1466
    %1964 = vmatpush1.bf16.msra.mxu0 %v1465
    %1965 = vmatprep.subr.bf16.mxu0 %v1470
    %1966 = vmatpush1.bf16.msra.mxu0 %v1469
    %1967 = vmatprep.subr.bf16.mxu0 %v1474
    %1968 = vmatpush1.bf16.msra.mxu0 %v1473
    %1969 = vmatprep.subr.bf16.mxu0 %v1478
    %1970 = vmatpush1.bf16.msra.mxu0 %v1477
    %1971 = vmatprep.subr.bf16.mxu0 %v1482
    %1972 = vmatpush1.bf16.msra.mxu0 %v1481
    %1973 = vmatprep.subr.bf16.mxu0 %v1486
    %1974 = vmatpush1.bf16.msra.mxu0 %v1485
    %1975 = vmatprep.subr.bf16.mxu0 %v1490
    %1976 = vmatpush1.bf16.msra.mxu0 %v1489
    %1977 = vmatprep.subr.bf16.mxu0 %v1494
    %1978 = vmatpush1.bf16.msra.mxu0 %v1493
    %1979 = vmatprep.subr.bf16.mxu0 %v1498
    %1980 = vmatpush1.bf16.msra.mxu0 %v1497
    %1981 = vmatprep.mubr.bf16.mxu0 %v384
    %1982 = vmatmul.mubr.bf16.gmra.mrb[0].mxu0 %v383
    %v1983 = vpop.f32.mrb[0].mxu0
    %v1984 = vadd.f32 %v652, %v1983
    %v1985 = vpop.f32.mrb[0].mxu0
    %v1986 = vadd.f32 %v656, %v1985
    %v1987 = vpop.f32.mrb[0].mxu0
    %v1988 = vpop.f32.mrb[0].mxu0
    %1989 = vdwg.mxu0
    %1990 = vmatprep.subr.bf16.mxu0 %v1502
    %1991 = vmatpush1.bf16.msra.mxu0 %v1501
    %1992 = vmatprep.subr.bf16.mxu0 %v1506
    %1993 = vmatpush1.bf16.msra.mxu0 %v1505
    %1994 = vmatprep.subr.bf16.mxu0 %v1510
    %1995 = vmatpush1.bf16.msra.mxu0 %v1509
    %1996 = vmatprep.subr.bf16.mxu0 %v1514
    %1997 = vmatpush1.bf16.msra.mxu0 %v1513
    %1998 = vmatprep.subr.bf16.mxu0 %v1518
    %1999 = vmatpush1.bf16.msra.mxu0 %v1517
    %2000 = vmatprep.subr.bf16.mxu0 %v1522
    %2001 = vmatpush1.bf16.msra.mxu0 %v1521
    %2002 = vmatprep.subr.bf16.mxu0 %v1526
    %2003 = vmatpush1.bf16.msra.mxu0 %v1525
    %2004 = vmatprep.subr.bf16.mxu0 %v1530
    %2005 = vmatpush1.bf16.msra.mxu0 %v1529
    %2006 = vmatprep.subr.bf16.mxu0 %v1534
    %2007 = vmatpush1.bf16.msra.mxu0 %v1533
    %2008 = vmatprep.subr.bf16.mxu0 %v1538
    %2009 = vmatpush1.bf16.msra.mxu0 %v1537
    %2010 = vmatprep.subr.bf16.mxu0 %v1542
    %2011 = vmatpush1.bf16.msra.mxu0 %v1541
    %2012 = vmatprep.subr.bf16.mxu0 %v1546
    %2013 = vmatpush1.bf16.msra.mxu0 %v1545
    %2014 = vmatprep.subr.bf16.mxu0 %v1550
    %2015 = vmatpush1.bf16.msra.mxu0 %v1549
    %2016 = vmatprep.subr.bf16.mxu0 %v1554
    %2017 = vmatpush1.bf16.msra.mxu0 %v1553
    %2018 = vmatprep.subr.bf16.mxu0 %v1558
    %2019 = vmatpush1.bf16.msra.mxu0 %v1557
    %2020 = vmatprep.subr.bf16.mxu0 %v1562
    %2021 = vmatpush1.bf16.msra.mxu0 %v1561
    %2022 = vmatprep.mubr.bf16.mxu0 %v386
    %2023 = vmatmul.mubr.bf16.gmra.mrb[0].mxu0 %v385
    %v2024 = vpop.f32.mrb[0].mxu0
    %v2025 = vadd.f32 %v1984, %v2024
    %v2026 = vpop.f32.mrb[0].mxu0
    %v2027 = vadd.f32 %v1986, %v2026
    %v2028 = vpop.f32.mrb[0].mxu0
    %v2029 = vpop.f32.mrb[0].mxu0
    %2030 = vdwg.mxu0
    %2031 = vmatprep.subr.bf16.mxu0 %v1566
    %2032 = vmatpush1.bf16.msra.mxu0 %v1565
    %2033 = vmatprep.subr.bf16.mxu0 %v1570
    %2034 = vmatpush1.bf16.msra.mxu0 %v1569
    %2035 = vmatprep.subr.bf16.mxu0 %v1574
    %2036 = vmatpush1.bf16.msra.mxu0 %v1573
    %2037 = vmatprep.subr.bf16.mxu0 %v1578
    %2038 = vmatpush1.bf16.msra.mxu0 %v1577
    %2039 = vmatprep.subr.bf16.mxu0 %v1582
    %2040 = vmatpush1.bf16.msra.mxu0 %v1581
    %2041 = vmatprep.subr.bf16.mxu0 %v1586
    %2042 = vmatpush1.bf16.msra.mxu0 %v1585
    %2043 = vmatprep.subr.bf16.mxu0 %v1590
    %2044 = vmatpush1.bf16.msra.mxu0 %v1589
    %2045 = vmatprep.subr.bf16.mxu0 %v1594
    %2046 = vmatpush1.bf16.msra.mxu0 %v1593
    %2047 = vmatprep.subr.bf16.mxu0 %v1598
    %2048 = vmatpush1.bf16.msra.mxu0 %v1597
    %2049 = vmatprep.subr.bf16.mxu0 %v1602
    %2050 = vmatpush1.bf16.msra.mxu0 %v1601
    %2051 = vmatprep.subr.bf16.mxu0 %v1606
    %2052 = vmatpush1.bf16.msra.mxu0 %v1605
    %2053 = vmatprep.subr.bf16.mxu0 %v1610
    %2054 = vmatpush1.bf16.msra.mxu0 %v1609
    %2055 = vmatprep.subr.bf16.mxu0 %v1614
    %2056 = vmatpush1.bf16.msra.mxu0 %v1613
    %2057 = vmatprep.subr.bf16.mxu0 %v1618
    %2058 = vmatpush1.bf16.msra.mxu0 %v1617
    %2059 = vmatprep.subr.bf16.mxu0 %v1622
    %2060 = vmatpush1.bf16.msra.mxu0 %v1621
    %2061 = vmatprep.subr.bf16.mxu0 %v1626
    %2062 = vmatpush1.bf16.msra.mxu0 %v1625
    %2063 = vmatprep.mubr.bf16.mxu0 %v388
    %2064 = vmatmul.mubr.bf16.gmra.mrb[0].mxu0 %v387
    %v2065 = vpop.f32.mrb[0].mxu0
    %v2066 = vadd.f32 %v2025, %v2065
    %v2067 = vpop.f32.mrb[0].mxu0
    %v2068 = vadd.f32 %v2027, %v2067
    %v2069 = vpop.f32.mrb[0].mxu0
    %v2070 = vpop.f32.mrb[0].mxu0
    %2071 = vdwg.mxu0
    %2072 = vmatprep.subr.bf16.mxu0 %v1630
    %2073 = vmatpush1.bf16.msra.mxu0 %v1629
    %2074 = vmatprep.subr.bf16.mxu0 %v1634
    %2075 = vmatpush1.bf16.msra.mxu0 %v1633
    %2076 = vmatprep.subr.bf16.mxu0 %v1638
    %2077 = vmatpush1.bf16.msra.mxu0 %v1637
    %2078 = vmatprep.subr.bf16.mxu0 %v1642
    %2079 = vmatpush1.bf16.msra.mxu0 %v1641
    %2080 = vmatprep.subr.bf16.mxu0 %v1646
    %2081 = vmatpush1.bf16.msra.mxu0 %v1645
    %2082 = vmatprep.subr.bf16.mxu0 %v1650
    %2083 = vmatpush1.bf16.msra.mxu0 %v1649
    %2084 = vmatprep.subr.bf16.mxu0 %v1654
    %2085 = vmatpush1.bf16.msra.mxu0 %v1653
    %2086 = vmatprep.subr.bf16.mxu0 %v1658
    %2087 = vmatpush1.bf16.msra.mxu0 %v1657
    %2088 = vmatprep.subr.bf16.mxu0 %v1662
    %2089 = vmatpush1.bf16.msra.mxu0 %v1661
    %2090 = vmatprep.subr.bf16.mxu0 %v1666
    %2091 = vmatpush1.bf16.msra.mxu0 %v1665
    %2092 = vmatprep.subr.bf16.mxu0 %v1670
    %2093 = vmatpush1.bf16.msra.mxu0 %v1669
    %2094 = vmatprep.subr.bf16.mxu0 %v1674
    %2095 = vmatpush1.bf16.msra.mxu0 %v1673
    %2096 = vmatprep.subr.bf16.mxu0 %v1678
    %2097 = vmatpush1.bf16.msra.mxu0 %v1677
    %2098 = vmatprep.subr.bf16.mxu0 %v1682
    %2099 = vmatpush1.bf16.msra.mxu0 %v1681
    %2100 = vmatprep.subr.bf16.mxu0 %v1686
    %2101 = vmatpush1.bf16.msra.mxu0 %v1685
    %2102 = vmatprep.subr.bf16.mxu0 %v1690
    %2103 = vmatpush1.bf16.msra.mxu0 %v1689
    %2104 = vmatprep.mubr.bf16.mxu0 %v390
    %2105 = vmatmul.mubr.bf16.gmra.mrb[0].mxu0 %v389
    %v2106 = vpop.f32.mrb[0].mxu0
    %v2107 = vadd.f32 %v2066, %v2106
    %v2108 = vpop.f32.mrb[0].mxu0
    %v2109 = vadd.f32 %v2068, %v2108
    %v2110 = vpop.f32.mrb[0].mxu0
    %v2111 = vpop.f32.mrb[0].mxu0
    %2112 = vdwg.mxu0
    %2113 = vmatprep.subr.bf16.mxu0 %v1440
    %2114 = vmatpush1.bf16.msra.mxu0 %v1439
    %2115 = vmatprep.subr.bf16.mxu0 %v1444
    %2116 = vmatpush1.bf16.msra.mxu0 %v1443
    %2117 = vmatprep.subr.bf16.mxu0 %v1448
    %2118 = vmatpush1.bf16.msra.mxu0 %v1447
    %2119 = vmatprep.subr.bf16.mxu0 %v1452
    %2120 = vmatpush1.bf16.msra.mxu0 %v1451
    %2121 = vmatprep.subr.bf16.mxu0 %v1456
    %2122 = vmatpush1.bf16.msra.mxu0 %v1455
    %2123 = vmatprep.subr.bf16.mxu0 %v1460
    %2124 = vmatpush1.bf16.msra.mxu0 %v1459
    %2125 = vmatprep.subr.bf16.mxu0 %v1464
    %2126 = vmatpush1.bf16.msra.mxu0 %v1463
    %2127 = vmatprep.subr.bf16.mxu0 %v1468
    %2128 = vmatpush1.bf16.msra.mxu0 %v1467
    %2129 = vmatprep.subr.bf16.mxu0 %v1472
    %2130 = vmatpush1.bf16.msra.mxu0 %v1471
    %2131 = vmatprep.subr.bf16.mxu0 %v1476
    %2132 = vmatpush1.bf16.msra.mxu0 %v1475
    %2133 = vmatprep.subr.bf16.mxu0 %v1480
    %2134 = vmatpush1.bf16.msra.mxu0 %v1479
    %2135 = vmatprep.subr.bf16.mxu0 %v1484
    %2136 = vmatpush1.bf16.msra.mxu0 %v1483
    %2137 = vmatprep.subr.bf16.mxu0 %v1488
    %2138 = vmatpush1.bf16.msra.mxu0 %v1487
    %2139 = vmatprep.subr.bf16.mxu0 %v1492
    %2140 = vmatpush1.bf16.msra.mxu0 %v1491
    %2141 = vmatprep.subr.bf16.mxu0 %v1496
    %2142 = vmatpush1.bf16.msra.mxu0 %v1495
    %2143 = vmatprep.subr.bf16.mxu0 %v1500
    %2144 = vmatpush1.bf16.msra.mxu0 %v1499
    %2145 = vmatprep.mubr.bf16.mxu0 %v384
    %2146 = vmatmul.mubr.bf16.gmra.mrb[0].mxu0 %v383
    %v2147 = vpop.f32.mrb[0].mxu0
    %v2148 = vadd.f32 %v660, %v2147
    %v2149 = vpop.f32.mrb[0].mxu0
    %v2150 = vadd.f32 %v664, %v2149
    %v2151 = vpop.f32.mrb[0].mxu0
    %v2152 = vpop.f32.mrb[0].mxu0
    %2153 = vdwg.mxu0
    %2154 = vmatprep.subr.bf16.mxu0 %v1504
    %2155 = vmatpush1.bf16.msra.mxu0 %v1503
    %2156 = vmatprep.subr.bf16.mxu0 %v1508
    %2157 = vmatpush1.bf16.msra.mxu0 %v1507
    %2158 = vmatprep.subr.bf16.mxu0 %v1512
    %2159 = vmatpush1.bf16.msra.mxu0 %v1511
    %2160 = vmatprep.subr.bf16.mxu0 %v1516
    %2161 = vmatpush1.bf16.msra.mxu0 %v1515
    %2162 = vmatprep.subr.bf16.mxu0 %v1520
    %2163 = vmatpush1.bf16.msra.mxu0 %v1519
    %2164 = vmatprep.subr.bf16.mxu0 %v1524
    %2165 = vmatpush1.bf16.msra.mxu0 %v1523
    %2166 = vmatprep.subr.bf16.mxu0 %v1528
    %2167 = vmatpush1.bf16.msra.mxu0 %v1527
    %2168 = vmatprep.subr.bf16.mxu0 %v1532
    %2169 = vmatpush1.bf16.msra.mxu0 %v1531
    %2170 = vmatprep.subr.bf16.mxu0 %v1536
    %2171 = vmatpush1.bf16.msra.mxu0 %v1535
    %2172 = vmatprep.subr.bf16.mxu0 %v1540
    %2173 = vmatpush1.bf16.msra.mxu0 %v1539
    %2174 = vmatprep.subr.bf16.mxu0 %v1544
    %2175 = vmatpush1.bf16.msra.mxu0 %v1543
    %2176 = vmatprep.subr.bf16.mxu0 %v1548
    %2177 = vmatpush1.bf16.msra.mxu0 %v1547
    %2178 = vmatprep.subr.bf16.mxu0 %v1552
    %2179 = vmatpush1.bf16.msra.mxu0 %v1551
    %2180 = vmatprep.subr.bf16.mxu0 %v1556
    %2181 = vmatpush1.bf16.msra.mxu0 %v1555
    %2182 = vmatprep.subr.bf16.mxu0 %v1560
    %2183 = vmatpush1.bf16.msra.mxu0 %v1559
    %2184 = vmatprep.subr.bf16.mxu0 %v1564
    %2185 = vmatpush1.bf16.msra.mxu0 %v1563
    %2186 = vmatprep.mubr.bf16.mxu0 %v386
    %2187 = vmatmul.mubr.bf16.gmra.mrb[0].mxu0 %v385
    %v2188 = vpop.f32.mrb[0].mxu0
    %v2189 = vadd.f32 %v2148, %v2188
    %v2190 = vpop.f32.mrb[0].mxu0
    %v2191 = vadd.f32 %v2150, %v2190
    %v2192 = vpop.f32.mrb[0].mxu0
    %v2193 = vpop.f32.mrb[0].mxu0
    %2194 = vdwg.mxu0
    %2195 = vmatprep.subr.bf16.mxu0 %v1568
    %2196 = vmatpush1.bf16.msra.mxu0 %v1567
    %2197 = vmatprep.subr.bf16.mxu0 %v1572
    %2198 = vmatpush1.bf16.msra.mxu0 %v1571
    %2199 = vmatprep.subr.bf16.mxu0 %v1576
    %2200 = vmatpush1.bf16.msra.mxu0 %v1575
    %2201 = vmatprep.subr.bf16.mxu0 %v1580
    %2202 = vmatpush1.bf16.msra.mxu0 %v1579
    %2203 = vmatprep.subr.bf16.mxu0 %v1584
    %2204 = vmatpush1.bf16.msra.mxu0 %v1583
    %2205 = vmatprep.subr.bf16.mxu0 %v1588
    %2206 = vmatpush1.bf16.msra.mxu0 %v1587
    %2207 = vmatprep.subr.bf16.mxu0 %v1592
    %2208 = vmatpush1.bf16.msra.mxu0 %v1591
    %2209 = vmatprep.subr.bf16.mxu0 %v1596
    %2210 = vmatpush1.bf16.msra.mxu0 %v1595
    %2211 = vmatprep.subr.bf16.mxu0 %v1600
    %2212 = vmatpush1.bf16.msra.mxu0 %v1599
    %2213 = vmatprep.subr.bf16.mxu0 %v1604
    %2214 = vmatpush1.bf16.msra.mxu0 %v1603
    %2215 = vmatprep.subr.bf16.mxu0 %v1608
    %2216 = vmatpush1.bf16.msra.mxu0 %v1607
    %2217 = vmatprep.subr.bf16.mxu0 %v1612
    %2218 = vmatpush1.bf16.msra.mxu0 %v1611
    %2219 = vmatprep.subr.bf16.mxu0 %v1616
    %2220 = vmatpush1.bf16.msra.mxu0 %v1615
    %2221 = vmatprep.subr.bf16.mxu0 %v1620
    %2222 = vmatpush1.bf16.msra.mxu0 %v1619
    %2223 = vmatprep.subr.bf16.mxu0 %v1624
    %2224 = vmatpush1.bf16.msra.mxu0 %v1623
    %2225 = vmatprep.subr.bf16.mxu0 %v1628
    %2226 = vmatpush1.bf16.msra.mxu0 %v1627
    %2227 = vmatprep.mubr.bf16.mxu0 %v388
    %2228 = vmatmul.mubr.bf16.gmra.mrb[0].mxu0 %v387
    %v2229 = vpop.f32.mrb[0].mxu0
    %v2230 = vadd.f32 %v2189, %v2229
    %v2231 = vpop.f32.mrb[0].mxu0
    %v2232 = vadd.f32 %v2191, %v2231
    %v2233 = vpop.f32.mrb[0].mxu0
    %v2234 = vpop.f32.mrb[0].mxu0
    %2235 = vdwg.mxu0
    %2236 = vmatprep.subr.bf16.mxu0 %v1632
    %2237 = vmatpush1.bf16.msra.mxu0 %v1631
    %2238 = vmatprep.subr.bf16.mxu0 %v1636
    %2239 = vmatpush1.bf16.msra.mxu0 %v1635
    %2240 = vmatprep.subr.bf16.mxu0 %v1640
    %2241 = vmatpush1.bf16.msra.mxu0 %v1639
    %2242 = vmatprep.subr.bf16.mxu0 %v1644
    %2243 = vmatpush1.bf16.msra.mxu0 %v1643
    %2244 = vmatprep.subr.bf16.mxu0 %v1648
    %2245 = vmatpush1.bf16.msra.mxu0 %v1647
    %2246 = vmatprep.subr.bf16.mxu0 %v1652
    %2247 = vmatpush1.bf16.msra.mxu0 %v1651
    %2248 = vmatprep.subr.bf16.mxu0 %v1656
    %2249 = vmatpush1.bf16.msra.mxu0 %v1655
    %2250 = vmatprep.subr.bf16.mxu0 %v1660
    %2251 = vmatpush1.bf16.msra.mxu0 %v1659
    %2252 = vmatprep.subr.bf16.mxu0 %v1664
    %2253 = vmatpush1.bf16.msra.mxu0 %v1663
    %2254 = vmatprep.subr.bf16.mxu0 %v1668
    %2255 = vmatpush1.bf16.msra.mxu0 %v1667
    %2256 = vmatprep.subr.bf16.mxu0 %v1672
    %2257 = vmatpush1.bf16.msra.mxu0 %v1671
    %2258 = vmatprep.subr.bf16.mxu0 %v1676
    %2259 = vmatpush1.bf16.msra.mxu0 %v1675
    %2260 = vmatprep.subr.bf16.mxu0 %v1680
    %2261 = vmatpush1.bf16.msra.mxu0 %v1679
    %2262 = vmatprep.subr.bf16.mxu0 %v1684
    %2263 = vmatpush1.bf16.msra.mxu0 %v1683
    %2264 = vmatprep.subr.bf16.mxu0 %v1688
    %2265 = vmatpush1.bf16.msra.mxu0 %v1687
    %2266 = vmatprep.subr.bf16.mxu0 %v1692
    %2267 = vmatpush1.bf16.msra.mxu0 %v1691
    %2268 = vmatprep.mubr.bf16.mxu0 %v390
    %2269 = vmatmul.mubr.bf16.gmra.mrb[0].mxu0 %v389
    %v2270 = vpop.f32.mrb[0].mxu0
    %v2271 = vadd.f32 %v2230, %v2270
    %v2272 = vpop.f32.mrb[0].mxu0
    %v2273 = vadd.f32 %v2232, %v2272
    %v2274 = vpop.f32.mrb[0].mxu0
    %v2275 = vpop.f32.mrb[0].mxu0
    %2276 = vdwg.mxu0
    %v2277 = vmax.f32 %v2107, 0.0
    %v2278 = vmax.f32 %v2109, 0.0
    %v2279 = vmax.f32 %v2271, 0.0
    %v2280 = vmax.f32 %v2273, 0.0
    %v2281 = vld [vmem:[%s5] sm:$0xf]
    %v2283 = vlaneseq
    %v2284 = vshrl.u32 %v2283, 7
    %v2285 = vsub.s32 0, %v2284
    %v2286 = vrot.slane %v2281, %v2285
    %v2287 = vlaneseq
    %v2288 = vshrl.u32 %v2287, 7
    %v2289 = vsub.s32 1, %v2288
    %v2290 = vrot.slane %v2281, %v2289
    %v2291 = vlaneseq
    %v2292 = vshrl.u32 %v2291, 7
    %v2293 = vsub.s32 2, %v2292
    %v2294 = vrot.slane %v2281, %v2293
    %v2295 = vlaneseq
    %v2296 = vshrl.u32 %v2295, 7
    %v2297 = vsub.s32 3, %v2296
    %v2298 = vrot.slane %v2281, %v2297
    %v2303 = vmul.f32 %v2277, %v2286
    %v2304 = vmul.f32 %v2278, %v2290
    %v2305 = vmul.f32 %v2279, %v2294
    %v2306 = vmul.f32 %v2280, %v2298
    %v2307 = vadd.f32 %v2303, %v2304
    %v2308 = vadd.f32 %v2307, %v2305
    %v2309 = vadd.f32 %v2308, %v2306
    %2310 = vadd.xlane.f32.xlu0 %v2309
    %v2311 = vpop.xlane.xlu0 %2310
    %s2312 = sld [smem:[#allocation2]]
    %v2313 = vstv %s2312
    %v2314 = vadd.f32 %v2311, %v2313
    %v2315 = vxor.u32 %v2314, 2147483648
    %v2316 = vmul.f32 %v2315, 1.442695
    %v2317 = vpow.pop %v2316
    %v2318 = vadd.f32 %v2317, 1.0
    %v2319 = vrcp.pop %v2318
    %v2320 = vmul.f32 1.0, %v2319
    %vm2321 = vcmask 7168
    %2322 = vst.msk [vmem:[%s7] sm:$0xff] %vm2321, %v2320
    // Predicated region
    $region42: #{tpu_custom_call.1} parent=1 // pred_check
      _
    $region43: #{tpu_custom_call.1} parent=1 // pred_check_branch
      %2324 = sbr.rel (0) target = $region45
    $region44: #{tpu_custom_call.1} parent=1 // pred_region
      _
    $region45: #{tpu_custom_call.1} parent=1 // pred_fallthru
      _
    // Predicated region
    $region46: #{tpu_custom_call.1} parent=1 // pred_check
      _
    $region47: #{tpu_custom_call.1} parent=1 // pred_check_branch
      %2326 = sbr.rel (0) target = $region49
    $region48: #{tpu_custom_call.1} parent=1 // pred_region
      _
    $region49: #{tpu_custom_call.1} parent=1 // pred_fallthru
      _
    %2327 = vsyncpa [#allocation4], 1
    %2328 = vsyncpa [#allocation6], 1

</llo_original>
